<compile_context>
chip_gen: v6e
topology: v6e:2x2x1
jax: 0.10.0
libtpu: 0.0.40
codegen_flags: <defaults>
</compile_context>

<pallas_src>
import jax
import jax.numpy as jnp
from jax import lax
from jax.experimental import pallas as pl
from jax.experimental.pallas import tpu as pltpu

MIN_R = 0.01
BN_EPS = 1e-5


# --------------------------------------------------------------------------
# Pallas kernel: pointnet MLP stack + weighted max-pool over the nsample axis.
# Per M-tile:
#   (tm, S, C0) --reshape--> (tm*S, C0) --[dot(W) + shift, ReLU] x L-->
#   (tm*S, Cout) --reshape--> (tm, S, Cout) --* per-sample weight--> max over S
# The last layer is channel-padded to a multiple of 128 so stores are
# lane-dense (unmasked vst); the wrapper slices the padding away.
# --------------------------------------------------------------------------
def _make_mlp_pool_kernel(num_layers):
    def kernel(*refs):
        x_ref, wgt_ref = refs[0], refs[1]
        out_ref = refs[-1]
        tm, S, c0 = x_ref.shape
        # One big MXU matmul per layer instead of tm tiny batched matmuls.
        h = x_ref[...].reshape(tm * S, c0)
        for l in range(num_layers):
            w = refs[2 + 2 * l][...]          # (Cin, Cout), BN scale pre-folded
            sh = refs[3 + 2 * l][...]         # (1, Cout)  folded BN shift
            h = jnp.dot(h, w, preferred_element_type=jnp.float32)
            h = jnp.maximum(h + sh, 0.0)      # ReLU
        cout = h.shape[-1]
        hw = h.reshape(tm, S, cout) * wgt_ref[...][:, :, None]
        out_ref[...] = jnp.max(hw, axis=1)    # max-pool over the nsample axis
    return kernel


def _choose_tile(M, desired=256):
    """Large M-tiles amortise per-grid-step overhead (~0.35us); keep >=2 grid
    steps when possible so both TensorCores get work on megacore parts."""
    if M <= 128:
        return M
    if M <= 2 * desired:
        return 128
    return desired


def _pad_last_layer(layers, lane=128):
    """Pad the final layer's output channels to a multiple of 128 so the kernel
    output block is lane-dense (unmasked stores).  Padding columns are zero."""
    w, sh = layers[-1]
    cout = w.shape[1]
    c_pad = ((cout + lane - 1) // lane) * lane
    if c_pad == cout:
        return list(layers), cout
    w = jnp.pad(w, ((0, 0), (0, c_pad - cout)))
    sh = jnp.pad(sh, ((0, 0), (0, c_pad - cout)))
    return list(layers[:-1]) + [(w, sh)], cout


def mlp_pool_pallas(x, weights, layers, tm=256):
    """x: (M, S, C0) f32, weights: (M, S) f32, layers: list of (w, shift).
    Returns (M, C_out) f32 = max_s( weight[m,s] * MLP(x[m,s]) )."""
    M, S, C0 = x.shape
    tm = _choose_tile(M, tm)
    M_pad = ((M + tm - 1) // tm) * tm
    if M_pad != M:
        x = jnp.pad(x, ((0, M_pad - M), (0, 0), (0, 0)))
        weights = jnp.pad(weights, ((0, M_pad - M), (0, 0)))

    layers_p, c_out = _pad_last_layer(layers)
    c_pad = layers_p[-1][0].shape[1]
    kernel = _make_mlp_pool_kernel(len(layers_p))

    in_specs = [
        pl.BlockSpec((tm, S, C0), lambda i: (i, 0, 0)),
        pl.BlockSpec((tm, S), lambda i: (i, 0)),
    ]
    args = [x, weights]
    for (w, sh) in layers_p:
        in_specs.append(pl.BlockSpec(w.shape, lambda i: (0, 0)))
        in_specs.append(pl.BlockSpec(sh.shape, lambda i: (0, 0)))
        args += [w, sh]

    out = pl.pallas_call(
        kernel,
        out_shape=jax.ShapeDtypeStruct((M_pad, c_pad), jnp.float32),
        grid=(M_pad // tm,),
        in_specs=in_specs,
        out_specs=pl.BlockSpec((tm, c_pad), lambda i: (i, 0)),
        compiler_params=pltpu.CompilerParams(
            dimension_semantics=("parallel",),
            vmem_limit_bytes=32 * 1024 * 1024),
    )(*args)
    return out[:M, :c_out]


# --------------------------------------------------------------------------
# Plain-JAX glue: ball query (shared distance matrix + top_k) and grouping.
# --------------------------------------------------------------------------
def pairwise_sq_dists(new_xyz, xyz):
    return jnp.sum((new_xyz[:, None, :] - xyz[None, :, :]) ** 2, axis=-1)


def ball_query_topk(d2, same_batch, radius, nsample):
    """d2/same_batch: (M, N) precomputed.  radius: scalar or (M, 1).
    Returns idx (M, nsample) int32 (first hits in index order) + empty (M,)."""
    M, N = d2.shape
    r2 = jnp.asarray(radius, jnp.float32) ** 2
    mask = (d2 < r2) & same_batch
    key = jnp.where(mask, jnp.arange(N, dtype=jnp.int32)[None, :], N)
    neg_top, _ = lax.top_k(-key, nsample)      # nsample smallest keys, ascending
    idx = -neg_top
    valid = idx < N
    empty = ~valid[:, 0]
    idx = jnp.where(valid, idx, idx[:, :1])    # pad with first found index
    idx = jnp.where(empty[:, None], 0, idx)    # empty balls -> index 0
    return idx.astype(jnp.int32), empty


def group(xyz, features, idx, new_xyz):
    # TODO(synk): the grouped tensor still makes one HBM round-trip before the
    # Pallas kernel; fusing this data-dependent row gather into the kernel
    # would need a manual DMA gather (per-row make_async_copy) and is left out.
    g_xyz = jnp.take(xyz, idx, axis=0) - new_xyz[:, None, :]   # (M, S, 3)
    g_feat = jnp.take(features, idx, axis=0)                   # (M, S, C)
    return jnp.concatenate([g_xyz, g_feat], axis=-1)           # use_xyz=True


# --------------------------------------------------------------------------
# Parameter init (kaiming-normal conv/linear, eval-mode BN folded).
# --------------------------------------------------------------------------
def _kaiming(key, cin, cout):
    return jax.random.normal(key, (cin, cout), jnp.float32) * (2.0 / cin) ** 0.5


def _make_mlp_params(key, spec):
    """1x1 Conv2d(bias=False) + BatchNorm2d(eval) folded into (weight, shift)."""
    layers = []
    for i in range(len(spec) - 1):
        key, sub = jax.random.split(key)
        cin, cout = spec[i], spec[i + 1]
        w = _kaiming(sub, cin, cout)
        scale = 1.0 / (1.0 + BN_EPS) ** 0.5          # gamma/sqrt(var+eps)
        shift = jnp.zeros((1, cout), jnp.float32)    # beta - mean*scale
        layers.append((w * scale, shift))
    return key, layers


def _mlp_of_zeros(layers):
    """Value the MLP produces for an all-zero sample (reference behaviour for
    empty balls: grouped features are zeroed, then the MLP is applied)."""
    h = jnp.zeros((1, layers[0][0].shape[0]), jnp.float32)
    for w, sh in layers:
        h = jnp.maximum(h @ w + sh, 0.0)
    return h[0]


def init_params(key, *, temperatures, div_coefs, radii, nsamples,
                predict_nsamples, mlps, pmlps, pfcs, grid_size, use_xyz=True):
    scales = []
    for i in range(len(radii)):
        mlp_spec = list(mlps[i])
        pmlp_spec = list(pmlps[i])
        if use_xyz:
            mlp_spec[0] += 3
            pmlp_spec[0] += 3
        key, feat_layers = _make_mlp_params(key, mlp_spec)
        key, pred_layers = _make_mlp_params(key, pmlp_spec)
        key, sub = jax.random.split(key)
        fc_in, fc_out = pfcs[i]
        fc_w = _kaiming(sub, fc_in, fc_out)
        fc_b = jnp.zeros((fc_out,), jnp.float32)
        scales.append(dict(radius=float(radii[i]), nsample=int(nsamples[i]),
                           predict_nsample=int(predict_nsamples[i]),
                           temperature=float(temperatures[i]),
                           div_coef=float(div_coefs[i]),
                           feat_mlp=feat_layers, predict_mlp=pred_layers,
                           fc_w=fc_w, fc_b=fc_b))
    return dict(scales=scales, grid_size=grid_size)


# --------------------------------------------------------------------------
# Forward pass (mirrors StackSAModuleMSGDeform.forward).
# --------------------------------------------------------------------------
def stack_sa_msg_deform_forward(params, xyz, xyz_batch_cnt, rois, roi_features,
                                features, temperature_decay=1.0):
    B, num_rois, G3, _ = rois.shape
    new_xyz = rois.reshape(-1, 3)                               # (M, 3)
    M = new_xyz.shape[0]
    N = xyz.shape[0]
    pt_bid = jnp.searchsorted(jnp.cumsum(xyz_batch_cnt),
                              jnp.arange(N, dtype=jnp.int32),
                              side='right').astype(jnp.int32)
    q_bid = jnp.repeat(jnp.arange(B, dtype=jnp.int32), num_rois * G3)

    # Pairwise squared distances + batch mask: computed ONCE, reused by every
    # ball query (fixed & predicted radius, all scales).
    d2 = pairwise_sq_dists(new_xyz, xyz)                        # (M, N)
    same = q_bid[:, None] == pt_bid[None, :]                    # (M, N)

    outs = []
    for p in params['scales']:
        # -- predict branch: fixed radius -> predict MLP -> maxpool -> FC -> radius
        idx, empty = ball_query_topk(d2, same, p['radius'], p['predict_nsample'])
        grouped = group(xyz, features, idx, new_xyz)            # (M, pns, 3+C)
        ones_w = jnp.where(empty[:, None], 0.0,
                           jnp.ones((M, p['predict_nsample']), jnp.float32))
        pooled = mlp_pool_pallas(grouped, ones_w, p['predict_mlp'])   # (M, Cp)
        # empty balls: reference pools MLP(zeros); restore that exact value.
        pooled = jnp.where(empty[:, None],
                           _mlp_of_zeros(p['predict_mlp'])[None, :], pooled)
        Cp = pooled.shape[-1]
        pooled = pooled.reshape(B, num_rois, G3 * Cp)
        fc_in = jnp.concatenate([pooled, roi_features], axis=-1)
        fc_in = fc_in.reshape(B * num_rois, -1)
        # Tiny (R, Din) x (Din, 1) matvec: left to XLA (per perf review).
        resid = fc_in @ p['fc_w'] + p['fc_b']                   # (B*num_rois, 1)
        r = jnp.maximum(resid / p['div_coef'] + p['radius'], MIN_R)
        r = jnp.broadcast_to(r.reshape(B, num_rois, 1, 1),
                             (B, num_rois, G3, 1)).reshape(M, 1)

        # -- deform branch: predicted per-point radius -> feature MLP -> weighted maxpool
        idx2, empty2 = ball_query_topk(d2, same, r, p['nsample'])
        grouped2 = group(xyz, features, idx2, new_xyz)          # (M, ns, 3+C)
        d2_sel = jnp.take_along_axis(d2, idx2, axis=1)          # (M, ns)
        # TODO(synk): exact QueryAndGroupDeform CUDA weight formula unavailable;
        # approximate with softmax(-d^2 / (temperature * temperature_decay)).
        w = jax.nn.softmax(-d2_sel / (p['temperature'] * temperature_decay), axis=-1)
        w = jnp.where(empty2[:, None], 0.0, w)
        feat = mlp_pool_pallas(grouped2, w, p['feat_mlp'])      # (M, Cf)
        outs.append(feat)

    new_features = jnp.concatenate(outs, axis=-1)               # (M, sum Cf)
    return new_xyz, new_features


# --------------------------------------------------------------------------
if __name__ == "__main__":
    key = jax.random.PRNGKey(0)

    # Small, module-consistent shapes (M = B*num_rois*grid_size^3 = 256).
    B, num_rois, grid_size = 2, 16, 2
    G3 = grid_size ** 3
    N_per = 128
    C_feat, C_roi = 4, 8

    radii = [0.4]
    nsamples = [16]
    predict_nsamples = [8]
    temperatures = [1.0]
    div_coefs = [2.0]
    mlps = [[C_feat, 16, 16]]                 # (+3 for use_xyz inside init)
    pmlps = [[C_feat, 8]]
    pfcs = [[G3 * 8 + C_roi, 1]]              # grid^3 * Cp + C_roi -> 1

    k1, k2, k3, k4, kp = jax.random.split(key, 5)
    xyz = jax.random.uniform(k1, (B * N_per, 3), jnp.float32)
    xyz_batch_cnt = jnp.full((B,), N_per, jnp.int32)
    rois = jax.random.uniform(k2, (B, num_rois, G3, 3), jnp.float32)
    roi_features = jax.random.normal(k3, (B, num_rois, C_roi), jnp.float32)
    features = jax.random.normal(k4, (B * N_per, C_feat), jnp.float32)

    params = init_params(kp, temperatures=temperatures, div_coefs=div_coefs,
                         radii=radii, nsamples=nsamples,
                         predict_nsamples=predict_nsamples, mlps=mlps,
                         pmlps=pmlps, pfcs=pfcs, grid_size=grid_size,
                         use_xyz=True)

    new_xyz, new_features = stack_sa_msg_deform_forward(
        params, xyz, xyz_batch_cnt, rois, roi_features, features,
        temperature_decay=1.0)

    jax.block_until_ready((new_xyz, new_features))
    assert new_xyz.shape == (B * num_rois * G3, 3)
    assert new_features.shape == (B * num_rois * G3, sum(m[-1] for m in mlps))
    print("KERNEL_OK")
</pallas_src>

<mosaic_0001>
module attributes {stable_mosaic.version = 11 : i64} {
  func.func @kernel(%arg0: i32, %arg1: memref<128x8x7xf32, #tpu.memory_space<vmem>>, %arg2: memref<128x8xf32, #tpu.memory_space<vmem>>, %arg3: memref<7x128xf32, #tpu.memory_space<vmem>>, %arg4: memref<1x128xf32, #tpu.memory_space<vmem>>, %arg5: memref<128x128xf32, #tpu.memory_space<vmem>>) attributes {dimension_semantics = [#tpu.dimension_semantics<parallel>], iteration_bounds = array<i64: 2>, scalar_prefetch = 0 : i64, scratch_operands = 0 : i64, tpu.core_type = #tpu.core_type<tc>, window_params = [{transform_indices = @transform_0, window_bounds = array<i64: 128, 8, 7>}, {transform_indices = @transform_1, window_bounds = array<i64: 128, 8>}, {pipeline_mode = #tpu.pipeline_mode<synchronous>, transform_indices = @transform_2, window_bounds = array<i64: 7, 128>}, {pipeline_mode = #tpu.pipeline_mode<synchronous>, transform_indices = @transform_3, window_bounds = array<i64: 1, 128>}, {transform_indices = @transform_4, window_bounds = array<i64: 128, 128>}]} {
    %c0 = arith.constant 0 : index
    %c0_0 = arith.constant 0 : index
    %c0_1 = arith.constant 0 : index
    %0 = vector.load %arg1[%c0, %c0_0, %c0_1] : memref<128x8x7xf32, #tpu.memory_space<vmem>>, vector<128x8x7xf32>
    %1 = vector.shape_cast %0 : vector<128x8x7xf32> to vector<1024x7xf32>
    %c0_2 = arith.constant 0 : index
    %c0_3 = arith.constant 0 : index
    %2 = vector.load %arg3[%c0_2, %c0_3] : memref<7x128xf32, #tpu.memory_space<vmem>>, vector<7x128xf32>
    %c0_4 = arith.constant 0 : index
    %c0_5 = arith.constant 0 : index
    %3 = vector.load %arg4[%c0_4, %c0_5] : memref<1x128xf32, #tpu.memory_space<vmem>>, vector<1x128xf32>
    %cst = arith.constant dense<0.000000e+00> : vector<1024x128xf32>
    %4 = tpu.matmul %1, %2, %cst {dimension_numbers = #tpu.dot_dimension_numbers<[1], [0], [0], [1], [0, 0, 1, 1], [], []>} : vector<1024x7xf32>, vector<7x128xf32>, vector<1024x128xf32> -> vector<1024x128xf32>
    %5 = vector.broadcast %3 : vector<1x128xf32> to vector<1024x128xf32>
    %6 = arith.addf %4, %5 : vector<1024x128xf32>
    %cst_6 = arith.constant 0.000000e+00 : f32
    %7 = vector.broadcast %cst_6 : f32 to vector<1024x128xf32>
    %8 = arith.maximumf %6, %7 : vector<1024x128xf32>
    %9 = vector.shape_cast %8 : vector<1024x128xf32> to vector<128x8x128xf32>
    %c0_7 = arith.constant 0 : index
    %c0_8 = arith.constant 0 : index
    %10 = vector.load %arg2[%c0_7, %c0_8] : memref<128x8xf32, #tpu.memory_space<vmem>>, vector<128x8xf32>
    %11 = vector.shape_cast %10 : vector<128x8xf32> to vector<128x8x1xf32>
    %12 = vector.broadcast %11 : vector<128x8x1xf32> to vector<128x8x128xf32>
    %13 = arith.mulf %9, %12 : vector<128x8x128xf32>
    %cst_9 = arith.constant dense<0xFF800000> : vector<128x128xf32>
    %14 = vector.multi_reduction <maximumf>, %13, %cst_9 [1] : vector<128x8x128xf32> to vector<128x128xf32>
    %c0_10 = arith.constant 0 : index
    %c0_11 = arith.constant 0 : index
    %15 = vector.load %arg5[%c0_10, %c0_11] : memref<128x128xf32, #tpu.memory_space<vmem>>, vector<128x128xf32>
    tpu.vector_store %arg5[%c0_10, %c0_11], %14 {strides = array<i32>} : memref<128x128xf32, #tpu.memory_space<vmem>>, vector<128x128xf32>,
    return
  }
  func.func @transform_0(%arg0: i32) -> (i32, i32, i32) {
    %c0_i32 = arith.constant 0 : i32
    %c0_i32_0 = arith.constant 0 : i32
    %c0_i32_1 = arith.constant 0 : i32
    return %arg0, %c0_i32, %c0_i32_0 : i32, i32, i32
  }
  func.func @transform_1(%arg0: i32) -> (i32, i32) {
    %c0_i32 = arith.constant 0 : i32
    %c0_i32_0 = arith.constant 0 : i32
    return %arg0, %c0_i32 : i32, i32
  }
  func.func @transform_2(%arg0: i32) -> (i32, i32) {
    %c0_i32 = arith.constant 0 : i32
    %c0_i32_0 = arith.constant 0 : i32
    %c0_i32_1 = arith.constant 0 : i32
    return %c0_i32, %c0_i32_0 : i32, i32
  }
  func.func @transform_3(%arg0: i32) -> (i32, i32) {
    %c0_i32 = arith.constant 0 : i32
    %c0_i32_0 = arith.constant 0 : i32
    %c0_i32_1 = arith.constant 0 : i32
    return %c0_i32, %c0_i32_0 : i32, i32
  }
  func.func @transform_4(%arg0: i32) -> (i32, i32) {
    %c0_i32 = arith.constant 0 : i32
    %c0_i32_0 = arith.constant 0 : i32
    return %arg0, %c0_i32 : i32, i32
  }
}

</mosaic_0001>

<llo_original>
// kernel: tpu_custom_call.1
$region0: #{tpu_custom_call.1}
  #allocation0 [shape = 'u32[]', space=smem, size = 0x4, offset = 0x4, fixed_abs, tag = 'smem constant byte address 0x4 - core index']
  #allocation1 [shape = 'u32[144,128]{1,0:T(1,128)}', space=vmem, size = 0x12000, scoped, tag = 'internal scratch']
  %s0 = inlined_call_operand.vmem [shape: f32[256,8,7], index: 0, kind: input, shape index: {}]
  %s1 = inlined_call_operand.vmem [shape: f32[256,8], index: 1, kind: input, shape index: {}]
  %s2 = inlined_call_operand.vmem [shape: f32[7,128], index: 2, kind: input, shape index: {}]
  %s3 = inlined_call_operand.vmem [shape: f32[1,128], index: 3, kind: input, shape index: {}]
  %s4 = inlined_call_operand.hbm [shape: f32[256,128], index: 4, kind: output, shape index: {}]
  %s5 = sld [smem:[#allocation0]]
  $region49: #{tpu_custom_call.1} parent=0
    _
  %s7 = ssub.s32 1, %s5
  %s8 = scalar_select 0, %s7, %s5
  $region1: #{tpu_custom_call.1} parent=0
    #allocation2 [shape = 'u8[131072]{0}', space=vmem, size = 0x20000, scoped, tag = 'output window, operand 0']
    #allocation3 [shape = 's32[2]{0}', space=sflag, size = 0x8, scoped, tag = 'scoped memory for tpu_custom_call.1']
    %9 = vsyncpa [#allocation3], 0
    %s10 = scalar_lea.sflag [#allocation3], 1
    %11 = vsyncpa %s10, 0
    loop: start=0, step=1, limit=4
    $region2: #{tpu_custom_call.1} parent=1 // loop_pre_header
      _
    $region3: #{tpu_custom_call.1} parent=1 // loop_header
      %s13 = sphi 0, %s17
      %p14 = scmp.ge.s32.totalorder %s13, 4
      %s23 = sphi 0, %s25
      %s26 = sphi 0, %s23
      %s27 = sphi 0, %s26
      %s43 = sphi 0, %s27
      %s49 = sphi 0, %s51
      %s52 = sphi 0, %s49
      %s53 = sphi 0, %s52
      %s69 = sphi 0, %s53
      %s73 = sphi 0, %s73
      %s75 = sphi 0, %s73
      %s76 = sphi 0, %s75
      %s90 = sphi 0, %s76
      %s94 = sphi 0, %s94
      %s96 = sphi 0, %s94
      %s97 = sphi 0, %s96
      %s111 = sphi 0, %s97
      %s117 = sphi 0, %s119
      %s120 = sphi 0, %s117
      %s121 = sphi 0, %s120
      %s137 = sphi 0, %s121
    $region4: #{tpu_custom_call.1} parent=1 // loop_header_branch
      %16 = sbr.rel (%p14) target = $region8
    $region5: #{tpu_custom_call.1} parent=1 // loop_body
      %s18 = ssub.s32 %s13, 1
      %s19 = ssub.s32 %s13, 2
      %s20 = sadd.s32 %s13, 1
      %s21 = ssub.s32 %s13, %s20
      %p22 = scmp.eq.s32.totalorder %s21, 0
      %s24 = sadd.s32 %s23, 1
      %s25 = scalar_select %p22, %s23, %s24
      %p28 = pneg %p22
      %p29 = scmp.eq.s32.totalorder %s13, 1
      %p30 = por %p28, %p29
      %p31 = scmp.ne.s32.totalorder %s23, %s26
      %p32 = scmp.eq.s32.totalorder %s13, 0
      %p33 = por %p31, %p32
      %p34 = scmp.ne.s32.totalorder %s23, %s26
      %p35 = scmp.eq.s32.totalorder %s18, 1
      %p36 = por %p34, %p35
      %p37 = scmp.ne.s32.totalorder %s26, %s27
      %p38 = scmp.eq.s32.totalorder %s18, 0
      %p39 = por %p37, %p38
      %p40 = scmp.ne.s32.totalorder %s26, %s27
      %p41 = scmp.eq.s32.totalorder %s19, 1
      %p42 = por %p40, %p41
      %p44 = scmp.ne.s32.totalorder %s27, %s43
      %p45 = scmp.eq.s32.totalorder %s19, 0
      %p46 = por %p44, %p45
      %s47 = ssub.s32 %s13, %s20
      %p48 = scmp.eq.s32.totalorder %s47, 0
      %s50 = sadd.s32 %s49, 1
      %s51 = scalar_select %p48, %s49, %s50
      %p54 = pneg %p48
      %p55 = scmp.eq.s32.totalorder %s13, 1
      %p56 = por %p54, %p55
      %p57 = scmp.ne.s32.totalorder %s49, %s52
      %p58 = scmp.eq.s32.totalorder %s13, 0
      %p59 = por %p57, %p58
      %p60 = scmp.ne.s32.totalorder %s49, %s52
      %p61 = scmp.eq.s32.totalorder %s18, 1
      %p62 = por %p60, %p61
      %p63 = scmp.ne.s32.totalorder %s52, %s53
      %p64 = scmp.eq.s32.totalorder %s18, 0
      %p65 = por %p63, %p64
      %p66 = scmp.ne.s32.totalorder %s52, %s53
      %p67 = scmp.eq.s32.totalorder %s19, 1
      %p68 = por %p66, %p67
      %p70 = scmp.ne.s32.totalorder %s53, %s69
      %p71 = scmp.eq.s32.totalorder %s19, 0
      %p72 = por %p70, %p71
      %s74 = sadd.s32 %s73, 1
      %p77 = scmp.eq.s32.totalorder %s13, 1
      %p78 = scmp.ne.s32.totalorder %s73, %s75
      %p79 = scmp.eq.s32.totalorder %s13, 0
      %p80 = por %p78, %p79
      %p81 = scmp.ne.s32.totalorder %s73, %s75
      %p82 = scmp.eq.s32.totalorder %s18, 1
      %p83 = por %p81, %p82
      %p84 = scmp.ne.s32.totalorder %s75, %s76
      %p85 = scmp.eq.s32.totalorder %s18, 0
      %p86 = por %p84, %p85
      %p87 = scmp.ne.s32.totalorder %s75, %s76
      %p88 = scmp.eq.s32.totalorder %s19, 1
      %p89 = por %p87, %p88
      %p91 = scmp.ne.s32.totalorder %s76, %s90
      %p92 = scmp.eq.s32.totalorder %s19, 0
      %p93 = por %p91, %p92
      %s95 = sadd.s32 %s94, 1
      %p98 = scmp.eq.s32.totalorder %s13, 1
      %p99 = scmp.ne.s32.totalorder %s94, %s96
      %p100 = scmp.eq.s32.totalorder %s13, 0
      %p101 = por %p99, %p100
      %p102 = scmp.ne.s32.totalorder %s94, %s96
      %p103 = scmp.eq.s32.totalorder %s18, 1
      %p104 = por %p102, %p103
      %p105 = scmp.ne.s32.totalorder %s96, %s97
      %p106 = scmp.eq.s32.totalorder %s18, 0
      %p107 = por %p105, %p106
      %p108 = scmp.ne.s32.totalorder %s96, %s97
      %p109 = scmp.eq.s32.totalorder %s19, 1
      %p110 = por %p108, %p109
      %p112 = scmp.ne.s32.totalorder %s97, %s111
      %p113 = scmp.eq.s32.totalorder %s19, 0
      %p114 = por %p112, %p113
      %s115 = ssub.s32 %s13, %s20
      %p116 = scmp.eq.s32.totalorder %s115, 0
      %s118 = sadd.s32 %s117, 1
      %s119 = scalar_select %p116, %s117, %s118
      %p122 = pneg %p116
      %p123 = scmp.eq.s32.totalorder %s13, 1
      %p124 = por %p122, %p123
      %p125 = scmp.ne.s32.totalorder %s117, %s120
      %p126 = scmp.eq.s32.totalorder %s13, 0
      %p127 = por %p125, %p126
      %p128 = scmp.ne.s32.totalorder %s117, %s120
      %p129 = scmp.eq.s32.totalorder %s18, 1
      %p130 = por %p128, %p129
      %p131 = scmp.ne.s32.totalorder %s120, %s121
      %p132 = scmp.eq.s32.totalorder %s18, 0
      %p133 = por %p131, %p132
      %p134 = scmp.ne.s32.totalorder %s120, %s121
      %p135 = scmp.eq.s32.totalorder %s19, 1
      %p136 = por %p134, %p135
      %p138 = scmp.ne.s32.totalorder %s121, %s137
      %p139 = scmp.eq.s32.totalorder %s19, 0
      %p140 = por %p138, %p139
      %p141 = scmp.le.s32.totalorder 1, %s13
      %p142 = scmp.lt.s32.totalorder %s13, 3
      %p143 = pnand %p141, %p142
      %p144 = pneg %p143
      // Predicated region
      $region9: #{tpu_custom_call.1} parent=5 // pred_check
        _
      $region10: #{tpu_custom_call.1} parent=5 // pred_check_branch
        %146 = sbr.rel (%p143) target = $region12
      $region11: #{tpu_custom_call.1} parent=5 // pred_region
        %s147 = ssub.s32 %s13, 1
        // Predicated region
        $region13: #{tpu_custom_call.1} parent=11 // pred_check
          %p148 = pneg %p86
        $region14: #{tpu_custom_call.1} parent=11 // pred_check_branch
          %150 = sbr.rel (%p148) target = $region16
        $region15: #{tpu_custom_call.1} parent=11 // pred_region
          _
        $region16: #{tpu_custom_call.1} parent=11 // pred_fallthru
          _
        // Predicated region
        $region17: #{tpu_custom_call.1} parent=11 // pred_check
          %p151 = pneg %p107
        $region18: #{tpu_custom_call.1} parent=11 // pred_check_branch
          %153 = sbr.rel (%p151) target = $region20
        $region19: #{tpu_custom_call.1} parent=11 // pred_region
          _
        $region20: #{tpu_custom_call.1} parent=11 // pred_fallthru
          _
      $region12: #{tpu_custom_call.1} parent=5 // pred_fallthru
        _
      %p154 = scmp.lt.s32.totalorder %s13, 2
      // Predicated region
      $region21: #{tpu_custom_call.1} parent=5 // pred_check
        %p155 = pneg %p154
      $region22: #{tpu_custom_call.1} parent=5 // pred_check_branch
        %157 = sbr.rel (%p155) target = $region24
      $region23: #{tpu_custom_call.1} parent=5 // pred_region
        // Predicated region
        $region25: #{tpu_custom_call.1} parent=23 // pred_check
          %p158 = pneg %p33
        $region26: #{tpu_custom_call.1} parent=23 // pred_check_branch
          %160 = sbr.rel (%p158) target = $region28
        $region27: #{tpu_custom_call.1} parent=23 // pred_region
          %s161 = smul.u32 128, %s13
          %p162 = scmp.lt.s32.totalorder %s161, 255
          %s163 = scalar_select %p162, %s161, 255
          %s164 = smul.addr %s163, 8
          %s165 = scalar_lea.vmem %s0, %s164
          %s166 = smul.u32 128, %s13
        $region28: #{tpu_custom_call.1} parent=23 // pred_fallthru
          _
        // Predicated region
        $region29: #{tpu_custom_call.1} parent=23 // pred_check
          %p167 = pneg %p59
        $region30: #{tpu_custom_call.1} parent=23 // pred_check_branch
          %169 = sbr.rel (%p167) target = $region32
        $region31: #{tpu_custom_call.1} parent=23 // pred_region
          %s170 = smul.u32 16, %s13
          %p171 = scmp.lt.s32.totalorder %s170, 31
          %s172 = scalar_select %p171, %s170, 31
          %s173 = smul.addr %s172, 8
          %s174 = scalar_lea.vmem %s1, %s173
          %s175 = smul.u32 16, %s13
        $region32: #{tpu_custom_call.1} parent=23 // pred_fallthru
          _
      $region24: #{tpu_custom_call.1} parent=5 // pred_fallthru
        _
      %p176 = scmp.le.s32.totalorder 1, %s13
      %p177 = scmp.lt.s32.totalorder %s13, 3
      %p178 = pnand %p176, %p177
      %p179 = pneg %p178
      // Predicated region
      $region33: #{tpu_custom_call.1} parent=5 // pred_check
        _
      $region34: #{tpu_custom_call.1} parent=5 // pred_check_branch
        %181 = sbr.rel (%p178) target = $region36
      $region35: #{tpu_custom_call.1} parent=5 // pred_region
        %s182 = ssub.s32 %s13, 1
        %s183 = smul.u32 128, %s18
        %p184 = scmp.lt.s32.totalorder %s183, 255
        %s185 = scalar_select %p184, %s183, 255
        %s186 = smul.addr %s185, 8
        %s187 = scalar_lea.vmem %s0, %s186
        %p188 = pneg %p39
        %p189 = pneg %p36
        %s190 = smul.u32 16, %s18
        %p191 = scmp.lt.s32.totalorder %s190, 31
        %s192 = scalar_select %p191, %s190, 31
        %s193 = smul.addr %s192, 8
        %s194 = scalar_lea.vmem %s1, %s193
        %p195 = pneg %p65
        %p196 = pneg %p62
        %p197 = pneg %p86
        %p198 = pneg %p83
        %p199 = pneg %p107
        %p200 = pneg %p104
        %p201 = pneg %p133
        %p202 = pneg %p130
        %s203 = sand.u32 %s120, 1
        %s204 = scalar_lea.sflag [#allocation3], %s203
        %s205 = sand.u32 %s120, 1
        %s206 = smul.addr %s205, 128
        %s207 = scalar_lea.vmem [#allocation2], %s206
        %s208 = smul.u32 128, %s18
        %p209 = scmp.lt.s32.totalorder %s208, 255
        %s210 = scalar_select %p209, %s208, 255
        %s211 = smul.addr %s210, 8
        %s212 = scalar_lea.vmem %s0, %s211
        %s213 = smul.u32 128, %s18
        %s214 = smul.u32 16, %s18
        %p215 = scmp.lt.s32.totalorder %s214, 31
        %s216 = scalar_select %p215, %s214, 31
        %s217 = smul.addr %s216, 8
        %s218 = scalar_lea.vmem %s1, %s217
        %s219 = smul.u32 16, %s18
        %s220 = smul.u32 16, %s18
        %v221 = vld [vmem:[%s212] sm:$0xff]
        %v222 = vld [vmem:[%s212 + $0x8] sm:$0xff]
        %v223 = vld [vmem:[%s212 + $0x10] sm:$0xff]
        %v224 = vld [vmem:[%s212 + $0x18] sm:$0xff]
        %v225 = vld [vmem:[%s212 + $0x20] sm:$0xff]
        %v226 = vld [vmem:[%s212 + $0x28] sm:$0xff]
        %v227 = vld [vmem:[%s212 + $0x30] sm:$0xff]
        %v228 = vld [vmem:[%s212 + $0x38] sm:$0xff]
        %v229 = vld [vmem:[%s212 + $0x40] sm:$0xff]
        %v230 = vld [vmem:[%s212 + $0x48] sm:$0xff]
        %v231 = vld [vmem:[%s212 + $0x50] sm:$0xff]
        %v232 = vld [vmem:[%s212 + $0x58] sm:$0xff]
        %v233 = vld [vmem:[%s212 + $0x60] sm:$0xff]
        %v234 = vld [vmem:[%s212 + $0x68] sm:$0xff]
        %v235 = vld [vmem:[%s212 + $0x70] sm:$0xff]
        %v236 = vld [vmem:[%s212 + $0x78] sm:$0xff]
        %v237 = vld [vmem:[%s212 + $0x80] sm:$0xff]
        %v238 = vld [vmem:[%s212 + $0x88] sm:$0xff]
        %v239 = vld [vmem:[%s212 + $0x90] sm:$0xff]
        %v240 = vld [vmem:[%s212 + $0x98] sm:$0xff]
        %v241 = vld [vmem:[%s212 + $0xa0] sm:$0xff]
        %v242 = vld [vmem:[%s212 + $0xa8] sm:$0xff]
        %v243 = vld [vmem:[%s212 + $0xb0] sm:$0xff]
        %v244 = vld [vmem:[%s212 + $0xb8] sm:$0xff]
        %v245 = vld [vmem:[%s212 + $0xc0] sm:$0xff]
        %v246 = vld [vmem:[%s212 + $0xc8] sm:$0xff]
        %v247 = vld [vmem:[%s212 + $0xd0] sm:$0xff]
        %v248 = vld [vmem:[%s212 + $0xd8] sm:$0xff]
        %v249 = vld [vmem:[%s212 + $0xe0] sm:$0xff]
        %v250 = vld [vmem:[%s212 + $0xe8] sm:$0xff]
        %v251 = vld [vmem:[%s212 + $0xf0] sm:$0xff]
        %v252 = vld [vmem:[%s212 + $0xf8] sm:$0xff]
        %v253 = vld [vmem:[%s212 + $0x100] sm:$0xff]
        %v254 = vld [vmem:[%s212 + $0x108] sm:$0xff]
        %v255 = vld [vmem:[%s212 + $0x110] sm:$0xff]
        %v256 = vld [vmem:[%s212 + $0x118] sm:$0xff]
        %v257 = vld [vmem:[%s212 + $0x120] sm:$0xff]
        %v258 = vld [vmem:[%s212 + $0x128] sm:$0xff]
        %v259 = vld [vmem:[%s212 + $0x130] sm:$0xff]
        %v260 = vld [vmem:[%s212 + $0x138] sm:$0xff]
        %v261 = vld [vmem:[%s212 + $0x140] sm:$0xff]
        %v262 = vld [vmem:[%s212 + $0x148] sm:$0xff]
        %v263 = vld [vmem:[%s212 + $0x150] sm:$0xff]
        %v264 = vld [vmem:[%s212 + $0x158] sm:$0xff]
        %v265 = vld [vmem:[%s212 + $0x160] sm:$0xff]
        %v266 = vld [vmem:[%s212 + $0x168] sm:$0xff]
        %v267 = vld [vmem:[%s212 + $0x170] sm:$0xff]
        %v268 = vld [vmem:[%s212 + $0x178] sm:$0xff]
        %v269 = vld [vmem:[%s212 + $0x180] sm:$0xff]
        %v270 = vld [vmem:[%s212 + $0x188] sm:$0xff]
        %v271 = vld [vmem:[%s212 + $0x190] sm:$0xff]
        %v272 = vld [vmem:[%s212 + $0x198] sm:$0xff]
        %v273 = vld [vmem:[%s212 + $0x1a0] sm:$0xff]
        %v274 = vld [vmem:[%s212 + $0x1a8] sm:$0xff]
        %v275 = vld [vmem:[%s212 + $0x1b0] sm:$0xff]
        %v276 = vld [vmem:[%s212 + $0x1b8] sm:$0xff]
        %v277 = vld [vmem:[%s212 + $0x1c0] sm:$0xff]
        %v278 = vld [vmem:[%s212 + $0x1c8] sm:$0xff]
        %v279 = vld [vmem:[%s212 + $0x1d0] sm:$0xff]
        %v280 = vld [vmem:[%s212 + $0x1d8] sm:$0xff]
        %v281 = vld [vmem:[%s212 + $0x1e0] sm:$0xff]
        %v282 = vld [vmem:[%s212 + $0x1e8] sm:$0xff]
        %v283 = vld [vmem:[%s212 + $0x1f0] sm:$0xff]
        %v284 = vld [vmem:[%s212 + $0x1f8] sm:$0xff]
        %v285 = vld [vmem:[%s212 + $0x200] sm:$0xff]
        %v286 = vld [vmem:[%s212 + $0x208] sm:$0xff]
        %v287 = vld [vmem:[%s212 + $0x210] sm:$0xff]
        %v288 = vld [vmem:[%s212 + $0x218] sm:$0xff]
        %v289 = vld [vmem:[%s212 + $0x220] sm:$0xff]
        %v290 = vld [vmem:[%s212 + $0x228] sm:$0xff]
        %v291 = vld [vmem:[%s212 + $0x230] sm:$0xff]
        %v292 = vld [vmem:[%s212 + $0x238] sm:$0xff]
        %v293 = vld [vmem:[%s212 + $0x240] sm:$0xff]
        %v294 = vld [vmem:[%s212 + $0x248] sm:$0xff]
        %v295 = vld [vmem:[%s212 + $0x250] sm:$0xff]
        %v296 = vld [vmem:[%s212 + $0x258] sm:$0xff]
        %v297 = vld [vmem:[%s212 + $0x260] sm:$0xff]
        %v298 = vld [vmem:[%s212 + $0x268] sm:$0xff]
        %v299 = vld [vmem:[%s212 + $0x270] sm:$0xff]
        %v300 = vld [vmem:[%s212 + $0x278] sm:$0xff]
        %v301 = vld [vmem:[%s212 + $0x280] sm:$0xff]
        %v302 = vld [vmem:[%s212 + $0x288] sm:$0xff]
        %v303 = vld [vmem:[%s212 + $0x290] sm:$0xff]
        %v304 = vld [vmem:[%s212 + $0x298] sm:$0xff]
        %v305 = vld [vmem:[%s212 + $0x2a0] sm:$0xff]
        %v306 = vld [vmem:[%s212 + $0x2a8] sm:$0xff]
        %v307 = vld [vmem:[%s212 + $0x2b0] sm:$0xff]
        %v308 = vld [vmem:[%s212 + $0x2b8] sm:$0xff]
        %v309 = vld [vmem:[%s212 + $0x2c0] sm:$0xff]
        %v310 = vld [vmem:[%s212 + $0x2c8] sm:$0xff]
        %v311 = vld [vmem:[%s212 + $0x2d0] sm:$0xff]
        %v312 = vld [vmem:[%s212 + $0x2d8] sm:$0xff]
        %v313 = vld [vmem:[%s212 + $0x2e0] sm:$0xff]
        %v314 = vld [vmem:[%s212 + $0x2e8] sm:$0xff]
        %v315 = vld [vmem:[%s212 + $0x2f0] sm:$0xff]
        %v316 = vld [vmem:[%s212 + $0x2f8] sm:$0xff]
        %v317 = vld [vmem:[%s212 + $0x300] sm:$0xff]
        %v318 = vld [vmem:[%s212 + $0x308] sm:$0xff]
        %v319 = vld [vmem:[%s212 + $0x310] sm:$0xff]
        %v320 = vld [vmem:[%s212 + $0x318] sm:$0xff]
        %v321 = vld [vmem:[%s212 + $0x320] sm:$0xff]
        %v322 = vld [vmem:[%s212 + $0x328] sm:$0xff]
        %v323 = vld [vmem:[%s212 + $0x330] sm:$0xff]
        %v324 = vld [vmem:[%s212 + $0x338] sm:$0xff]
        %v325 = vld [vmem:[%s212 + $0x340] sm:$0xff]
        %v326 = vld [vmem:[%s212 + $0x348] sm:$0xff]
        %v327 = vld [vmem:[%s212 + $0x350] sm:$0xff]
        %v328 = vld [vmem:[%s212 + $0x358] sm:$0xff]
        %v329 = vld [vmem:[%s212 + $0x360] sm:$0xff]
        %v330 = vld [vmem:[%s212 + $0x368] sm:$0xff]
        %v331 = vld [vmem:[%s212 + $0x370] sm:$0xff]
        %v332 = vld [vmem:[%s212 + $0x378] sm:$0xff]
        %v333 = vld [vmem:[%s212 + $0x380] sm:$0xff]
        %v334 = vld [vmem:[%s212 + $0x388] sm:$0xff]
        %v335 = vld [vmem:[%s212 + $0x390] sm:$0xff]
        %v336 = vld [vmem:[%s212 + $0x398] sm:$0xff]
        %v337 = vld [vmem:[%s212 + $0x3a0] sm:$0xff]
        %v338 = vld [vmem:[%s212 + $0x3a8] sm:$0xff]
        %v339 = vld [vmem:[%s212 + $0x3b0] sm:$0xff]
        %v340 = vld [vmem:[%s212 + $0x3b8] sm:$0xff]
        %v341 = vld [vmem:[%s212 + $0x3c0] sm:$0xff]
        %v342 = vld [vmem:[%s212 + $0x3c8] sm:$0xff]
        %v343 = vld [vmem:[%s212 + $0x3d0] sm:$0xff]
        %v344 = vld [vmem:[%s212 + $0x3d8] sm:$0xff]
        %v345 = vld [vmem:[%s212 + $0x3e0] sm:$0xff]
        %v346 = vld [vmem:[%s212 + $0x3e8] sm:$0xff]
        %v347 = vld [vmem:[%s212 + $0x3f0] sm:$0xff]
        %v348 = vld [vmem:[%s212 + $0x3f8] sm:$0xff]
        %v349 = vld [vmem:[%s2] sm:$0x7f]
        %v350 = vld [vmem:[%s3] sm:$0x1]
        %v352 = vlaneseq
        %v353 = vshrl.u32 %v352, 7
        %v354 = vsub.s32 0, %v353
        %v355 = vrot.slane %v350, %v354
        %vm357 = vcmask 56320
        %v359 = vsel %vm357, %v221, 0
        %v362 = vsel %vm357, %v222, 0
        %v365 = vsel %vm357, %v223, 0
        %v368 = vsel %vm357, %v224, 0
        %v371 = vsel %vm357, %v225, 0
        %v374 = vsel %vm357, %v226, 0
        %v377 = vsel %vm357, %v227, 0
        %v380 = vsel %vm357, %v228, 0
        %v383 = vsel %vm357, %v229, 0
        %v386 = vsel %vm357, %v230, 0
        %v389 = vsel %vm357, %v231, 0
        %v392 = vsel %vm357, %v232, 0
        %v395 = vsel %vm357, %v233, 0
        %v398 = vsel %vm357, %v234, 0
        %v401 = vsel %vm357, %v235, 0
        %v404 = vsel %vm357, %v236, 0
        %v407 = vsel %vm357, %v237, 0
        %v410 = vsel %vm357, %v238, 0
        %v413 = vsel %vm357, %v239, 0
        %v416 = vsel %vm357, %v240, 0
        %v419 = vsel %vm357, %v241, 0
        %v422 = vsel %vm357, %v242, 0
        %v425 = vsel %vm357, %v243, 0
        %v428 = vsel %vm357, %v244, 0
        %v431 = vsel %vm357, %v245, 0
        %v434 = vsel %vm357, %v246, 0
        %v437 = vsel %vm357, %v247, 0
        %v440 = vsel %vm357, %v248, 0
        %v443 = vsel %vm357, %v249, 0
        %v446 = vsel %vm357, %v250, 0
        %v449 = vsel %vm357, %v251, 0
        %v452 = vsel %vm357, %v252, 0
        %v455 = vsel %vm357, %v253, 0
        %v458 = vsel %vm357, %v254, 0
        %v461 = vsel %vm357, %v255, 0
        %v464 = vsel %vm357, %v256, 0
        %v467 = vsel %vm357, %v257, 0
        %v470 = vsel %vm357, %v258, 0
        %v473 = vsel %vm357, %v259, 0
        %v476 = vsel %vm357, %v260, 0
        %v479 = vsel %vm357, %v261, 0
        %v482 = vsel %vm357, %v262, 0
        %v485 = vsel %vm357, %v263, 0
        %v488 = vsel %vm357, %v264, 0
        %v491 = vsel %vm357, %v265, 0
        %v494 = vsel %vm357, %v266, 0
        %v497 = vsel %vm357, %v267, 0
        %v500 = vsel %vm357, %v268, 0
        %v503 = vsel %vm357, %v269, 0
        %v506 = vsel %vm357, %v270, 0
        %v509 = vsel %vm357, %v271, 0
        %v512 = vsel %vm357, %v272, 0
        %v515 = vsel %vm357, %v273, 0
        %v518 = vsel %vm357, %v274, 0
        %v521 = vsel %vm357, %v275, 0
        %v524 = vsel %vm357, %v276, 0
        %v527 = vsel %vm357, %v277, 0
        %v530 = vsel %vm357, %v278, 0
        %v533 = vsel %vm357, %v279, 0
        %v536 = vsel %vm357, %v280, 0
        %v539 = vsel %vm357, %v281, 0
        %v542 = vsel %vm357, %v282, 0
        %v545 = vsel %vm357, %v283, 0
        %v548 = vsel %vm357, %v284, 0
        %v551 = vsel %vm357, %v285, 0
        %v554 = vsel %vm357, %v286, 0
        %v557 = vsel %vm357, %v287, 0
        %v560 = vsel %vm357, %v288, 0
        %v563 = vsel %vm357, %v289, 0
        %v566 = vsel %vm357, %v290, 0
        %v569 = vsel %vm357, %v291, 0
        %v572 = vsel %vm357, %v292, 0
        %v575 = vsel %vm357, %v293, 0
        %v578 = vsel %vm357, %v294, 0
        %v581 = vsel %vm357, %v295, 0
        %v584 = vsel %vm357, %v296, 0
        %v587 = vsel %vm357, %v297, 0
        %v590 = vsel %vm357, %v298, 0
        %v593 = vsel %vm357, %v299, 0
        %v596 = vsel %vm357, %v300, 0
        %v599 = vsel %vm357, %v301, 0
        %v602 = vsel %vm357, %v302, 0
        %v605 = vsel %vm357, %v303, 0
        %v608 = vsel %vm357, %v304, 0
        %v611 = vsel %vm357, %v305, 0
        %v614 = vsel %vm357, %v306, 0
        %v617 = vsel %vm357, %v307, 0
        %v620 = vsel %vm357, %v308, 0
        %v623 = vsel %vm357, %v309, 0
        %v626 = vsel %vm357, %v310, 0
        %v629 = vsel %vm357, %v311, 0
        %v632 = vsel %vm357, %v312, 0
        %v635 = vsel %vm357, %v313, 0
        %v638 = vsel %vm357, %v314, 0
        %v641 = vsel %vm357, %v315, 0
        %v644 = vsel %vm357, %v316, 0
        %v647 = vsel %vm357, %v317, 0
        %v650 = vsel %vm357, %v318, 0
        %v653 = vsel %vm357, %v319, 0
        %v656 = vsel %vm357, %v320, 0
        %v659 = vsel %vm357, %v321, 0
        %v662 = vsel %vm357, %v322, 0
        %v665 = vsel %vm357, %v323, 0
        %v668 = vsel %vm357, %v324, 0
        %v671 = vsel %vm357, %v325, 0
        %v674 = vsel %vm357, %v326, 0
        %v677 = vsel %vm357, %v327, 0
        %v680 = vsel %vm357, %v328, 0
        %v683 = vsel %vm357, %v329, 0
        %v686 = vsel %vm357, %v330, 0
        %v689 = vsel %vm357, %v331, 0
        %v692 = vsel %vm357, %v332, 0
        %v695 = vsel %vm357, %v333, 0
        %v698 = vsel %vm357, %v334, 0
        %v701 = vsel %vm357, %v335, 0
        %v704 = vsel %vm357, %v336, 0
        %v707 = vsel %vm357, %v337, 0
        %v710 = vsel %vm357, %v338, 0
        %v713 = vsel %vm357, %v339, 0
        %v716 = vsel %vm357, %v340, 0
        %v719 = vsel %vm357, %v341, 0
        %v722 = vsel %vm357, %v342, 0
        %v725 = vsel %vm357, %v343, 0
        %v728 = vsel %vm357, %v344, 0
        %v731 = vsel %vm357, %v345, 0
        %v734 = vsel %vm357, %v346, 0
        %v737 = vsel %vm357, %v347, 0
        %v740 = vsel %vm357, %v348, 0
        %vm742 = vcmask 1046528
        %v744 = vsel %vm742, %v349, 0
        %746 = vmatprep.subr.mxu0 0.0
        %747 = vmatpush1.msra.mxu0 0.0
        %748 = vmatprep.subr.mxu0 0.0
        %749 = vmatpush1.msra.mxu0 0.0
        %750 = vmatprep.subr.mxu0 0.0
        %751 = vmatpush1.msra.mxu0 0.0
        %752 = vmatprep.subr.mxu0 0.0
        %753 = vmatpush1.msra.mxu0 0.0
        %754 = vmatprep.subr.mxu0 0.0
        %755 = vmatpush1.msra.mxu0 0.0
        %756 = vmatprep.subr.mxu0 0.0
        %757 = vmatpush1.msra.mxu0 0.0
        %758 = vmatprep.subr.mxu0 0.0
        %759 = vmatpush1.msra.mxu0 0.0
        %760 = vmatprep.subr.mxu0 0.0
        %761 = vmatpush1.msra.mxu0 0.0
        %762 = vmatprep.subr.mxu0 0.0
        %763 = vmatpush1.msra.mxu0 0.0
        %764 = vmatprep.subr.mxu0 0.0
        %765 = vmatpush1.msra.mxu0 0.0
        %766 = vmatprep.subr.mxu0 0.0
        %767 = vmatpush1.msra.mxu0 0.0
        %768 = vmatprep.subr.mxu0 0.0
        %769 = vmatpush1.msra.mxu0 0.0
        %770 = vmatprep.subr.mxu0 0.0
        %771 = vmatpush1.msra.mxu0 0.0
        %772 = vmatprep.subr.mxu0 0.0
        %773 = vmatpush1.msra.mxu0 0.0
        %774 = vmatprep.subr.mxu0 0.0
        %775 = vmatpush1.msra.mxu0 0.0
        %776 = vmatprep.subr.mxu0 0.0
        %777 = vmatpush1.msra.mxu0 %v744
        %778 = vmatprep.subr.mxu0 0.0
        %779 = vmatpush2.msra.mxu0 0.0
        %780 = vmatprep.subr.mxu0 0.0
        %781 = vmatpush2.msra.mxu0 0.0
        %782 = vmatprep.subr.mxu0 0.0
        %783 = vmatpush2.msra.mxu0 0.0
        %784 = vmatprep.subr.mxu0 0.0
        %785 = vmatpush2.msra.mxu0 0.0
        %786 = vmatprep.subr.mxu0 0.0
        %787 = vmatpush2.msra.mxu0 0.0
        %788 = vmatprep.subr.mxu0 0.0
        %789 = vmatpush2.msra.mxu0 0.0
        %790 = vmatprep.subr.mxu0 0.0
        %791 = vmatpush2.msra.mxu0 0.0
        %792 = vmatprep.subr.mxu0 0.0
        %793 = vmatpush2.msra.mxu0 0.0
        %794 = vmatprep.subr.mxu0 0.0
        %795 = vmatpush2.msra.mxu0 0.0
        %796 = vmatprep.subr.mxu0 0.0
        %797 = vmatpush2.msra.mxu0 0.0
        %798 = vmatprep.subr.mxu0 0.0
        %799 = vmatpush2.msra.mxu0 0.0
        %800 = vmatprep.subr.mxu0 0.0
        %801 = vmatpush2.msra.mxu0 0.0
        %802 = vmatprep.subr.mxu0 0.0
        %803 = vmatpush2.msra.mxu0 0.0
        %804 = vmatprep.subr.mxu0 0.0
        %805 = vmatpush2.msra.mxu0 0.0
        %806 = vmatprep.subr.mxu0 0.0
        %807 = vmatpush2.msra.mxu0 0.0
        %808 = vmatprep.subr.mxu0 0.0
        %809 = vmatpush2.msra.mxu0 0.0
        %810 = vmatprep.mubr.f32.mxu0 0.0
        %811 = vmatmul.mubr.f32.gmra.mxu0 %v359
        %v812 = vpop.f32.mrf.mxu0
        %v813 = vadd.f32 %v355, %v812
        %v814 = vpop.f32.mrf.mxu0
        %815 = vmatprep.mubr.f32.mxu0 0.0
        %816 = vmatmul.mubr.f32.gmra.mxu0 %v362
        %v817 = vpop.f32.mrf.mxu0
        %v818 = vadd.f32 %v355, %v817
        %v819 = vpop.f32.mrf.mxu0
        %820 = vmatprep.mubr.f32.mxu0 0.0
        %821 = vmatmul.mubr.f32.gmra.mxu0 %v365
        %v822 = vpop.f32.mrf.mxu0
        %v823 = vadd.f32 %v355, %v822
        %v824 = vpop.f32.mrf.mxu0
        %825 = vmatprep.mubr.f32.mxu0 0.0
        %826 = vmatmul.mubr.f32.gmra.mxu0 %v368
        %v827 = vpop.f32.mrf.mxu0
        %v828 = vadd.f32 %v355, %v827
        %v829 = vpop.f32.mrf.mxu0
        %830 = vmatprep.mubr.f32.mxu0 0.0
        %831 = vmatmul.mubr.f32.gmra.mxu0 %v371
        %v832 = vpop.f32.mrf.mxu0
        %v833 = vadd.f32 %v355, %v832
        %v834 = vpop.f32.mrf.mxu0
        %835 = vmatprep.mubr.f32.mxu0 0.0
        %836 = vmatmul.mubr.f32.gmra.mxu0 %v374
        %v837 = vpop.f32.mrf.mxu0
        %v838 = vadd.f32 %v355, %v837
        %v839 = vpop.f32.mrf.mxu0
        %840 = vmatprep.mubr.f32.mxu0 0.0
        %841 = vmatmul.mubr.f32.gmra.mxu0 %v377
        %v842 = vpop.f32.mrf.mxu0
        %v843 = vadd.f32 %v355, %v842
        %v844 = vpop.f32.mrf.mxu0
        %845 = vmatprep.mubr.f32.mxu0 0.0
        %846 = vmatmul.mubr.f32.gmra.mxu0 %v380
        %v847 = vpop.f32.mrf.mxu0
        %v848 = vadd.f32 %v355, %v847
        %v849 = vpop.f32.mrf.mxu0
        %850 = vmatprep.mubr.f32.mxu0 0.0
        %851 = vmatmul.mubr.f32.gmra.mxu0 %v383
        %v852 = vpop.f32.mrf.mxu0
        %v853 = vadd.f32 %v355, %v852
        %v854 = vpop.f32.mrf.mxu0
        %855 = vmatprep.mubr.f32.mxu0 0.0
        %856 = vmatmul.mubr.f32.gmra.mxu0 %v386
        %v857 = vpop.f32.mrf.mxu0
        %v858 = vadd.f32 %v355, %v857
        %v859 = vpop.f32.mrf.mxu0
        %860 = vmatprep.mubr.f32.mxu0 0.0
        %861 = vmatmul.mubr.f32.gmra.mxu0 %v389
        %v862 = vpop.f32.mrf.mxu0
        %v863 = vadd.f32 %v355, %v862
        %v864 = vpop.f32.mrf.mxu0
        %865 = vmatprep.mubr.f32.mxu0 0.0
        %866 = vmatmul.mubr.f32.gmra.mxu0 %v392
        %v867 = vpop.f32.mrf.mxu0
        %v868 = vadd.f32 %v355, %v867
        %v869 = vpop.f32.mrf.mxu0
        %870 = vmatprep.mubr.f32.mxu0 0.0
        %871 = vmatmul.mubr.f32.gmra.mxu0 %v395
        %v872 = vpop.f32.mrf.mxu0
        %v873 = vadd.f32 %v355, %v872
        %v874 = vpop.f32.mrf.mxu0
        %875 = vmatprep.mubr.f32.mxu0 0.0
        %876 = vmatmul.mubr.f32.gmra.mxu0 %v398
        %v877 = vpop.f32.mrf.mxu0
        %v878 = vadd.f32 %v355, %v877
        %v879 = vpop.f32.mrf.mxu0
        %880 = vmatprep.mubr.f32.mxu0 0.0
        %881 = vmatmul.mubr.f32.gmra.mxu0 %v401
        %v882 = vpop.f32.mrf.mxu0
        %v883 = vadd.f32 %v355, %v882
        %v884 = vpop.f32.mrf.mxu0
        %885 = vmatprep.mubr.f32.mxu0 0.0
        %886 = vmatmul.mubr.f32.gmra.mxu0 %v404
        %v887 = vpop.f32.mrf.mxu0
        %v888 = vadd.f32 %v355, %v887
        %v889 = vpop.f32.mrf.mxu0
        %890 = vmatprep.mubr.f32.mxu0 0.0
        %891 = vmatmul.mubr.f32.gmra.mxu0 %v407
        %v892 = vpop.f32.mrf.mxu0
        %v893 = vadd.f32 %v355, %v892
        %v894 = vpop.f32.mrf.mxu0
        %895 = vmatprep.mubr.f32.mxu0 0.0
        %896 = vmatmul.mubr.f32.gmra.mxu0 %v410
        %v897 = vpop.f32.mrf.mxu0
        %v898 = vadd.f32 %v355, %v897
        %v899 = vpop.f32.mrf.mxu0
        %900 = vmatprep.mubr.f32.mxu0 0.0
        %901 = vmatmul.mubr.f32.gmra.mxu0 %v413
        %v902 = vpop.f32.mrf.mxu0
        %v903 = vadd.f32 %v355, %v902
        %v904 = vpop.f32.mrf.mxu0
        %905 = vmatprep.mubr.f32.mxu0 0.0
        %906 = vmatmul.mubr.f32.gmra.mxu0 %v416
        %v907 = vpop.f32.mrf.mxu0
        %v908 = vadd.f32 %v355, %v907
        %v909 = vpop.f32.mrf.mxu0
        %910 = vmatprep.mubr.f32.mxu0 0.0
        %911 = vmatmul.mubr.f32.gmra.mxu0 %v419
        %v912 = vpop.f32.mrf.mxu0
        %v913 = vadd.f32 %v355, %v912
        %v914 = vpop.f32.mrf.mxu0
        %915 = vmatprep.mubr.f32.mxu0 0.0
        %916 = vmatmul.mubr.f32.gmra.mxu0 %v422
        %v917 = vpop.f32.mrf.mxu0
        %v918 = vadd.f32 %v355, %v917
        %v919 = vpop.f32.mrf.mxu0
        %920 = vmatprep.mubr.f32.mxu0 0.0
        %921 = vmatmul.mubr.f32.gmra.mxu0 %v425
        %v922 = vpop.f32.mrf.mxu0
        %v923 = vadd.f32 %v355, %v922
        %v924 = vpop.f32.mrf.mxu0
        %925 = vmatprep.mubr.f32.mxu0 0.0
        %926 = vmatmul.mubr.f32.gmra.mxu0 %v428
        %v927 = vpop.f32.mrf.mxu0
        %v928 = vadd.f32 %v355, %v927
        %v929 = vpop.f32.mrf.mxu0
        %930 = vmatprep.mubr.f32.mxu0 0.0
        %931 = vmatmul.mubr.f32.gmra.mxu0 %v431
        %v932 = vpop.f32.mrf.mxu0
        %v933 = vadd.f32 %v355, %v932
        %v934 = vpop.f32.mrf.mxu0
        %935 = vmatprep.mubr.f32.mxu0 0.0
        %936 = vmatmul.mubr.f32.gmra.mxu0 %v434
        %v937 = vpop.f32.mrf.mxu0
        %v938 = vadd.f32 %v355, %v937
        %v939 = vpop.f32.mrf.mxu0
        %940 = vmatprep.mubr.f32.mxu0 0.0
        %941 = vmatmul.mubr.f32.gmra.mxu0 %v437
        %v942 = vpop.f32.mrf.mxu0
        %v943 = vadd.f32 %v355, %v942
        %v944 = vpop.f32.mrf.mxu0
        %945 = vmatprep.mubr.f32.mxu0 0.0
        %946 = vmatmul.mubr.f32.gmra.mxu0 %v440
        %v947 = vpop.f32.mrf.mxu0
        %v948 = vadd.f32 %v355, %v947
        %v949 = vpop.f32.mrf.mxu0
        %950 = vmatprep.mubr.f32.mxu0 0.0
        %951 = vmatmul.mubr.f32.gmra.mxu0 %v443
        %v952 = vpop.f32.mrf.mxu0
        %v953 = vadd.f32 %v355, %v952
        %v954 = vpop.f32.mrf.mxu0
        %955 = vmatprep.mubr.f32.mxu0 0.0
        %956 = vmatmul.mubr.f32.gmra.mxu0 %v446
        %v957 = vpop.f32.mrf.mxu0
        %v958 = vadd.f32 %v355, %v957
        %v959 = vpop.f32.mrf.mxu0
        %960 = vmatprep.mubr.f32.mxu0 0.0
        %961 = vmatmul.mubr.f32.gmra.mxu0 %v449
        %v962 = vpop.f32.mrf.mxu0
        %v963 = vadd.f32 %v355, %v962
        %v964 = vpop.f32.mrf.mxu0
        %965 = vmatprep.mubr.f32.mxu0 0.0
        %966 = vmatmul.mubr.f32.gmra.mxu0 %v452
        %v967 = vpop.f32.mrf.mxu0
        %v968 = vadd.f32 %v355, %v967
        %v969 = vpop.f32.mrf.mxu0
        %970 = vmatprep.mubr.f32.mxu0 0.0
        %971 = vmatmul.mubr.f32.gmra.mxu0 %v455
        %v972 = vpop.f32.mrf.mxu0
        %v973 = vadd.f32 %v355, %v972
        %v974 = vpop.f32.mrf.mxu0
        %975 = vmatprep.mubr.f32.mxu0 0.0
        %976 = vmatmul.mubr.f32.gmra.mxu0 %v458
        %v977 = vpop.f32.mrf.mxu0
        %v978 = vadd.f32 %v355, %v977
        %v979 = vpop.f32.mrf.mxu0
        %980 = vmatprep.mubr.f32.mxu0 0.0
        %981 = vmatmul.mubr.f32.gmra.mxu0 %v461
        %v982 = vpop.f32.mrf.mxu0
        %v983 = vadd.f32 %v355, %v982
        %v984 = vpop.f32.mrf.mxu0
        %985 = vmatprep.mubr.f32.mxu0 0.0
        %986 = vmatmul.mubr.f32.gmra.mxu0 %v464
        %v987 = vpop.f32.mrf.mxu0
        %v988 = vadd.f32 %v355, %v987
        %v989 = vpop.f32.mrf.mxu0
        %990 = vmatprep.mubr.f32.mxu0 0.0
        %991 = vmatmul.mubr.f32.gmra.mxu0 %v467
        %v992 = vpop.f32.mrf.mxu0
        %v993 = vadd.f32 %v355, %v992
        %v994 = vpop.f32.mrf.mxu0
        %995 = vmatprep.mubr.f32.mxu0 0.0
        %996 = vmatmul.mubr.f32.gmra.mxu0 %v470
        %v997 = vpop.f32.mrf.mxu0
        %v998 = vadd.f32 %v355, %v997
        %v999 = vpop.f32.mrf.mxu0
        %1000 = vmatprep.mubr.f32.mxu0 0.0
        %1001 = vmatmul.mubr.f32.gmra.mxu0 %v473
        %v1002 = vpop.f32.mrf.mxu0
        %v1003 = vadd.f32 %v355, %v1002
        %v1004 = vpop.f32.mrf.mxu0
        %1005 = vmatprep.mubr.f32.mxu0 0.0
        %1006 = vmatmul.mubr.f32.gmra.mxu0 %v476
        %v1007 = vpop.f32.mrf.mxu0
        %v1008 = vadd.f32 %v355, %v1007
        %v1009 = vpop.f32.mrf.mxu0
        %1010 = vmatprep.mubr.f32.mxu0 0.0
        %1011 = vmatmul.mubr.f32.gmra.mxu0 %v479
        %v1012 = vpop.f32.mrf.mxu0
        %v1013 = vadd.f32 %v355, %v1012
        %v1014 = vpop.f32.mrf.mxu0
        %1015 = vmatprep.mubr.f32.mxu0 0.0
        %1016 = vmatmul.mubr.f32.gmra.mxu0 %v482
        %v1017 = vpop.f32.mrf.mxu0
        %v1018 = vadd.f32 %v355, %v1017
        %v1019 = vpop.f32.mrf.mxu0
        %1020 = vmatprep.mubr.f32.mxu0 0.0
        %1021 = vmatmul.mubr.f32.gmra.mxu0 %v485
        %v1022 = vpop.f32.mrf.mxu0
        %v1023 = vadd.f32 %v355, %v1022
        %v1024 = vpop.f32.mrf.mxu0
        %1025 = vmatprep.mubr.f32.mxu0 0.0
        %1026 = vmatmul.mubr.f32.gmra.mxu0 %v488
        %v1027 = vpop.f32.mrf.mxu0
        %v1028 = vadd.f32 %v355, %v1027
        %v1029 = vpop.f32.mrf.mxu0
        %1030 = vmatprep.mubr.f32.mxu0 0.0
        %1031 = vmatmul.mubr.f32.gmra.mxu0 %v491
        %v1032 = vpop.f32.mrf.mxu0
        %v1033 = vadd.f32 %v355, %v1032
        %v1034 = vpop.f32.mrf.mxu0
        %1035 = vmatprep.mubr.f32.mxu0 0.0
        %1036 = vmatmul.mubr.f32.gmra.mxu0 %v494
        %v1037 = vpop.f32.mrf.mxu0
        %v1038 = vadd.f32 %v355, %v1037
        %v1039 = vpop.f32.mrf.mxu0
        %1040 = vmatprep.mubr.f32.mxu0 0.0
        %1041 = vmatmul.mubr.f32.gmra.mxu0 %v497
        %v1042 = vpop.f32.mrf.mxu0
        %v1043 = vadd.f32 %v355, %v1042
        %v1044 = vpop.f32.mrf.mxu0
        %1045 = vmatprep.mubr.f32.mxu0 0.0
        %1046 = vmatmul.mubr.f32.gmra.mxu0 %v500
        %v1047 = vpop.f32.mrf.mxu0
        %v1048 = vadd.f32 %v355, %v1047
        %v1049 = vpop.f32.mrf.mxu0
        %1050 = vmatprep.mubr.f32.mxu0 0.0
        %1051 = vmatmul.mubr.f32.gmra.mxu0 %v503
        %v1052 = vpop.f32.mrf.mxu0
        %v1053 = vadd.f32 %v355, %v1052
        %v1054 = vpop.f32.mrf.mxu0
        %1055 = vmatprep.mubr.f32.mxu0 0.0
        %1056 = vmatmul.mubr.f32.gmra.mxu0 %v506
        %v1057 = vpop.f32.mrf.mxu0
        %v1058 = vadd.f32 %v355, %v1057
        %v1059 = vpop.f32.mrf.mxu0
        %1060 = vmatprep.mubr.f32.mxu0 0.0
        %1061 = vmatmul.mubr.f32.gmra.mxu0 %v509
        %v1062 = vpop.f32.mrf.mxu0
        %v1063 = vadd.f32 %v355, %v1062
        %v1064 = vpop.f32.mrf.mxu0
        %1065 = vmatprep.mubr.f32.mxu0 0.0
        %1066 = vmatmul.mubr.f32.gmra.mxu0 %v512
        %v1067 = vpop.f32.mrf.mxu0
        %v1068 = vadd.f32 %v355, %v1067
        %v1069 = vpop.f32.mrf.mxu0
        %1070 = vmatprep.mubr.f32.mxu0 0.0
        %1071 = vmatmul.mubr.f32.gmra.mxu0 %v515
        %v1072 = vpop.f32.mrf.mxu0
        %v1073 = vadd.f32 %v355, %v1072
        %v1074 = vpop.f32.mrf.mxu0
        %1075 = vmatprep.mubr.f32.mxu0 0.0
        %1076 = vmatmul.mubr.f32.gmra.mxu0 %v518
        %v1077 = vpop.f32.mrf.mxu0
        %v1078 = vadd.f32 %v355, %v1077
        %v1079 = vpop.f32.mrf.mxu0
        %1080 = vmatprep.mubr.f32.mxu0 0.0
        %1081 = vmatmul.mubr.f32.gmra.mxu0 %v521
        %v1082 = vpop.f32.mrf.mxu0
        %v1083 = vadd.f32 %v355, %v1082
        %v1084 = vpop.f32.mrf.mxu0
        %1085 = vmatprep.mubr.f32.mxu0 0.0
        %1086 = vmatmul.mubr.f32.gmra.mxu0 %v524
        %v1087 = vpop.f32.mrf.mxu0
        %v1088 = vadd.f32 %v355, %v1087
        %v1089 = vpop.f32.mrf.mxu0
        %1090 = vmatprep.mubr.f32.mxu0 0.0
        %1091 = vmatmul.mubr.f32.gmra.mxu0 %v527
        %v1092 = vpop.f32.mrf.mxu0
        %v1093 = vadd.f32 %v355, %v1092
        %v1094 = vpop.f32.mrf.mxu0
        %1095 = vmatprep.mubr.f32.mxu0 0.0
        %1096 = vmatmul.mubr.f32.gmra.mxu0 %v530
        %v1097 = vpop.f32.mrf.mxu0
        %v1098 = vadd.f32 %v355, %v1097
        %v1099 = vpop.f32.mrf.mxu0
        %1100 = vmatprep.mubr.f32.mxu0 0.0
        %1101 = vmatmul.mubr.f32.gmra.mxu0 %v533
        %v1102 = vpop.f32.mrf.mxu0
        %v1103 = vadd.f32 %v355, %v1102
        %v1104 = vpop.f32.mrf.mxu0
        %1105 = vmatprep.mubr.f32.mxu0 0.0
        %1106 = vmatmul.mubr.f32.gmra.mxu0 %v536
        %v1107 = vpop.f32.mrf.mxu0
        %v1108 = vadd.f32 %v355, %v1107
        %v1109 = vpop.f32.mrf.mxu0
        %1110 = vmatprep.mubr.f32.mxu0 0.0
        %1111 = vmatmul.mubr.f32.gmra.mxu0 %v539
        %v1112 = vpop.f32.mrf.mxu0
        %v1113 = vadd.f32 %v355, %v1112
        %v1114 = vpop.f32.mrf.mxu0
        %1115 = vmatprep.mubr.f32.mxu0 0.0
        %1116 = vmatmul.mubr.f32.gmra.mxu0 %v542
        %v1117 = vpop.f32.mrf.mxu0
        %v1118 = vadd.f32 %v355, %v1117
        %v1119 = vpop.f32.mrf.mxu0
        %1120 = vmatprep.mubr.f32.mxu0 0.0
        %1121 = vmatmul.mubr.f32.gmra.mxu0 %v545
        %v1122 = vpop.f32.mrf.mxu0
        %v1123 = vadd.f32 %v355, %v1122
        %v1124 = vpop.f32.mrf.mxu0
        %1125 = vmatprep.mubr.f32.mxu0 0.0
        %1126 = vmatmul.mubr.f32.gmra.mxu0 %v548
        %v1127 = vpop.f32.mrf.mxu0
        %v1128 = vadd.f32 %v355, %v1127
        %v1129 = vpop.f32.mrf.mxu0
        %1130 = vmatprep.mubr.f32.mxu0 0.0
        %1131 = vmatmul.mubr.f32.gmra.mxu0 %v551
        %v1132 = vpop.f32.mrf.mxu0
        %v1133 = vadd.f32 %v355, %v1132
        %v1134 = vpop.f32.mrf.mxu0
        %1135 = vmatprep.mubr.f32.mxu0 0.0
        %1136 = vmatmul.mubr.f32.gmra.mxu0 %v554
        %v1137 = vpop.f32.mrf.mxu0
        %v1138 = vadd.f32 %v355, %v1137
        %v1139 = vpop.f32.mrf.mxu0
        %1140 = vmatprep.mubr.f32.mxu0 0.0
        %1141 = vmatmul.mubr.f32.gmra.mxu0 %v557
        %v1142 = vpop.f32.mrf.mxu0
        %v1143 = vadd.f32 %v355, %v1142
        %v1144 = vpop.f32.mrf.mxu0
        %1145 = vmatprep.mubr.f32.mxu0 0.0
        %1146 = vmatmul.mubr.f32.gmra.mxu0 %v560
        %v1147 = vpop.f32.mrf.mxu0
        %v1148 = vadd.f32 %v355, %v1147
        %v1149 = vpop.f32.mrf.mxu0
        %1150 = vmatprep.mubr.f32.mxu0 0.0
        %1151 = vmatmul.mubr.f32.gmra.mxu0 %v563
        %v1152 = vpop.f32.mrf.mxu0
        %v1153 = vadd.f32 %v355, %v1152
        %v1154 = vpop.f32.mrf.mxu0
        %1155 = vmatprep.mubr.f32.mxu0 0.0
        %1156 = vmatmul.mubr.f32.gmra.mxu0 %v566
        %v1157 = vpop.f32.mrf.mxu0
        %v1158 = vadd.f32 %v355, %v1157
        %v1159 = vpop.f32.mrf.mxu0
        %1160 = vmatprep.mubr.f32.mxu0 0.0
        %1161 = vmatmul.mubr.f32.gmra.mxu0 %v569
        %v1162 = vpop.f32.mrf.mxu0
        %v1163 = vadd.f32 %v355, %v1162
        %v1164 = vpop.f32.mrf.mxu0
        %1165 = vmatprep.mubr.f32.mxu0 0.0
        %1166 = vmatmul.mubr.f32.gmra.mxu0 %v572
        %v1167 = vpop.f32.mrf.mxu0
        %v1168 = vadd.f32 %v355, %v1167
        %v1169 = vpop.f32.mrf.mxu0
        %1170 = vmatprep.mubr.f32.mxu0 0.0
        %1171 = vmatmul.mubr.f32.gmra.mxu0 %v575
        %v1172 = vpop.f32.mrf.mxu0
        %v1173 = vadd.f32 %v355, %v1172
        %v1174 = vpop.f32.mrf.mxu0
        %1175 = vmatprep.mubr.f32.mxu0 0.0
        %1176 = vmatmul.mubr.f32.gmra.mxu0 %v578
        %v1177 = vpop.f32.mrf.mxu0
        %v1178 = vadd.f32 %v355, %v1177
        %v1179 = vpop.f32.mrf.mxu0
        %1180 = vmatprep.mubr.f32.mxu0 0.0
        %1181 = vmatmul.mubr.f32.gmra.mxu0 %v581
        %v1182 = vpop.f32.mrf.mxu0
        %v1183 = vadd.f32 %v355, %v1182
        %v1184 = vpop.f32.mrf.mxu0
        %1185 = vmatprep.mubr.f32.mxu0 0.0
        %1186 = vmatmul.mubr.f32.gmra.mxu0 %v584
        %v1187 = vpop.f32.mrf.mxu0
        %v1188 = vadd.f32 %v355, %v1187
        %v1189 = vpop.f32.mrf.mxu0
        %1190 = vmatprep.mubr.f32.mxu0 0.0
        %1191 = vmatmul.mubr.f32.gmra.mxu0 %v587
        %v1192 = vpop.f32.mrf.mxu0
        %v1193 = vadd.f32 %v355, %v1192
        %v1194 = vpop.f32.mrf.mxu0
        %1195 = vmatprep.mubr.f32.mxu0 0.0
        %1196 = vmatmul.mubr.f32.gmra.mxu0 %v590
        %v1197 = vpop.f32.mrf.mxu0
        %v1198 = vadd.f32 %v355, %v1197
        %v1199 = vpop.f32.mrf.mxu0
        %1200 = vmatprep.mubr.f32.mxu0 0.0
        %1201 = vmatmul.mubr.f32.gmra.mxu0 %v593
        %v1202 = vpop.f32.mrf.mxu0
        %v1203 = vadd.f32 %v355, %v1202
        %v1204 = vpop.f32.mrf.mxu0
        %1205 = vmatprep.mubr.f32.mxu0 0.0
        %1206 = vmatmul.mubr.f32.gmra.mxu0 %v596
        %v1207 = vpop.f32.mrf.mxu0
        %v1208 = vadd.f32 %v355, %v1207
        %v1209 = vpop.f32.mrf.mxu0
        %1210 = vmatprep.mubr.f32.mxu0 0.0
        %1211 = vmatmul.mubr.f32.gmra.mxu0 %v599
        %v1212 = vpop.f32.mrf.mxu0
        %v1213 = vadd.f32 %v355, %v1212
        %v1214 = vpop.f32.mrf.mxu0
        %1215 = vmatprep.mubr.f32.mxu0 0.0
        %1216 = vmatmul.mubr.f32.gmra.mxu0 %v602
        %v1217 = vpop.f32.mrf.mxu0
        %v1218 = vadd.f32 %v355, %v1217
        %v1219 = vpop.f32.mrf.mxu0
        %1220 = vmatprep.mubr.f32.mxu0 0.0
        %1221 = vmatmul.mubr.f32.gmra.mxu0 %v605
        %v1222 = vpop.f32.mrf.mxu0
        %v1223 = vadd.f32 %v355, %v1222
        %v1224 = vpop.f32.mrf.mxu0
        %1225 = vmatprep.mubr.f32.mxu0 0.0
        %1226 = vmatmul.mubr.f32.gmra.mxu0 %v608
        %v1227 = vpop.f32.mrf.mxu0
        %v1228 = vadd.f32 %v355, %v1227
        %v1229 = vpop.f32.mrf.mxu0
        %1230 = vmatprep.mubr.f32.mxu0 0.0
        %1231 = vmatmul.mubr.f32.gmra.mxu0 %v611
        %v1232 = vpop.f32.mrf.mxu0
        %v1233 = vadd.f32 %v355, %v1232
        %v1234 = vpop.f32.mrf.mxu0
        %1235 = vmatprep.mubr.f32.mxu0 0.0
        %1236 = vmatmul.mubr.f32.gmra.mxu0 %v614
        %v1237 = vpop.f32.mrf.mxu0
        %v1238 = vadd.f32 %v355, %v1237
        %v1239 = vpop.f32.mrf.mxu0
        %1240 = vmatprep.mubr.f32.mxu0 0.0
        %1241 = vmatmul.mubr.f32.gmra.mxu0 %v617
        %v1242 = vpop.f32.mrf.mxu0
        %v1243 = vadd.f32 %v355, %v1242
        %v1244 = vpop.f32.mrf.mxu0
        %1245 = vmatprep.mubr.f32.mxu0 0.0
        %1246 = vmatmul.mubr.f32.gmra.mxu0 %v620
        %v1247 = vpop.f32.mrf.mxu0
        %v1248 = vadd.f32 %v355, %v1247
        %v1249 = vpop.f32.mrf.mxu0
        %1250 = vmatprep.mubr.f32.mxu0 0.0
        %1251 = vmatmul.mubr.f32.gmra.mxu0 %v623
        %v1252 = vpop.f32.mrf.mxu0
        %v1253 = vadd.f32 %v355, %v1252
        %v1254 = vpop.f32.mrf.mxu0
        %1255 = vmatprep.mubr.f32.mxu0 0.0
        %1256 = vmatmul.mubr.f32.gmra.mxu0 %v626
        %v1257 = vpop.f32.mrf.mxu0
        %v1258 = vadd.f32 %v355, %v1257
        %v1259 = vpop.f32.mrf.mxu0
        %1260 = vmatprep.mubr.f32.mxu0 0.0
        %1261 = vmatmul.mubr.f32.gmra.mxu0 %v629
        %v1262 = vpop.f32.mrf.mxu0
        %v1263 = vadd.f32 %v355, %v1262
        %v1264 = vpop.f32.mrf.mxu0
        %1265 = vmatprep.mubr.f32.mxu0 0.0
        %1266 = vmatmul.mubr.f32.gmra.mxu0 %v632
        %v1267 = vpop.f32.mrf.mxu0
        %v1268 = vadd.f32 %v355, %v1267
        %v1269 = vpop.f32.mrf.mxu0
        %1270 = vmatprep.mubr.f32.mxu0 0.0
        %1271 = vmatmul.mubr.f32.gmra.mxu0 %v635
        %v1272 = vpop.f32.mrf.mxu0
        %v1273 = vadd.f32 %v355, %v1272
        %v1274 = vpop.f32.mrf.mxu0
        %1275 = vmatprep.mubr.f32.mxu0 0.0
        %1276 = vmatmul.mubr.f32.gmra.mxu0 %v638
        %v1277 = vpop.f32.mrf.mxu0
        %v1278 = vadd.f32 %v355, %v1277
        %v1279 = vpop.f32.mrf.mxu0
        %1280 = vmatprep.mubr.f32.mxu0 0.0
        %1281 = vmatmul.mubr.f32.gmra.mxu0 %v641
        %v1282 = vpop.f32.mrf.mxu0
        %v1283 = vadd.f32 %v355, %v1282
        %v1284 = vpop.f32.mrf.mxu0
        %1285 = vmatprep.mubr.f32.mxu0 0.0
        %1286 = vmatmul.mubr.f32.gmra.mxu0 %v644
        %v1287 = vpop.f32.mrf.mxu0
        %v1288 = vadd.f32 %v355, %v1287
        %v1289 = vpop.f32.mrf.mxu0
        %1290 = vmatprep.mubr.f32.mxu0 0.0
        %1291 = vmatmul.mubr.f32.gmra.mxu0 %v647
        %v1292 = vpop.f32.mrf.mxu0
        %v1293 = vadd.f32 %v355, %v1292
        %v1294 = vpop.f32.mrf.mxu0
        %1295 = vmatprep.mubr.f32.mxu0 0.0
        %1296 = vmatmul.mubr.f32.gmra.mxu0 %v650
        %v1297 = vpop.f32.mrf.mxu0
        %v1298 = vadd.f32 %v355, %v1297
        %v1299 = vpop.f32.mrf.mxu0
        %1300 = vmatprep.mubr.f32.mxu0 0.0
        %1301 = vmatmul.mubr.f32.gmra.mxu0 %v653
        %v1302 = vpop.f32.mrf.mxu0
        %v1303 = vadd.f32 %v355, %v1302
        %v1304 = vpop.f32.mrf.mxu0
        %1305 = vmatprep.mubr.f32.mxu0 0.0
        %1306 = vmatmul.mubr.f32.gmra.mxu0 %v656
        %v1307 = vpop.f32.mrf.mxu0
        %v1308 = vadd.f32 %v355, %v1307
        %v1309 = vpop.f32.mrf.mxu0
        %1310 = vmatprep.mubr.f32.mxu0 0.0
        %1311 = vmatmul.mubr.f32.gmra.mxu0 %v659
        %v1312 = vpop.f32.mrf.mxu0
        %v1313 = vadd.f32 %v355, %v1312
        %v1314 = vpop.f32.mrf.mxu0
        %1315 = vmatprep.mubr.f32.mxu0 0.0
        %1316 = vmatmul.mubr.f32.gmra.mxu0 %v662
        %v1317 = vpop.f32.mrf.mxu0
        %v1318 = vadd.f32 %v355, %v1317
        %v1319 = vpop.f32.mrf.mxu0
        %1320 = vmatprep.mubr.f32.mxu0 0.0
        %1321 = vmatmul.mubr.f32.gmra.mxu0 %v665
        %v1322 = vpop.f32.mrf.mxu0
        %v1323 = vadd.f32 %v355, %v1322
        %v1324 = vpop.f32.mrf.mxu0
        %1325 = vmatprep.mubr.f32.mxu0 0.0
        %1326 = vmatmul.mubr.f32.gmra.mxu0 %v668
        %v1327 = vpop.f32.mrf.mxu0
        %v1328 = vadd.f32 %v355, %v1327
        %v1329 = vpop.f32.mrf.mxu0
        %1330 = vmatprep.mubr.f32.mxu0 0.0
        %1331 = vmatmul.mubr.f32.gmra.mxu0 %v671
        %v1332 = vpop.f32.mrf.mxu0
        %v1333 = vadd.f32 %v355, %v1332
        %v1334 = vpop.f32.mrf.mxu0
        %1335 = vmatprep.mubr.f32.mxu0 0.0
        %1336 = vmatmul.mubr.f32.gmra.mxu0 %v674
        %v1337 = vpop.f32.mrf.mxu0
        %v1338 = vadd.f32 %v355, %v1337
        %v1339 = vpop.f32.mrf.mxu0
        %1340 = vmatprep.mubr.f32.mxu0 0.0
        %1341 = vmatmul.mubr.f32.gmra.mxu0 %v677
        %v1342 = vpop.f32.mrf.mxu0
        %v1343 = vadd.f32 %v355, %v1342
        %v1344 = vpop.f32.mrf.mxu0
        %1345 = vmatprep.mubr.f32.mxu0 0.0
        %1346 = vmatmul.mubr.f32.gmra.mxu0 %v680
        %v1347 = vpop.f32.mrf.mxu0
        %v1348 = vadd.f32 %v355, %v1347
        %v1349 = vpop.f32.mrf.mxu0
        %1350 = vmatprep.mubr.f32.mxu0 0.0
        %1351 = vmatmul.mubr.f32.gmra.mxu0 %v683
        %v1352 = vpop.f32.mrf.mxu0
        %v1353 = vadd.f32 %v355, %v1352
        %v1354 = vpop.f32.mrf.mxu0
        %1355 = vmatprep.mubr.f32.mxu0 0.0
        %1356 = vmatmul.mubr.f32.gmra.mxu0 %v686
        %v1357 = vpop.f32.mrf.mxu0
        %v1358 = vadd.f32 %v355, %v1357
        %v1359 = vpop.f32.mrf.mxu0
        %1360 = vmatprep.mubr.f32.mxu0 0.0
        %1361 = vmatmul.mubr.f32.gmra.mxu0 %v689
        %v1362 = vpop.f32.mrf.mxu0
        %v1363 = vadd.f32 %v355, %v1362
        %v1364 = vpop.f32.mrf.mxu0
        %1365 = vmatprep.mubr.f32.mxu0 0.0
        %1366 = vmatmul.mubr.f32.gmra.mxu0 %v692
        %v1367 = vpop.f32.mrf.mxu0
        %v1368 = vadd.f32 %v355, %v1367
        %v1369 = vpop.f32.mrf.mxu0
        %1370 = vmatprep.mubr.f32.mxu0 0.0
        %1371 = vmatmul.mubr.f32.gmra.mxu0 %v695
        %v1372 = vpop.f32.mrf.mxu0
        %v1373 = vadd.f32 %v355, %v1372
        %v1374 = vpop.f32.mrf.mxu0
        %1375 = vmatprep.mubr.f32.mxu0 0.0
        %1376 = vmatmul.mubr.f32.gmra.mxu0 %v698
        %v1377 = vpop.f32.mrf.mxu0
        %v1378 = vadd.f32 %v355, %v1377
        %v1379 = vpop.f32.mrf.mxu0
        %1380 = vmatprep.mubr.f32.mxu0 0.0
        %1381 = vmatmul.mubr.f32.gmra.mxu0 %v701
        %v1382 = vpop.f32.mrf.mxu0
        %v1383 = vadd.f32 %v355, %v1382
        %v1384 = vpop.f32.mrf.mxu0
        %1385 = vmatprep.mubr.f32.mxu0 0.0
        %1386 = vmatmul.mubr.f32.gmra.mxu0 %v704
        %v1387 = vpop.f32.mrf.mxu0
        %v1388 = vadd.f32 %v355, %v1387
        %v1389 = vpop.f32.mrf.mxu0
        %1390 = vmatprep.mubr.f32.mxu0 0.0
        %1391 = vmatmul.mubr.f32.gmra.mxu0 %v707
        %v1392 = vpop.f32.mrf.mxu0
        %v1393 = vadd.f32 %v355, %v1392
        %v1394 = vpop.f32.mrf.mxu0
        %1395 = vmatprep.mubr.f32.mxu0 0.0
        %1396 = vmatmul.mubr.f32.gmra.mxu0 %v710
        %v1397 = vpop.f32.mrf.mxu0
        %v1398 = vadd.f32 %v355, %v1397
        %v1399 = vpop.f32.mrf.mxu0
        %1400 = vmatprep.mubr.f32.mxu0 0.0
        %1401 = vmatmul.mubr.f32.gmra.mxu0 %v713
        %v1402 = vpop.f32.mrf.mxu0
        %v1403 = vadd.f32 %v355, %v1402
        %v1404 = vpop.f32.mrf.mxu0
        %1405 = vmatprep.mubr.f32.mxu0 0.0
        %1406 = vmatmul.mubr.f32.gmra.mxu0 %v716
        %v1407 = vpop.f32.mrf.mxu0
        %v1408 = vadd.f32 %v355, %v1407
        %v1409 = vpop.f32.mrf.mxu0
        %1410 = vmatprep.mubr.f32.mxu0 0.0
        %1411 = vmatmul.mubr.f32.gmra.mxu0 %v719
        %v1412 = vpop.f32.mrf.mxu0
        %v1413 = vadd.f32 %v355, %v1412
        %v1414 = vpop.f32.mrf.mxu0
        %1415 = vmatprep.mubr.f32.mxu0 0.0
        %1416 = vmatmul.mubr.f32.gmra.mxu0 %v722
        %v1417 = vpop.f32.mrf.mxu0
        %v1418 = vadd.f32 %v355, %v1417
        %v1419 = vpop.f32.mrf.mxu0
        %1420 = vmatprep.mubr.f32.mxu0 0.0
        %1421 = vmatmul.mubr.f32.gmra.mxu0 %v725
        %v1422 = vpop.f32.mrf.mxu0
        %v1423 = vadd.f32 %v355, %v1422
        %v1424 = vpop.f32.mrf.mxu0
        %1425 = vmatprep.mubr.f32.mxu0 0.0
        %1426 = vmatmul.mubr.f32.gmra.mxu0 %v728
        %v1427 = vpop.f32.mrf.mxu0
        %v1428 = vadd.f32 %v355, %v1427
        %v1429 = vpop.f32.mrf.mxu0
        %1430 = vmatprep.mubr.f32.mxu0 0.0
        %1431 = vmatmul.mubr.f32.gmra.mxu0 %v731
        %v1432 = vpop.f32.mrf.mxu0
        %v1433 = vadd.f32 %v355, %v1432
        %v1434 = vpop.f32.mrf.mxu0
        %1435 = vmatprep.mubr.f32.mxu0 0.0
        %1436 = vmatmul.mubr.f32.gmra.mxu0 %v734
        %v1437 = vpop.f32.mrf.mxu0
        %v1438 = vadd.f32 %v355, %v1437
        %v1439 = vpop.f32.mrf.mxu0
        %1440 = vmatprep.mubr.f32.mxu0 0.0
        %1441 = vmatmul.mubr.f32.gmra.mxu0 %v737
        %v1442 = vpop.f32.mrf.mxu0
        %v1443 = vadd.f32 %v355, %v1442
        %v1444 = vpop.f32.mrf.mxu0
        %1445 = vmatprep.mubr.f32.mxu0 0.0
        %1446 = vmatmul.mubr.f32.gmra.mxu0 %v740
        %v1447 = vpop.f32.mrf.mxu0
        %v1448 = vadd.f32 %v355, %v1447
        %v1449 = vpop.f32.mrf.mxu0
        %1450 = vdwg.mxu0
        %v1451 = vmax.f32 %v813, 0.0
        %v1452 = vmax.f32 %v818, 0.0
        %v1453 = vmax.f32 %v823, 0.0
        %v1454 = vmax.f32 %v828, 0.0
        %v1455 = vmax.f32 %v833, 0.0
        %v1456 = vmax.f32 %v838, 0.0
        %v1457 = vmax.f32 %v843, 0.0
        %v1458 = vmax.f32 %v848, 0.0
        %v1459 = vmax.f32 %v853, 0.0
        %v1460 = vmax.f32 %v858, 0.0
        %v1461 = vmax.f32 %v863, 0.0
        %v1462 = vmax.f32 %v868, 0.0
        %v1463 = vmax.f32 %v873, 0.0
        %v1464 = vmax.f32 %v878, 0.0
        %v1465 = vmax.f32 %v883, 0.0
        %v1466 = vmax.f32 %v888, 0.0
        %v1467 = vmax.f32 %v893, 0.0
        %v1468 = vmax.f32 %v898, 0.0
        %v1469 = vmax.f32 %v903, 0.0
        %v1470 = vmax.f32 %v908, 0.0
        %v1471 = vmax.f32 %v913, 0.0
        %v1472 = vmax.f32 %v918, 0.0
        %v1473 = vmax.f32 %v923, 0.0
        %v1474 = vmax.f32 %v928, 0.0
        %v1475 = vmax.f32 %v933, 0.0
        %v1476 = vmax.f32 %v938, 0.0
        %v1477 = vmax.f32 %v943, 0.0
        %v1478 = vmax.f32 %v948, 0.0
        %v1479 = vmax.f32 %v953, 0.0
        %v1480 = vmax.f32 %v958, 0.0
        %v1481 = vmax.f32 %v963, 0.0
        %v1482 = vmax.f32 %v968, 0.0
        %v1483 = vmax.f32 %v973, 0.0
        %v1484 = vmax.f32 %v978, 0.0
        %v1485 = vmax.f32 %v983, 0.0
        %v1486 = vmax.f32 %v988, 0.0
        %v1487 = vmax.f32 %v993, 0.0
        %v1488 = vmax.f32 %v998, 0.0
        %v1489 = vmax.f32 %v1003, 0.0
        %v1490 = vmax.f32 %v1008, 0.0
        %v1491 = vmax.f32 %v1013, 0.0
        %v1492 = vmax.f32 %v1018, 0.0
        %v1493 = vmax.f32 %v1023, 0.0
        %v1494 = vmax.f32 %v1028, 0.0
        %v1495 = vmax.f32 %v1033, 0.0
        %v1496 = vmax.f32 %v1038, 0.0
        %v1497 = vmax.f32 %v1043, 0.0
        %v1498 = vmax.f32 %v1048, 0.0
        %v1499 = vmax.f32 %v1053, 0.0
        %v1500 = vmax.f32 %v1058, 0.0
        %v1501 = vmax.f32 %v1063, 0.0
        %v1502 = vmax.f32 %v1068, 0.0
        %v1503 = vmax.f32 %v1073, 0.0
        %v1504 = vmax.f32 %v1078, 0.0
        %v1505 = vmax.f32 %v1083, 0.0
        %v1506 = vmax.f32 %v1088, 0.0
        %v1507 = vmax.f32 %v1093, 0.0
        %v1508 = vmax.f32 %v1098, 0.0
        %v1509 = vmax.f32 %v1103, 0.0
        %v1510 = vmax.f32 %v1108, 0.0
        %v1511 = vmax.f32 %v1113, 0.0
        %v1512 = vmax.f32 %v1118, 0.0
        %v1513 = vmax.f32 %v1123, 0.0
        %v1514 = vmax.f32 %v1128, 0.0
        %v1515 = vmax.f32 %v1133, 0.0
        %v1516 = vmax.f32 %v1138, 0.0
        %v1517 = vmax.f32 %v1143, 0.0
        %v1518 = vmax.f32 %v1148, 0.0
        %v1519 = vmax.f32 %v1153, 0.0
        %v1520 = vmax.f32 %v1158, 0.0
        %v1521 = vmax.f32 %v1163, 0.0
        %v1522 = vmax.f32 %v1168, 0.0
        %v1523 = vmax.f32 %v1173, 0.0
        %v1524 = vmax.f32 %v1178, 0.0
        %v1525 = vmax.f32 %v1183, 0.0
        %v1526 = vmax.f32 %v1188, 0.0
        %v1527 = vmax.f32 %v1193, 0.0
        %v1528 = vmax.f32 %v1198, 0.0
        %v1529 = vmax.f32 %v1203, 0.0
        %v1530 = vmax.f32 %v1208, 0.0
        %v1531 = vmax.f32 %v1213, 0.0
        %v1532 = vmax.f32 %v1218, 0.0
        %v1533 = vmax.f32 %v1223, 0.0
        %v1534 = vmax.f32 %v1228, 0.0
        %v1535 = vmax.f32 %v1233, 0.0
        %v1536 = vmax.f32 %v1238, 0.0
        %v1537 = vmax.f32 %v1243, 0.0
        %v1538 = vmax.f32 %v1248, 0.0
        %v1539 = vmax.f32 %v1253, 0.0
        %v1540 = vmax.f32 %v1258, 0.0
        %v1541 = vmax.f32 %v1263, 0.0
        %v1542 = vmax.f32 %v1268, 0.0
        %v1543 = vmax.f32 %v1273, 0.0
        %v1544 = vmax.f32 %v1278, 0.0
        %v1545 = vmax.f32 %v1283, 0.0
        %v1546 = vmax.f32 %v1288, 0.0
        %v1547 = vmax.f32 %v1293, 0.0
        %v1548 = vmax.f32 %v1298, 0.0
        %v1549 = vmax.f32 %v1303, 0.0
        %v1550 = vmax.f32 %v1308, 0.0
        %v1551 = vmax.f32 %v1313, 0.0
        %v1552 = vmax.f32 %v1318, 0.0
        %v1553 = vmax.f32 %v1323, 0.0
        %v1554 = vmax.f32 %v1328, 0.0
        %v1555 = vmax.f32 %v1333, 0.0
        %v1556 = vmax.f32 %v1338, 0.0
        %v1557 = vmax.f32 %v1343, 0.0
        %v1558 = vmax.f32 %v1348, 0.0
        %v1559 = vmax.f32 %v1353, 0.0
        %v1560 = vmax.f32 %v1358, 0.0
        %v1561 = vmax.f32 %v1363, 0.0
        %v1562 = vmax.f32 %v1368, 0.0
        %v1563 = vmax.f32 %v1373, 0.0
        %v1564 = vmax.f32 %v1378, 0.0
        %v1565 = vmax.f32 %v1383, 0.0
        %v1566 = vmax.f32 %v1388, 0.0
        %v1567 = vmax.f32 %v1393, 0.0
        %v1568 = vmax.f32 %v1398, 0.0
        %v1569 = vmax.f32 %v1403, 0.0
        %v1570 = vmax.f32 %v1408, 0.0
        %v1571 = vmax.f32 %v1413, 0.0
        %v1572 = vmax.f32 %v1418, 0.0
        %v1573 = vmax.f32 %v1423, 0.0
        %v1574 = vmax.f32 %v1428, 0.0
        %v1575 = vmax.f32 %v1433, 0.0
        %v1576 = vmax.f32 %v1438, 0.0
        %v1577 = vmax.f32 %v1443, 0.0
        %v1578 = vmax.f32 %v1448, 0.0
        %v1579 = vld [vmem:[%s218] sm:$0xff]
        %v1580 = vld [vmem:[%s218 + $0x8] sm:$0xff]
        %v1581 = vld [vmem:[%s218 + $0x10] sm:$0xff]
        %v1582 = vld [vmem:[%s218 + $0x18] sm:$0xff]
        %v1583 = vld [vmem:[%s218 + $0x20] sm:$0xff]
        %v1584 = vld [vmem:[%s218 + $0x28] sm:$0xff]
        %v1585 = vld [vmem:[%s218 + $0x30] sm:$0xff]
        %v1586 = vld [vmem:[%s218 + $0x38] sm:$0xff]
        %v1587 = vld [vmem:[%s218 + $0x40] sm:$0xff]
        %v1588 = vld [vmem:[%s218 + $0x48] sm:$0xff]
        %v1589 = vld [vmem:[%s218 + $0x50] sm:$0xff]
        %v1590 = vld [vmem:[%s218 + $0x58] sm:$0xff]
        %v1591 = vld [vmem:[%s218 + $0x60] sm:$0xff]
        %v1592 = vld [vmem:[%s218 + $0x68] sm:$0xff]
        %v1593 = vld [vmem:[%s218 + $0x70] sm:$0xff]
        %v1594 = vld [vmem:[%s218 + $0x78] sm:$0xff]
        %v1595 = vlaneseq
        %v1596 = vshrl.u32 %v1595, 7
        %v1597 = vsub.s32 0, %v1596
        %v1598 = vrot.slane %v1579, %v1597
        %1600 = vbcast.lane.b32.xlu0 %v1598, 256
        %v1601 = vpop.permute.xlu0 %1600
        %v1602 = vlaneseq
        %v1603 = vshrl.u32 %v1602, 7
        %v1604 = vsub.s32 1, %v1603
        %v1605 = vrot.slane %v1579, %v1604
        %1607 = vbcast.lane.b32.xlu0 %v1605, 256
        %v1608 = vpop.permute.xlu0 %1607
        %v1609 = vlaneseq
        %v1610 = vshrl.u32 %v1609, 7
        %v1611 = vsub.s32 2, %v1610
        %v1612 = vrot.slane %v1579, %v1611
        %1614 = vbcast.lane.b32.xlu0 %v1612, 256
        %v1615 = vpop.permute.xlu0 %1614
        %v1616 = vlaneseq
        %v1617 = vshrl.u32 %v1616, 7
        %v1618 = vsub.s32 3, %v1617
        %v1619 = vrot.slane %v1579, %v1618
        %1621 = vbcast.lane.b32.xlu0 %v1619, 256
        %v1622 = vpop.permute.xlu0 %1621
        %v1623 = vlaneseq
        %v1624 = vshrl.u32 %v1623, 7
        %v1625 = vsub.s32 4, %v1624
        %v1626 = vrot.slane %v1579, %v1625
        %1628 = vbcast.lane.b32.xlu0 %v1626, 256
        %v1629 = vpop.permute.xlu0 %1628
        %v1630 = vlaneseq
        %v1631 = vshrl.u32 %v1630, 7
        %v1632 = vsub.s32 5, %v1631
        %v1633 = vrot.slane %v1579, %v1632
        %1635 = vbcast.lane.b32.xlu0 %v1633, 256
        %v1636 = vpop.permute.xlu0 %1635
        %v1637 = vlaneseq
        %v1638 = vshrl.u32 %v1637, 7
        %v1639 = vsub.s32 6, %v1638
        %v1640 = vrot.slane %v1579, %v1639
        %1642 = vbcast.lane.b32.xlu0 %v1640, 256
        %v1643 = vpop.permute.xlu0 %1642
        %v1644 = vlaneseq
        %v1645 = vshrl.u32 %v1644, 7
        %v1646 = vsub.s32 7, %v1645
        %v1647 = vrot.slane %v1579, %v1646
        %1649 = vbcast.lane.b32.xlu0 %v1647, 256
        %v1650 = vpop.permute.xlu0 %1649
        %v1651 = vlaneseq
        %v1652 = vshrl.u32 %v1651, 7
        %v1653 = vsub.s32 0, %v1652
        %v1654 = vrot.slane %v1580, %v1653
        %1656 = vbcast.lane.b32.xlu0 %v1654, 256
        %v1657 = vpop.permute.xlu0 %1656
        %v1658 = vlaneseq
        %v1659 = vshrl.u32 %v1658, 7
        %v1660 = vsub.s32 1, %v1659
        %v1661 = vrot.slane %v1580, %v1660
        %1663 = vbcast.lane.b32.xlu0 %v1661, 256
        %v1664 = vpop.permute.xlu0 %1663
        %v1665 = vlaneseq
        %v1666 = vshrl.u32 %v1665, 7
        %v1667 = vsub.s32 2, %v1666
        %v1668 = vrot.slane %v1580, %v1667
        %1670 = vbcast.lane.b32.xlu0 %v1668, 256
        %v1671 = vpop.permute.xlu0 %1670
        %v1672 = vlaneseq
        %v1673 = vshrl.u32 %v1672, 7
        %v1674 = vsub.s32 3, %v1673
        %v1675 = vrot.slane %v1580, %v1674
        %1677 = vbcast.lane.b32.xlu0 %v1675, 256
        %v1678 = vpop.permute.xlu0 %1677
        %v1679 = vlaneseq
        %v1680 = vshrl.u32 %v1679, 7
        %v1681 = vsub.s32 4, %v1680
        %v1682 = vrot.slane %v1580, %v1681
        %1684 = vbcast.lane.b32.xlu0 %v1682, 256
        %v1685 = vpop.permute.xlu0 %1684
        %v1686 = vlaneseq
        %v1687 = vshrl.u32 %v1686, 7
        %v1688 = vsub.s32 5, %v1687
        %v1689 = vrot.slane %v1580, %v1688
        %1691 = vbcast.lane.b32.xlu0 %v1689, 256
        %v1692 = vpop.permute.xlu0 %1691
        %v1693 = vlaneseq
        %v1694 = vshrl.u32 %v1693, 7
        %v1695 = vsub.s32 6, %v1694
        %v1696 = vrot.slane %v1580, %v1695
        %1698 = vbcast.lane.b32.xlu0 %v1696, 256
        %v1699 = vpop.permute.xlu0 %1698
        %v1700 = vlaneseq
        %v1701 = vshrl.u32 %v1700, 7
        %v1702 = vsub.s32 7, %v1701
        %v1703 = vrot.slane %v1580, %v1702
        %1705 = vbcast.lane.b32.xlu0 %v1703, 256
        %v1706 = vpop.permute.xlu0 %1705
        %v1707 = vlaneseq
        %v1708 = vshrl.u32 %v1707, 7
        %v1709 = vsub.s32 0, %v1708
        %v1710 = vrot.slane %v1581, %v1709
        %1712 = vbcast.lane.b32.xlu0 %v1710, 256
        %v1713 = vpop.permute.xlu0 %1712
        %v1714 = vlaneseq
        %v1715 = vshrl.u32 %v1714, 7
        %v1716 = vsub.s32 1, %v1715
        %v1717 = vrot.slane %v1581, %v1716
        %1719 = vbcast.lane.b32.xlu0 %v1717, 256
        %v1720 = vpop.permute.xlu0 %1719
        %v1721 = vlaneseq
        %v1722 = vshrl.u32 %v1721, 7
        %v1723 = vsub.s32 2, %v1722
        %v1724 = vrot.slane %v1581, %v1723
        %1726 = vbcast.lane.b32.xlu0 %v1724, 256
        %v1727 = vpop.permute.xlu0 %1726
        %v1728 = vlaneseq
        %v1729 = vshrl.u32 %v1728, 7
        %v1730 = vsub.s32 3, %v1729
        %v1731 = vrot.slane %v1581, %v1730
        %1733 = vbcast.lane.b32.xlu0 %v1731, 256
        %v1734 = vpop.permute.xlu0 %1733
        %v1735 = vlaneseq
        %v1736 = vshrl.u32 %v1735, 7
        %v1737 = vsub.s32 4, %v1736
        %v1738 = vrot.slane %v1581, %v1737
        %1740 = vbcast.lane.b32.xlu0 %v1738, 256
        %v1741 = vpop.permute.xlu0 %1740
        %v1742 = vlaneseq
        %v1743 = vshrl.u32 %v1742, 7
        %v1744 = vsub.s32 5, %v1743
        %v1745 = vrot.slane %v1581, %v1744
        %1747 = vbcast.lane.b32.xlu0 %v1745, 256
        %v1748 = vpop.permute.xlu0 %1747
        %v1749 = vlaneseq
        %v1750 = vshrl.u32 %v1749, 7
        %v1751 = vsub.s32 6, %v1750
        %v1752 = vrot.slane %v1581, %v1751
        %1754 = vbcast.lane.b32.xlu0 %v1752, 256
        %v1755 = vpop.permute.xlu0 %1754
        %v1756 = vlaneseq
        %v1757 = vshrl.u32 %v1756, 7
        %v1758 = vsub.s32 7, %v1757
        %v1759 = vrot.slane %v1581, %v1758
        %1761 = vbcast.lane.b32.xlu0 %v1759, 256
        %v1762 = vpop.permute.xlu0 %1761
        %v1763 = vlaneseq
        %v1764 = vshrl.u32 %v1763, 7
        %v1765 = vsub.s32 0, %v1764
        %v1766 = vrot.slane %v1582, %v1765
        %1768 = vbcast.lane.b32.xlu0 %v1766, 256
        %v1769 = vpop.permute.xlu0 %1768
        %v1770 = vlaneseq
        %v1771 = vshrl.u32 %v1770, 7
        %v1772 = vsub.s32 1, %v1771
        %v1773 = vrot.slane %v1582, %v1772
        %1775 = vbcast.lane.b32.xlu0 %v1773, 256
        %v1776 = vpop.permute.xlu0 %1775
        %v1777 = vlaneseq
        %v1778 = vshrl.u32 %v1777, 7
        %v1779 = vsub.s32 2, %v1778
        %v1780 = vrot.slane %v1582, %v1779
        %1782 = vbcast.lane.b32.xlu0 %v1780, 256
        %v1783 = vpop.permute.xlu0 %1782
        %v1784 = vlaneseq
        %v1785 = vshrl.u32 %v1784, 7
        %v1786 = vsub.s32 3, %v1785
        %v1787 = vrot.slane %v1582, %v1786
        %1789 = vbcast.lane.b32.xlu0 %v1787, 256
        %v1790 = vpop.permute.xlu0 %1789
        %v1791 = vlaneseq
        %v1792 = vshrl.u32 %v1791, 7
        %v1793 = vsub.s32 4, %v1792
        %v1794 = vrot.slane %v1582, %v1793
        %1796 = vbcast.lane.b32.xlu0 %v1794, 256
        %v1797 = vpop.permute.xlu0 %1796
        %v1798 = vlaneseq
        %v1799 = vshrl.u32 %v1798, 7
        %v1800 = vsub.s32 5, %v1799
        %v1801 = vrot.slane %v1582, %v1800
        %1803 = vbcast.lane.b32.xlu0 %v1801, 256
        %v1804 = vpop.permute.xlu0 %1803
        %v1805 = vlaneseq
        %v1806 = vshrl.u32 %v1805, 7
        %v1807 = vsub.s32 6, %v1806
        %v1808 = vrot.slane %v1582, %v1807
        %1810 = vbcast.lane.b32.xlu0 %v1808, 256
        %v1811 = vpop.permute.xlu0 %1810
        %v1812 = vlaneseq
        %v1813 = vshrl.u32 %v1812, 7
        %v1814 = vsub.s32 7, %v1813
        %v1815 = vrot.slane %v1582, %v1814
        %1817 = vbcast.lane.b32.xlu0 %v1815, 256
        %v1818 = vpop.permute.xlu0 %1817
        %v1819 = vlaneseq
        %v1820 = vshrl.u32 %v1819, 7
        %v1821 = vsub.s32 0, %v1820
        %v1822 = vrot.slane %v1583, %v1821
        %1824 = vbcast.lane.b32.xlu0 %v1822, 256
        %v1825 = vpop.permute.xlu0 %1824
        %v1826 = vlaneseq
        %v1827 = vshrl.u32 %v1826, 7
        %v1828 = vsub.s32 1, %v1827
        %v1829 = vrot.slane %v1583, %v1828
        %1831 = vbcast.lane.b32.xlu0 %v1829, 256
        %v1832 = vpop.permute.xlu0 %1831
        %v1833 = vlaneseq
        %v1834 = vshrl.u32 %v1833, 7
        %v1835 = vsub.s32 2, %v1834
        %v1836 = vrot.slane %v1583, %v1835
        %1838 = vbcast.lane.b32.xlu0 %v1836, 256
        %v1839 = vpop.permute.xlu0 %1838
        %v1840 = vlaneseq
        %v1841 = vshrl.u32 %v1840, 7
        %v1842 = vsub.s32 3, %v1841
        %v1843 = vrot.slane %v1583, %v1842
        %1845 = vbcast.lane.b32.xlu0 %v1843, 256
        %v1846 = vpop.permute.xlu0 %1845
        %v1847 = vlaneseq
        %v1848 = vshrl.u32 %v1847, 7
        %v1849 = vsub.s32 4, %v1848
        %v1850 = vrot.slane %v1583, %v1849
        %1852 = vbcast.lane.b32.xlu0 %v1850, 256
        %v1853 = vpop.permute.xlu0 %1852
        %v1854 = vlaneseq
        %v1855 = vshrl.u32 %v1854, 7
        %v1856 = vsub.s32 5, %v1855
        %v1857 = vrot.slane %v1583, %v1856
        %1859 = vbcast.lane.b32.xlu0 %v1857, 256
        %v1860 = vpop.permute.xlu0 %1859
        %v1861 = vlaneseq
        %v1862 = vshrl.u32 %v1861, 7
        %v1863 = vsub.s32 6, %v1862
        %v1864 = vrot.slane %v1583, %v1863
        %1866 = vbcast.lane.b32.xlu0 %v1864, 256
        %v1867 = vpop.permute.xlu0 %1866
        %v1868 = vlaneseq
        %v1869 = vshrl.u32 %v1868, 7
        %v1870 = vsub.s32 7, %v1869
        %v1871 = vrot.slane %v1583, %v1870
        %1873 = vbcast.lane.b32.xlu0 %v1871, 256
        %v1874 = vpop.permute.xlu0 %1873
        %v1875 = vlaneseq
        %v1876 = vshrl.u32 %v1875, 7
        %v1877 = vsub.s32 0, %v1876
        %v1878 = vrot.slane %v1584, %v1877
        %1880 = vbcast.lane.b32.xlu0 %v1878, 256
        %v1881 = vpop.permute.xlu0 %1880
        %v1882 = vlaneseq
        %v1883 = vshrl.u32 %v1882, 7
        %v1884 = vsub.s32 1, %v1883
        %v1885 = vrot.slane %v1584, %v1884
        %1887 = vbcast.lane.b32.xlu0 %v1885, 256
        %v1888 = vpop.permute.xlu0 %1887
        %v1889 = vlaneseq
        %v1890 = vshrl.u32 %v1889, 7
        %v1891 = vsub.s32 2, %v1890
        %v1892 = vrot.slane %v1584, %v1891
        %1894 = vbcast.lane.b32.xlu0 %v1892, 256
        %v1895 = vpop.permute.xlu0 %1894
        %v1896 = vlaneseq
        %v1897 = vshrl.u32 %v1896, 7
        %v1898 = vsub.s32 3, %v1897
        %v1899 = vrot.slane %v1584, %v1898
        %1901 = vbcast.lane.b32.xlu0 %v1899, 256
        %v1902 = vpop.permute.xlu0 %1901
        %v1903 = vlaneseq
        %v1904 = vshrl.u32 %v1903, 7
        %v1905 = vsub.s32 4, %v1904
        %v1906 = vrot.slane %v1584, %v1905
        %1908 = vbcast.lane.b32.xlu0 %v1906, 256
        %v1909 = vpop.permute.xlu0 %1908
        %v1910 = vlaneseq
        %v1911 = vshrl.u32 %v1910, 7
        %v1912 = vsub.s32 5, %v1911
        %v1913 = vrot.slane %v1584, %v1912
        %1915 = vbcast.lane.b32.xlu0 %v1913, 256
        %v1916 = vpop.permute.xlu0 %1915
        %v1917 = vlaneseq
        %v1918 = vshrl.u32 %v1917, 7
        %v1919 = vsub.s32 6, %v1918
        %v1920 = vrot.slane %v1584, %v1919
        %1922 = vbcast.lane.b32.xlu0 %v1920, 256
        %v1923 = vpop.permute.xlu0 %1922
        %v1924 = vlaneseq
        %v1925 = vshrl.u32 %v1924, 7
        %v1926 = vsub.s32 7, %v1925
        %v1927 = vrot.slane %v1584, %v1926
        %1929 = vbcast.lane.b32.xlu0 %v1927, 256
        %v1930 = vpop.permute.xlu0 %1929
        %v1931 = vlaneseq
        %v1932 = vshrl.u32 %v1931, 7
        %v1933 = vsub.s32 0, %v1932
        %v1934 = vrot.slane %v1585, %v1933
        %1936 = vbcast.lane.b32.xlu0 %v1934, 256
        %v1937 = vpop.permute.xlu0 %1936
        %v1938 = vlaneseq
        %v1939 = vshrl.u32 %v1938, 7
        %v1940 = vsub.s32 1, %v1939
        %v1941 = vrot.slane %v1585, %v1940
        %1943 = vbcast.lane.b32.xlu0 %v1941, 256
        %v1944 = vpop.permute.xlu0 %1943
        %v1945 = vlaneseq
        %v1946 = vshrl.u32 %v1945, 7
        %v1947 = vsub.s32 2, %v1946
        %v1948 = vrot.slane %v1585, %v1947
        %1950 = vbcast.lane.b32.xlu0 %v1948, 256
        %v1951 = vpop.permute.xlu0 %1950
        %v1952 = vlaneseq
        %v1953 = vshrl.u32 %v1952, 7
        %v1954 = vsub.s32 3, %v1953
        %v1955 = vrot.slane %v1585, %v1954
        %1957 = vbcast.lane.b32.xlu0 %v1955, 256
        %v1958 = vpop.permute.xlu0 %1957
        %v1959 = vlaneseq
        %v1960 = vshrl.u32 %v1959, 7
        %v1961 = vsub.s32 4, %v1960
        %v1962 = vrot.slane %v1585, %v1961
        %1964 = vbcast.lane.b32.xlu0 %v1962, 256
        %v1965 = vpop.permute.xlu0 %1964
        %v1966 = vlaneseq
        %v1967 = vshrl.u32 %v1966, 7
        %v1968 = vsub.s32 5, %v1967
        %v1969 = vrot.slane %v1585, %v1968
        %1971 = vbcast.lane.b32.xlu0 %v1969, 256
        %v1972 = vpop.permute.xlu0 %1971
        %v1973 = vlaneseq
        %v1974 = vshrl.u32 %v1973, 7
        %v1975 = vsub.s32 6, %v1974
        %v1976 = vrot.slane %v1585, %v1975
        %1978 = vbcast.lane.b32.xlu0 %v1976, 256
        %v1979 = vpop.permute.xlu0 %1978
        %v1980 = vlaneseq
        %v1981 = vshrl.u32 %v1980, 7
        %v1982 = vsub.s32 7, %v1981
        %v1983 = vrot.slane %v1585, %v1982
        %1985 = vbcast.lane.b32.xlu0 %v1983, 256
        %v1986 = vpop.permute.xlu0 %1985
        %v1987 = vlaneseq
        %v1988 = vshrl.u32 %v1987, 7
        %v1989 = vsub.s32 0, %v1988
        %v1990 = vrot.slane %v1586, %v1989
        %1992 = vbcast.lane.b32.xlu0 %v1990, 256
        %v1993 = vpop.permute.xlu0 %1992
        %v1994 = vlaneseq
        %v1995 = vshrl.u32 %v1994, 7
        %v1996 = vsub.s32 1, %v1995
        %v1997 = vrot.slane %v1586, %v1996
        %1999 = vbcast.lane.b32.xlu0 %v1997, 256
        %v2000 = vpop.permute.xlu0 %1999
        %v2001 = vlaneseq
        %v2002 = vshrl.u32 %v2001, 7
        %v2003 = vsub.s32 2, %v2002
        %v2004 = vrot.slane %v1586, %v2003
        %2006 = vbcast.lane.b32.xlu0 %v2004, 256
        %v2007 = vpop.permute.xlu0 %2006
        %v2008 = vlaneseq
        %v2009 = vshrl.u32 %v2008, 7
        %v2010 = vsub.s32 3, %v2009
        %v2011 = vrot.slane %v1586, %v2010
        %2013 = vbcast.lane.b32.xlu0 %v2011, 256
        %v2014 = vpop.permute.xlu0 %2013
        %v2015 = vlaneseq
        %v2016 = vshrl.u32 %v2015, 7
        %v2017 = vsub.s32 4, %v2016
        %v2018 = vrot.slane %v1586, %v2017
        %2020 = vbcast.lane.b32.xlu0 %v2018, 256
        %v2021 = vpop.permute.xlu0 %2020
        %v2022 = vlaneseq
        %v2023 = vshrl.u32 %v2022, 7
        %v2024 = vsub.s32 5, %v2023
        %v2025 = vrot.slane %v1586, %v2024
        %2027 = vbcast.lane.b32.xlu0 %v2025, 256
        %v2028 = vpop.permute.xlu0 %2027
        %v2029 = vlaneseq
        %v2030 = vshrl.u32 %v2029, 7
        %v2031 = vsub.s32 6, %v2030
        %v2032 = vrot.slane %v1586, %v2031
        %2034 = vbcast.lane.b32.xlu0 %v2032, 256
        %v2035 = vpop.permute.xlu0 %2034
        %v2036 = vlaneseq
        %v2037 = vshrl.u32 %v2036, 7
        %v2038 = vsub.s32 7, %v2037
        %v2039 = vrot.slane %v1586, %v2038
        %2041 = vbcast.lane.b32.xlu0 %v2039, 256
        %v2042 = vpop.permute.xlu0 %2041
        %v2043 = vlaneseq
        %v2044 = vshrl.u32 %v2043, 7
        %v2045 = vsub.s32 0, %v2044
        %v2046 = vrot.slane %v1587, %v2045
        %2048 = vbcast.lane.b32.xlu0 %v2046, 256
        %v2049 = vpop.permute.xlu0 %2048
        %v2050 = vlaneseq
        %v2051 = vshrl.u32 %v2050, 7
        %v2052 = vsub.s32 1, %v2051
        %v2053 = vrot.slane %v1587, %v2052
        %2055 = vbcast.lane.b32.xlu0 %v2053, 256
        %v2056 = vpop.permute.xlu0 %2055
        %v2057 = vlaneseq
        %v2058 = vshrl.u32 %v2057, 7
        %v2059 = vsub.s32 2, %v2058
        %v2060 = vrot.slane %v1587, %v2059
        %2062 = vbcast.lane.b32.xlu0 %v2060, 256
        %v2063 = vpop.permute.xlu0 %2062
        %v2064 = vlaneseq
        %v2065 = vshrl.u32 %v2064, 7
        %v2066 = vsub.s32 3, %v2065
        %v2067 = vrot.slane %v1587, %v2066
        %2069 = vbcast.lane.b32.xlu0 %v2067, 256
        %v2070 = vpop.permute.xlu0 %2069
        %v2071 = vlaneseq
        %v2072 = vshrl.u32 %v2071, 7
        %v2073 = vsub.s32 4, %v2072
        %v2074 = vrot.slane %v1587, %v2073
        %2076 = vbcast.lane.b32.xlu0 %v2074, 256
        %v2077 = vpop.permute.xlu0 %2076
        %v2078 = vlaneseq
        %v2079 = vshrl.u32 %v2078, 7
        %v2080 = vsub.s32 5, %v2079
        %v2081 = vrot.slane %v1587, %v2080
        %2083 = vbcast.lane.b32.xlu0 %v2081, 256
        %v2084 = vpop.permute.xlu0 %2083
        %v2085 = vlaneseq
        %v2086 = vshrl.u32 %v2085, 7
        %v2087 = vsub.s32 6, %v2086
        %v2088 = vrot.slane %v1587, %v2087
        %2090 = vbcast.lane.b32.xlu0 %v2088, 256
        %v2091 = vpop.permute.xlu0 %2090
        %v2092 = vlaneseq
        %v2093 = vshrl.u32 %v2092, 7
        %v2094 = vsub.s32 7, %v2093
        %v2095 = vrot.slane %v1587, %v2094
        %2097 = vbcast.lane.b32.xlu0 %v2095, 256
        %v2098 = vpop.permute.xlu0 %2097
        %v2099 = vlaneseq
        %v2100 = vshrl.u32 %v2099, 7
        %v2101 = vsub.s32 0, %v2100
        %v2102 = vrot.slane %v1588, %v2101
        %2104 = vbcast.lane.b32.xlu0 %v2102, 256
        %v2105 = vpop.permute.xlu0 %2104
        %v2106 = vlaneseq
        %v2107 = vshrl.u32 %v2106, 7
        %v2108 = vsub.s32 1, %v2107
        %v2109 = vrot.slane %v1588, %v2108
        %2111 = vbcast.lane.b32.xlu0 %v2109, 256
        %v2112 = vpop.permute.xlu0 %2111
        %v2113 = vlaneseq
        %v2114 = vshrl.u32 %v2113, 7
        %v2115 = vsub.s32 2, %v2114
        %v2116 = vrot.slane %v1588, %v2115
        %2118 = vbcast.lane.b32.xlu0 %v2116, 256
        %v2119 = vpop.permute.xlu0 %2118
        %v2120 = vlaneseq
        %v2121 = vshrl.u32 %v2120, 7
        %v2122 = vsub.s32 3, %v2121
        %v2123 = vrot.slane %v1588, %v2122
        %2125 = vbcast.lane.b32.xlu0 %v2123, 256
        %v2126 = vpop.permute.xlu0 %2125
        %v2127 = vlaneseq
        %v2128 = vshrl.u32 %v2127, 7
        %v2129 = vsub.s32 4, %v2128
        %v2130 = vrot.slane %v1588, %v2129
        %2132 = vbcast.lane.b32.xlu0 %v2130, 256
        %v2133 = vpop.permute.xlu0 %2132
        %v2134 = vlaneseq
        %v2135 = vshrl.u32 %v2134, 7
        %v2136 = vsub.s32 5, %v2135
        %v2137 = vrot.slane %v1588, %v2136
        %2139 = vbcast.lane.b32.xlu0 %v2137, 256
        %v2140 = vpop.permute.xlu0 %2139
        %v2141 = vlaneseq
        %v2142 = vshrl.u32 %v2141, 7
        %v2143 = vsub.s32 6, %v2142
        %v2144 = vrot.slane %v1588, %v2143
        %2146 = vbcast.lane.b32.xlu0 %v2144, 256
        %v2147 = vpop.permute.xlu0 %2146
        %v2148 = vlaneseq
        %v2149 = vshrl.u32 %v2148, 7
        %v2150 = vsub.s32 7, %v2149
        %v2151 = vrot.slane %v1588, %v2150
        %2153 = vbcast.lane.b32.xlu0 %v2151, 256
        %v2154 = vpop.permute.xlu0 %2153
        %v2155 = vlaneseq
        %v2156 = vshrl.u32 %v2155, 7
        %v2157 = vsub.s32 0, %v2156
        %v2158 = vrot.slane %v1589, %v2157
        %2160 = vbcast.lane.b32.xlu0 %v2158, 256
        %v2161 = vpop.permute.xlu0 %2160
        %v2162 = vlaneseq
        %v2163 = vshrl.u32 %v2162, 7
        %v2164 = vsub.s32 1, %v2163
        %v2165 = vrot.slane %v1589, %v2164
        %2167 = vbcast.lane.b32.xlu0 %v2165, 256
        %v2168 = vpop.permute.xlu0 %2167
        %v2169 = vlaneseq
        %v2170 = vshrl.u32 %v2169, 7
        %v2171 = vsub.s32 2, %v2170
        %v2172 = vrot.slane %v1589, %v2171
        %2174 = vbcast.lane.b32.xlu0 %v2172, 256
        %v2175 = vpop.permute.xlu0 %2174
        %v2176 = vlaneseq
        %v2177 = vshrl.u32 %v2176, 7
        %v2178 = vsub.s32 3, %v2177
        %v2179 = vrot.slane %v1589, %v2178
        %2181 = vbcast.lane.b32.xlu0 %v2179, 256
        %v2182 = vpop.permute.xlu0 %2181
        %v2183 = vlaneseq
        %v2184 = vshrl.u32 %v2183, 7
        %v2185 = vsub.s32 4, %v2184
        %v2186 = vrot.slane %v1589, %v2185
        %2188 = vbcast.lane.b32.xlu0 %v2186, 256
        %v2189 = vpop.permute.xlu0 %2188
        %v2190 = vlaneseq
        %v2191 = vshrl.u32 %v2190, 7
        %v2192 = vsub.s32 5, %v2191
        %v2193 = vrot.slane %v1589, %v2192
        %2195 = vbcast.lane.b32.xlu0 %v2193, 256
        %v2196 = vpop.permute.xlu0 %2195
        %v2197 = vlaneseq
        %v2198 = vshrl.u32 %v2197, 7
        %v2199 = vsub.s32 6, %v2198
        %v2200 = vrot.slane %v1589, %v2199
        %2202 = vbcast.lane.b32.xlu0 %v2200, 256
        %v2203 = vpop.permute.xlu0 %2202
        %v2204 = vlaneseq
        %v2205 = vshrl.u32 %v2204, 7
        %v2206 = vsub.s32 7, %v2205
        %v2207 = vrot.slane %v1589, %v2206
        %2209 = vbcast.lane.b32.xlu0 %v2207, 256
        %v2210 = vpop.permute.xlu0 %2209
        %v2211 = vlaneseq
        %v2212 = vshrl.u32 %v2211, 7
        %v2213 = vsub.s32 0, %v2212
        %v2214 = vrot.slane %v1590, %v2213
        %2216 = vbcast.lane.b32.xlu0 %v2214, 256
        %v2217 = vpop.permute.xlu0 %2216
        %v2218 = vlaneseq
        %v2219 = vshrl.u32 %v2218, 7
        %v2220 = vsub.s32 1, %v2219
        %v2221 = vrot.slane %v1590, %v2220
        %2223 = vbcast.lane.b32.xlu0 %v2221, 256
        %v2224 = vpop.permute.xlu0 %2223
        %v2225 = vlaneseq
        %v2226 = vshrl.u32 %v2225, 7
        %v2227 = vsub.s32 2, %v2226
        %v2228 = vrot.slane %v1590, %v2227
        %2230 = vbcast.lane.b32.xlu0 %v2228, 256
        %v2231 = vpop.permute.xlu0 %2230
        %v2232 = vlaneseq
        %v2233 = vshrl.u32 %v2232, 7
        %v2234 = vsub.s32 3, %v2233
        %v2235 = vrot.slane %v1590, %v2234
        %2237 = vbcast.lane.b32.xlu0 %v2235, 256
        %v2238 = vpop.permute.xlu0 %2237
        %v2239 = vlaneseq
        %v2240 = vshrl.u32 %v2239, 7
        %v2241 = vsub.s32 4, %v2240
        %v2242 = vrot.slane %v1590, %v2241
        %2244 = vbcast.lane.b32.xlu0 %v2242, 256
        %v2245 = vpop.permute.xlu0 %2244
        %v2246 = vlaneseq
        %v2247 = vshrl.u32 %v2246, 7
        %v2248 = vsub.s32 5, %v2247
        %v2249 = vrot.slane %v1590, %v2248
        %2251 = vbcast.lane.b32.xlu0 %v2249, 256
        %v2252 = vpop.permute.xlu0 %2251
        %v2253 = vlaneseq
        %v2254 = vshrl.u32 %v2253, 7
        %v2255 = vsub.s32 6, %v2254
        %v2256 = vrot.slane %v1590, %v2255
        %2258 = vbcast.lane.b32.xlu0 %v2256, 256
        %v2259 = vpop.permute.xlu0 %2258
        %v2260 = vlaneseq
        %v2261 = vshrl.u32 %v2260, 7
        %v2262 = vsub.s32 7, %v2261
        %v2263 = vrot.slane %v1590, %v2262
        %2265 = vbcast.lane.b32.xlu0 %v2263, 256
        %v2266 = vpop.permute.xlu0 %2265
        %v2267 = vlaneseq
        %v2268 = vshrl.u32 %v2267, 7
        %v2269 = vsub.s32 0, %v2268
        %v2270 = vrot.slane %v1591, %v2269
        %2272 = vbcast.lane.b32.xlu0 %v2270, 256
        %v2273 = vpop.permute.xlu0 %2272
        %v2274 = vlaneseq
        %v2275 = vshrl.u32 %v2274, 7
        %v2276 = vsub.s32 1, %v2275
        %v2277 = vrot.slane %v1591, %v2276
        %2279 = vbcast.lane.b32.xlu0 %v2277, 256
        %v2280 = vpop.permute.xlu0 %2279
        %v2281 = vlaneseq
        %v2282 = vshrl.u32 %v2281, 7
        %v2283 = vsub.s32 2, %v2282
        %v2284 = vrot.slane %v1591, %v2283
        %2286 = vbcast.lane.b32.xlu0 %v2284, 256
        %v2287 = vpop.permute.xlu0 %2286
        %v2288 = vlaneseq
        %v2289 = vshrl.u32 %v2288, 7
        %v2290 = vsub.s32 3, %v2289
        %v2291 = vrot.slane %v1591, %v2290
        %2293 = vbcast.lane.b32.xlu0 %v2291, 256
        %v2294 = vpop.permute.xlu0 %2293
        %v2295 = vlaneseq
        %v2296 = vshrl.u32 %v2295, 7
        %v2297 = vsub.s32 4, %v2296
        %v2298 = vrot.slane %v1591, %v2297
        %2300 = vbcast.lane.b32.xlu0 %v2298, 256
        %v2301 = vpop.permute.xlu0 %2300
        %v2302 = vlaneseq
        %v2303 = vshrl.u32 %v2302, 7
        %v2304 = vsub.s32 5, %v2303
        %v2305 = vrot.slane %v1591, %v2304
        %2307 = vbcast.lane.b32.xlu0 %v2305, 256
        %v2308 = vpop.permute.xlu0 %2307
        %v2309 = vlaneseq
        %v2310 = vshrl.u32 %v2309, 7
        %v2311 = vsub.s32 6, %v2310
        %v2312 = vrot.slane %v1591, %v2311
        %2314 = vbcast.lane.b32.xlu0 %v2312, 256
        %v2315 = vpop.permute.xlu0 %2314
        %v2316 = vlaneseq
        %v2317 = vshrl.u32 %v2316, 7
        %v2318 = vsub.s32 7, %v2317
        %v2319 = vrot.slane %v1591, %v2318
        %2321 = vbcast.lane.b32.xlu0 %v2319, 256
        %v2322 = vpop.permute.xlu0 %2321
        %v2323 = vlaneseq
        %v2324 = vshrl.u32 %v2323, 7
        %v2325 = vsub.s32 0, %v2324
        %v2326 = vrot.slane %v1592, %v2325
        %2328 = vbcast.lane.b32.xlu0 %v2326, 256
        %v2329 = vpop.permute.xlu0 %2328
        %v2330 = vlaneseq
        %v2331 = vshrl.u32 %v2330, 7
        %v2332 = vsub.s32 1, %v2331
        %v2333 = vrot.slane %v1592, %v2332
        %2335 = vbcast.lane.b32.xlu0 %v2333, 256
        %v2336 = vpop.permute.xlu0 %2335
        %v2337 = vlaneseq
        %v2338 = vshrl.u32 %v2337, 7
        %v2339 = vsub.s32 2, %v2338
        %v2340 = vrot.slane %v1592, %v2339
        %2342 = vbcast.lane.b32.xlu0 %v2340, 256
        %v2343 = vpop.permute.xlu0 %2342
        %v2344 = vlaneseq
        %v2345 = vshrl.u32 %v2344, 7
        %v2346 = vsub.s32 3, %v2345
        %v2347 = vrot.slane %v1592, %v2346
        %2349 = vbcast.lane.b32.xlu0 %v2347, 256
        %v2350 = vpop.permute.xlu0 %2349
        %v2351 = vlaneseq
        %v2352 = vshrl.u32 %v2351, 7
        %v2353 = vsub.s32 4, %v2352
        %v2354 = vrot.slane %v1592, %v2353
        %2356 = vbcast.lane.b32.xlu0 %v2354, 256
        %v2357 = vpop.permute.xlu0 %2356
        %v2358 = vlaneseq
        %v2359 = vshrl.u32 %v2358, 7
        %v2360 = vsub.s32 5, %v2359
        %v2361 = vrot.slane %v1592, %v2360
        %2363 = vbcast.lane.b32.xlu0 %v2361, 256
        %v2364 = vpop.permute.xlu0 %2363
        %v2365 = vlaneseq
        %v2366 = vshrl.u32 %v2365, 7
        %v2367 = vsub.s32 6, %v2366
        %v2368 = vrot.slane %v1592, %v2367
        %2370 = vbcast.lane.b32.xlu0 %v2368, 256
        %v2371 = vpop.permute.xlu0 %2370
        %v2372 = vlaneseq
        %v2373 = vshrl.u32 %v2372, 7
        %v2374 = vsub.s32 7, %v2373
        %v2375 = vrot.slane %v1592, %v2374
        %2377 = vbcast.lane.b32.xlu0 %v2375, 256
        %v2378 = vpop.permute.xlu0 %2377
        %v2379 = vlaneseq
        %v2380 = vshrl.u32 %v2379, 7
        %v2381 = vsub.s32 0, %v2380
        %v2382 = vrot.slane %v1593, %v2381
        %2384 = vbcast.lane.b32.xlu0 %v2382, 256
        %v2385 = vpop.permute.xlu0 %2384
        %v2386 = vlaneseq
        %v2387 = vshrl.u32 %v2386, 7
        %v2388 = vsub.s32 1, %v2387
        %v2389 = vrot.slane %v1593, %v2388
        %2391 = vbcast.lane.b32.xlu0 %v2389, 256
        %v2392 = vpop.permute.xlu0 %2391
        %v2393 = vlaneseq
        %v2394 = vshrl.u32 %v2393, 7
        %v2395 = vsub.s32 2, %v2394
        %v2396 = vrot.slane %v1593, %v2395
        %2398 = vbcast.lane.b32.xlu0 %v2396, 256
        %v2399 = vpop.permute.xlu0 %2398
        %v2400 = vlaneseq
        %v2401 = vshrl.u32 %v2400, 7
        %v2402 = vsub.s32 3, %v2401
        %v2403 = vrot.slane %v1593, %v2402
        %2405 = vbcast.lane.b32.xlu0 %v2403, 256
        %v2406 = vpop.permute.xlu0 %2405
        %v2407 = vlaneseq
        %v2408 = vshrl.u32 %v2407, 7
        %v2409 = vsub.s32 4, %v2408
        %v2410 = vrot.slane %v1593, %v2409
        %2412 = vbcast.lane.b32.xlu0 %v2410, 256
        %v2413 = vpop.permute.xlu0 %2412
        %v2414 = vlaneseq
        %v2415 = vshrl.u32 %v2414, 7
        %v2416 = vsub.s32 5, %v2415
        %v2417 = vrot.slane %v1593, %v2416
        %2419 = vbcast.lane.b32.xlu0 %v2417, 256
        %v2420 = vpop.permute.xlu0 %2419
        %v2421 = vlaneseq
        %v2422 = vshrl.u32 %v2421, 7
        %v2423 = vsub.s32 6, %v2422
        %v2424 = vrot.slane %v1593, %v2423
        %2426 = vbcast.lane.b32.xlu0 %v2424, 256
        %v2427 = vpop.permute.xlu0 %2426
        %v2428 = vlaneseq
        %v2429 = vshrl.u32 %v2428, 7
        %v2430 = vsub.s32 7, %v2429
        %v2431 = vrot.slane %v1593, %v2430
        %2433 = vbcast.lane.b32.xlu0 %v2431, 256
        %v2434 = vpop.permute.xlu0 %2433
        %v2435 = vlaneseq
        %v2436 = vshrl.u32 %v2435, 7
        %v2437 = vsub.s32 0, %v2436
        %v2438 = vrot.slane %v1594, %v2437
        %2440 = vbcast.lane.b32.xlu0 %v2438, 256
        %v2441 = vpop.permute.xlu0 %2440
        %v2442 = vlaneseq
        %v2443 = vshrl.u32 %v2442, 7
        %v2444 = vsub.s32 1, %v2443
        %v2445 = vrot.slane %v1594, %v2444
        %2447 = vbcast.lane.b32.xlu0 %v2445, 256
        %v2448 = vpop.permute.xlu0 %2447
        %v2449 = vlaneseq
        %v2450 = vshrl.u32 %v2449, 7
        %v2451 = vsub.s32 2, %v2450
        %v2452 = vrot.slane %v1594, %v2451
        %2454 = vbcast.lane.b32.xlu0 %v2452, 256
        %v2455 = vpop.permute.xlu0 %2454
        %v2456 = vlaneseq
        %v2457 = vshrl.u32 %v2456, 7
        %v2458 = vsub.s32 3, %v2457
        %v2459 = vrot.slane %v1594, %v2458
        %2461 = vbcast.lane.b32.xlu0 %v2459, 256
        %v2462 = vpop.permute.xlu0 %2461
        %v2463 = vlaneseq
        %v2464 = vshrl.u32 %v2463, 7
        %v2465 = vsub.s32 4, %v2464
        %v2466 = vrot.slane %v1594, %v2465
        %2468 = vbcast.lane.b32.xlu0 %v2466, 256
        %v2469 = vpop.permute.xlu0 %2468
        %v2470 = vlaneseq
        %v2471 = vshrl.u32 %v2470, 7
        %v2472 = vsub.s32 5, %v2471
        %v2473 = vrot.slane %v1594, %v2472
        %2475 = vbcast.lane.b32.xlu0 %v2473, 256
        %v2476 = vpop.permute.xlu0 %2475
        %v2477 = vlaneseq
        %v2478 = vshrl.u32 %v2477, 7
        %v2479 = vsub.s32 6, %v2478
        %v2480 = vrot.slane %v1594, %v2479
        %2482 = vbcast.lane.b32.xlu0 %v2480, 256
        %v2483 = vpop.permute.xlu0 %2482
        %v2484 = vlaneseq
        %v2485 = vshrl.u32 %v2484, 7
        %v2486 = vsub.s32 7, %v2485
        %v2487 = vrot.slane %v1594, %v2486
        %2489 = vbcast.lane.b32.xlu0 %v2487, 256
        %v2490 = vpop.permute.xlu0 %2489
        %v2491 = vmul.f32 %v1451, %v1601
        %v2492 = vmul.f32 %v1452, %v1608
        %v2493 = vmul.f32 %v1453, %v1615
        %v2494 = vmul.f32 %v1454, %v1622
        %v2495 = vmul.f32 %v1455, %v1629
        %v2496 = vmul.f32 %v1456, %v1636
        %v2497 = vmul.f32 %v1457, %v1643
        %v2498 = vmul.f32 %v1458, %v1650
        %v2499 = vmul.f32 %v1459, %v1657
        %v2500 = vmul.f32 %v1460, %v1664
        %v2501 = vmul.f32 %v1461, %v1671
        %v2502 = vmul.f32 %v1462, %v1678
        %v2503 = vmul.f32 %v1463, %v1685
        %v2504 = vmul.f32 %v1464, %v1692
        %v2505 = vmul.f32 %v1465, %v1699
        %v2506 = vmul.f32 %v1466, %v1706
        %v2507 = vmul.f32 %v1467, %v1713
        %v2508 = vmul.f32 %v1468, %v1720
        %v2509 = vmul.f32 %v1469, %v1727
        %v2510 = vmul.f32 %v1470, %v1734
        %v2511 = vmul.f32 %v1471, %v1741
        %v2512 = vmul.f32 %v1472, %v1748
        %v2513 = vmul.f32 %v1473, %v1755
        %v2514 = vmul.f32 %v1474, %v1762
        %v2515 = vmul.f32 %v1475, %v1769
        %v2516 = vmul.f32 %v1476, %v1776
        %v2517 = vmul.f32 %v1477, %v1783
        %v2518 = vmul.f32 %v1478, %v1790
        %v2519 = vmul.f32 %v1479, %v1797
        %v2520 = vmul.f32 %v1480, %v1804
        %v2521 = vmul.f32 %v1481, %v1811
        %v2522 = vmul.f32 %v1482, %v1818
        %v2523 = vmul.f32 %v1483, %v1825
        %v2524 = vmul.f32 %v1484, %v1832
        %v2525 = vmul.f32 %v1485, %v1839
        %v2526 = vmul.f32 %v1486, %v1846
        %v2527 = vmul.f32 %v1487, %v1853
        %v2528 = vmul.f32 %v1488, %v1860
        %v2529 = vmul.f32 %v1489, %v1867
        %v2530 = vmul.f32 %v1490, %v1874
        %v2531 = vmul.f32 %v1491, %v1881
        %v2532 = vmul.f32 %v1492, %v1888
        %v2533 = vmul.f32 %v1493, %v1895
        %v2534 = vmul.f32 %v1494, %v1902
        %v2535 = vmul.f32 %v1495, %v1909
        %v2536 = vmul.f32 %v1496, %v1916
        %v2537 = vmul.f32 %v1497, %v1923
        %v2538 = vmul.f32 %v1498, %v1930
        %v2539 = vmul.f32 %v1499, %v1937
        %v2540 = vmul.f32 %v1500, %v1944
        %v2541 = vmul.f32 %v1501, %v1951
        %v2542 = vmul.f32 %v1502, %v1958
        %v2543 = vmul.f32 %v1503, %v1965
        %v2544 = vmul.f32 %v1504, %v1972
        %v2545 = vmul.f32 %v1505, %v1979
        %v2546 = vmul.f32 %v1506, %v1986
        %v2547 = vmul.f32 %v1507, %v1993
        %v2548 = vmul.f32 %v1508, %v2000
        %v2549 = vmul.f32 %v1509, %v2007
        %v2550 = vmul.f32 %v1510, %v2014
        %v2551 = vmul.f32 %v1511, %v2021
        %v2552 = vmul.f32 %v1512, %v2028
        %v2553 = vmul.f32 %v1513, %v2035
        %v2554 = vmul.f32 %v1514, %v2042
        %v2555 = vmul.f32 %v1515, %v2049
        %v2556 = vmul.f32 %v1516, %v2056
        %v2557 = vmul.f32 %v1517, %v2063
        %v2558 = vmul.f32 %v1518, %v2070
        %v2559 = vmul.f32 %v1519, %v2077
        %v2560 = vmul.f32 %v1520, %v2084
        %v2561 = vmul.f32 %v1521, %v2091
        %v2562 = vmul.f32 %v1522, %v2098
        %v2563 = vmul.f32 %v1523, %v2105
        %v2564 = vmul.f32 %v1524, %v2112
        %v2565 = vmul.f32 %v1525, %v2119
        %v2566 = vmul.f32 %v1526, %v2126
        %v2567 = vmul.f32 %v1527, %v2133
        %v2568 = vmul.f32 %v1528, %v2140
        %v2569 = vmul.f32 %v1529, %v2147
        %v2570 = vmul.f32 %v1530, %v2154
        %v2571 = vmul.f32 %v1531, %v2161
        %v2572 = vmul.f32 %v1532, %v2168
        %v2573 = vmul.f32 %v1533, %v2175
        %v2574 = vmul.f32 %v1534, %v2182
        %v2575 = vmul.f32 %v1535, %v2189
        %v2576 = vmul.f32 %v1536, %v2196
        %v2577 = vmul.f32 %v1537, %v2203
        %v2578 = vmul.f32 %v1538, %v2210
        %v2579 = vmul.f32 %v1539, %v2217
        %v2580 = vmul.f32 %v1540, %v2224
        %v2581 = vmul.f32 %v1541, %v2231
        %v2582 = vmul.f32 %v1542, %v2238
        %v2583 = vmul.f32 %v1543, %v2245
        %v2584 = vmul.f32 %v1544, %v2252
        %v2585 = vmul.f32 %v1545, %v2259
        %v2586 = vmul.f32 %v1546, %v2266
        %v2587 = vmul.f32 %v1547, %v2273
        %v2588 = vmul.f32 %v1548, %v2280
        %v2589 = vmul.f32 %v1549, %v2287
        %v2590 = vmul.f32 %v1550, %v2294
        %v2591 = vmul.f32 %v1551, %v2301
        %v2592 = vmul.f32 %v1552, %v2308
        %v2593 = vmul.f32 %v1553, %v2315
        %v2594 = vmul.f32 %v1554, %v2322
        %v2595 = vmul.f32 %v1555, %v2329
        %v2596 = vmul.f32 %v1556, %v2336
        %v2597 = vmul.f32 %v1557, %v2343
        %v2598 = vmul.f32 %v1558, %v2350
        %v2599 = vmul.f32 %v1559, %v2357
        %v2600 = vmul.f32 %v1560, %v2364
        %v2601 = vmul.f32 %v1561, %v2371
        %v2602 = vmul.f32 %v1562, %v2378
        %v2603 = vmul.f32 %v1563, %v2385
        %v2604 = vmul.f32 %v1564, %v2392
        %v2605 = vmul.f32 %v1565, %v2399
        %v2606 = vmul.f32 %v1566, %v2406
        %v2607 = vmul.f32 %v1567, %v2413
        %v2608 = vmul.f32 %v1568, %v2420
        %v2609 = vmul.f32 %v1569, %v2427
        %v2610 = vmul.f32 %v1570, %v2434
        %v2611 = vmul.f32 %v1571, %v2441
        %v2612 = vmul.f32 %v1572, %v2448
        %v2613 = vmul.f32 %v1573, %v2455
        %v2614 = vmul.f32 %v1574, %v2462
        %v2615 = vmul.f32 %v1575, %v2469
        %v2616 = vmul.f32 %v1576, %v2476
        %v2617 = vmul.f32 %v1577, %v2483
        %v2618 = vmul.f32 %v1578, %v2490
        %v2619 = vrot.slane %v2491, 4
        %v2620 = vmax.f32 %v2491, %v2619
        %v2621 = vrot.slane %v2620, 2
        %v2622 = vmax.f32 %v2620, %v2621
        %v2623 = vrot.slane %v2622, 1
        %v2624 = vmax.f32 %v2622, %v2623
        %v2625 = vrot.slane %v2492, 4
        %v2626 = vmax.f32 %v2492, %v2625
        %v2627 = vrot.slane %v2626, 2
        %v2628 = vmax.f32 %v2626, %v2627
        %v2629 = vrot.slane %v2628, 1
        %v2630 = vmax.f32 %v2628, %v2629
        %v2631 = vrot.slane %v2493, 4
        %v2632 = vmax.f32 %v2493, %v2631
        %v2633 = vrot.slane %v2632, 2
        %v2634 = vmax.f32 %v2632, %v2633
        %v2635 = vrot.slane %v2634, 1
        %v2636 = vmax.f32 %v2634, %v2635
        %v2637 = vrot.slane %v2494, 4
        %v2638 = vmax.f32 %v2494, %v2637
        %v2639 = vrot.slane %v2638, 2
        %v2640 = vmax.f32 %v2638, %v2639
        %v2641 = vrot.slane %v2640, 1
        %v2642 = vmax.f32 %v2640, %v2641
        %v2643 = vrot.slane %v2495, 4
        %v2644 = vmax.f32 %v2495, %v2643
        %v2645 = vrot.slane %v2644, 2
        %v2646 = vmax.f32 %v2644, %v2645
        %v2647 = vrot.slane %v2646, 1
        %v2648 = vmax.f32 %v2646, %v2647
        %v2649 = vrot.slane %v2496, 4
        %v2650 = vmax.f32 %v2496, %v2649
        %v2651 = vrot.slane %v2650, 2
        %v2652 = vmax.f32 %v2650, %v2651
        %v2653 = vrot.slane %v2652, 1
        %v2654 = vmax.f32 %v2652, %v2653
        %v2655 = vrot.slane %v2497, 4
        %v2656 = vmax.f32 %v2497, %v2655
        %v2657 = vrot.slane %v2656, 2
        %v2658 = vmax.f32 %v2656, %v2657
        %v2659 = vrot.slane %v2658, 1
        %v2660 = vmax.f32 %v2658, %v2659
        %v2661 = vrot.slane %v2498, 4
        %v2662 = vmax.f32 %v2498, %v2661
        %v2663 = vrot.slane %v2662, 2
        %v2664 = vmax.f32 %v2662, %v2663
        %v2665 = vrot.slane %v2664, 1
        %v2666 = vmax.f32 %v2664, %v2665
        %v2667 = vrot.slane %v2499, 4
        %v2668 = vmax.f32 %v2499, %v2667
        %v2669 = vrot.slane %v2668, 2
        %v2670 = vmax.f32 %v2668, %v2669
        %v2671 = vrot.slane %v2670, 1
        %v2672 = vmax.f32 %v2670, %v2671
        %v2673 = vrot.slane %v2500, 4
        %v2674 = vmax.f32 %v2500, %v2673
        %v2675 = vrot.slane %v2674, 2
        %v2676 = vmax.f32 %v2674, %v2675
        %v2677 = vrot.slane %v2676, 1
        %v2678 = vmax.f32 %v2676, %v2677
        %v2679 = vrot.slane %v2501, 4
        %v2680 = vmax.f32 %v2501, %v2679
        %v2681 = vrot.slane %v2680, 2
        %v2682 = vmax.f32 %v2680, %v2681
        %v2683 = vrot.slane %v2682, 1
        %v2684 = vmax.f32 %v2682, %v2683
        %v2685 = vrot.slane %v2502, 4
        %v2686 = vmax.f32 %v2502, %v2685
        %v2687 = vrot.slane %v2686, 2
        %v2688 = vmax.f32 %v2686, %v2687
        %v2689 = vrot.slane %v2688, 1
        %v2690 = vmax.f32 %v2688, %v2689
        %v2691 = vrot.slane %v2503, 4
        %v2692 = vmax.f32 %v2503, %v2691
        %v2693 = vrot.slane %v2692, 2
        %v2694 = vmax.f32 %v2692, %v2693
        %v2695 = vrot.slane %v2694, 1
        %v2696 = vmax.f32 %v2694, %v2695
        %v2697 = vrot.slane %v2504, 4
        %v2698 = vmax.f32 %v2504, %v2697
        %v2699 = vrot.slane %v2698, 2
        %v2700 = vmax.f32 %v2698, %v2699
        %v2701 = vrot.slane %v2700, 1
        %v2702 = vmax.f32 %v2700, %v2701
        %v2703 = vrot.slane %v2505, 4
        %v2704 = vmax.f32 %v2505, %v2703
        %v2705 = vrot.slane %v2704, 2
        %v2706 = vmax.f32 %v2704, %v2705
        %v2707 = vrot.slane %v2706, 1
        %v2708 = vmax.f32 %v2706, %v2707
        %v2709 = vrot.slane %v2506, 4
        %v2710 = vmax.f32 %v2506, %v2709
        %v2711 = vrot.slane %v2710, 2
        %v2712 = vmax.f32 %v2710, %v2711
        %v2713 = vrot.slane %v2712, 1
        %v2714 = vmax.f32 %v2712, %v2713
        %v2715 = vrot.slane %v2507, 4
        %v2716 = vmax.f32 %v2507, %v2715
        %v2717 = vrot.slane %v2716, 2
        %v2718 = vmax.f32 %v2716, %v2717
        %v2719 = vrot.slane %v2718, 1
        %v2720 = vmax.f32 %v2718, %v2719
        %v2721 = vrot.slane %v2508, 4
        %v2722 = vmax.f32 %v2508, %v2721
        %v2723 = vrot.slane %v2722, 2
        %v2724 = vmax.f32 %v2722, %v2723
        %v2725 = vrot.slane %v2724, 1
        %v2726 = vmax.f32 %v2724, %v2725
        %v2727 = vrot.slane %v2509, 4
        %v2728 = vmax.f32 %v2509, %v2727
        %v2729 = vrot.slane %v2728, 2
        %v2730 = vmax.f32 %v2728, %v2729
        %v2731 = vrot.slane %v2730, 1
        %v2732 = vmax.f32 %v2730, %v2731
        %v2733 = vrot.slane %v2510, 4
        %v2734 = vmax.f32 %v2510, %v2733
        %v2735 = vrot.slane %v2734, 2
        %v2736 = vmax.f32 %v2734, %v2735
        %v2737 = vrot.slane %v2736, 1
        %v2738 = vmax.f32 %v2736, %v2737
        %v2739 = vrot.slane %v2511, 4
        %v2740 = vmax.f32 %v2511, %v2739
        %v2741 = vrot.slane %v2740, 2
        %v2742 = vmax.f32 %v2740, %v2741
        %v2743 = vrot.slane %v2742, 1
        %v2744 = vmax.f32 %v2742, %v2743
        %v2745 = vrot.slane %v2512, 4
        %v2746 = vmax.f32 %v2512, %v2745
        %v2747 = vrot.slane %v2746, 2
        %v2748 = vmax.f32 %v2746, %v2747
        %v2749 = vrot.slane %v2748, 1
        %v2750 = vmax.f32 %v2748, %v2749
        %v2751 = vrot.slane %v2513, 4
        %v2752 = vmax.f32 %v2513, %v2751
        %v2753 = vrot.slane %v2752, 2
        %v2754 = vmax.f32 %v2752, %v2753
        %v2755 = vrot.slane %v2754, 1
        %v2756 = vmax.f32 %v2754, %v2755
        %v2757 = vrot.slane %v2514, 4
        %v2758 = vmax.f32 %v2514, %v2757
        %v2759 = vrot.slane %v2758, 2
        %v2760 = vmax.f32 %v2758, %v2759
        %v2761 = vrot.slane %v2760, 1
        %v2762 = vmax.f32 %v2760, %v2761
        %v2763 = vrot.slane %v2515, 4
        %v2764 = vmax.f32 %v2515, %v2763
        %v2765 = vrot.slane %v2764, 2
        %v2766 = vmax.f32 %v2764, %v2765
        %v2767 = vrot.slane %v2766, 1
        %v2768 = vmax.f32 %v2766, %v2767
        %v2769 = vrot.slane %v2516, 4
        %v2770 = vmax.f32 %v2516, %v2769
        %v2771 = vrot.slane %v2770, 2
        %v2772 = vmax.f32 %v2770, %v2771
        %v2773 = vrot.slane %v2772, 1
        %v2774 = vmax.f32 %v2772, %v2773
        %v2775 = vrot.slane %v2517, 4
        %v2776 = vmax.f32 %v2517, %v2775
        %v2777 = vrot.slane %v2776, 2
        %v2778 = vmax.f32 %v2776, %v2777
        %v2779 = vrot.slane %v2778, 1
        %v2780 = vmax.f32 %v2778, %v2779
        %v2781 = vrot.slane %v2518, 4
        %v2782 = vmax.f32 %v2518, %v2781
        %v2783 = vrot.slane %v2782, 2
        %v2784 = vmax.f32 %v2782, %v2783
        %v2785 = vrot.slane %v2784, 1
        %v2786 = vmax.f32 %v2784, %v2785
        %v2787 = vrot.slane %v2519, 4
        %v2788 = vmax.f32 %v2519, %v2787
        %v2789 = vrot.slane %v2788, 2
        %v2790 = vmax.f32 %v2788, %v2789
        %v2791 = vrot.slane %v2790, 1
        %v2792 = vmax.f32 %v2790, %v2791
        %v2793 = vrot.slane %v2520, 4
        %v2794 = vmax.f32 %v2520, %v2793
        %v2795 = vrot.slane %v2794, 2
        %v2796 = vmax.f32 %v2794, %v2795
        %v2797 = vrot.slane %v2796, 1
        %v2798 = vmax.f32 %v2796, %v2797
        %v2799 = vrot.slane %v2521, 4
        %v2800 = vmax.f32 %v2521, %v2799
        %v2801 = vrot.slane %v2800, 2
        %v2802 = vmax.f32 %v2800, %v2801
        %v2803 = vrot.slane %v2802, 1
        %v2804 = vmax.f32 %v2802, %v2803
        %v2805 = vrot.slane %v2522, 4
        %v2806 = vmax.f32 %v2522, %v2805
        %v2807 = vrot.slane %v2806, 2
        %v2808 = vmax.f32 %v2806, %v2807
        %v2809 = vrot.slane %v2808, 1
        %v2810 = vmax.f32 %v2808, %v2809
        %v2811 = vrot.slane %v2523, 4
        %v2812 = vmax.f32 %v2523, %v2811
        %v2813 = vrot.slane %v2812, 2
        %v2814 = vmax.f32 %v2812, %v2813
        %v2815 = vrot.slane %v2814, 1
        %v2816 = vmax.f32 %v2814, %v2815
        %v2817 = vrot.slane %v2524, 4
        %v2818 = vmax.f32 %v2524, %v2817
        %v2819 = vrot.slane %v2818, 2
        %v2820 = vmax.f32 %v2818, %v2819
        %v2821 = vrot.slane %v2820, 1
        %v2822 = vmax.f32 %v2820, %v2821
        %v2823 = vrot.slane %v2525, 4
        %v2824 = vmax.f32 %v2525, %v2823
        %v2825 = vrot.slane %v2824, 2
        %v2826 = vmax.f32 %v2824, %v2825
        %v2827 = vrot.slane %v2826, 1
        %v2828 = vmax.f32 %v2826, %v2827
        %v2829 = vrot.slane %v2526, 4
        %v2830 = vmax.f32 %v2526, %v2829
        %v2831 = vrot.slane %v2830, 2
        %v2832 = vmax.f32 %v2830, %v2831
        %v2833 = vrot.slane %v2832, 1
        %v2834 = vmax.f32 %v2832, %v2833
        %v2835 = vrot.slane %v2527, 4
        %v2836 = vmax.f32 %v2527, %v2835
        %v2837 = vrot.slane %v2836, 2
        %v2838 = vmax.f32 %v2836, %v2837
        %v2839 = vrot.slane %v2838, 1
        %v2840 = vmax.f32 %v2838, %v2839
        %v2841 = vrot.slane %v2528, 4
        %v2842 = vmax.f32 %v2528, %v2841
        %v2843 = vrot.slane %v2842, 2
        %v2844 = vmax.f32 %v2842, %v2843
        %v2845 = vrot.slane %v2844, 1
        %v2846 = vmax.f32 %v2844, %v2845
        %v2847 = vrot.slane %v2529, 4
        %v2848 = vmax.f32 %v2529, %v2847
        %v2849 = vrot.slane %v2848, 2
        %v2850 = vmax.f32 %v2848, %v2849
        %v2851 = vrot.slane %v2850, 1
        %v2852 = vmax.f32 %v2850, %v2851
        %v2853 = vrot.slane %v2530, 4
        %v2854 = vmax.f32 %v2530, %v2853
        %v2855 = vrot.slane %v2854, 2
        %v2856 = vmax.f32 %v2854, %v2855
        %v2857 = vrot.slane %v2856, 1
        %v2858 = vmax.f32 %v2856, %v2857
        %v2859 = vrot.slane %v2531, 4
        %v2860 = vmax.f32 %v2531, %v2859
        %v2861 = vrot.slane %v2860, 2
        %v2862 = vmax.f32 %v2860, %v2861
        %v2863 = vrot.slane %v2862, 1
        %v2864 = vmax.f32 %v2862, %v2863
        %v2865 = vrot.slane %v2532, 4
        %v2866 = vmax.f32 %v2532, %v2865
        %v2867 = vrot.slane %v2866, 2
        %v2868 = vmax.f32 %v2866, %v2867
        %v2869 = vrot.slane %v2868, 1
        %v2870 = vmax.f32 %v2868, %v2869
        %v2871 = vrot.slane %v2533, 4
        %v2872 = vmax.f32 %v2533, %v2871
        %v2873 = vrot.slane %v2872, 2
        %v2874 = vmax.f32 %v2872, %v2873
        %v2875 = vrot.slane %v2874, 1
        %v2876 = vmax.f32 %v2874, %v2875
        %v2877 = vrot.slane %v2534, 4
        %v2878 = vmax.f32 %v2534, %v2877
        %v2879 = vrot.slane %v2878, 2
        %v2880 = vmax.f32 %v2878, %v2879
        %v2881 = vrot.slane %v2880, 1
        %v2882 = vmax.f32 %v2880, %v2881
        %v2883 = vrot.slane %v2535, 4
        %v2884 = vmax.f32 %v2535, %v2883
        %v2885 = vrot.slane %v2884, 2
        %v2886 = vmax.f32 %v2884, %v2885
        %v2887 = vrot.slane %v2886, 1
        %v2888 = vmax.f32 %v2886, %v2887
        %v2889 = vrot.slane %v2536, 4
        %v2890 = vmax.f32 %v2536, %v2889
        %v2891 = vrot.slane %v2890, 2
        %v2892 = vmax.f32 %v2890, %v2891
        %v2893 = vrot.slane %v2892, 1
        %v2894 = vmax.f32 %v2892, %v2893
        %v2895 = vrot.slane %v2537, 4
        %v2896 = vmax.f32 %v2537, %v2895
        %v2897 = vrot.slane %v2896, 2
        %v2898 = vmax.f32 %v2896, %v2897
        %v2899 = vrot.slane %v2898, 1
        %v2900 = vmax.f32 %v2898, %v2899
        %v2901 = vrot.slane %v2538, 4
        %v2902 = vmax.f32 %v2538, %v2901
        %v2903 = vrot.slane %v2902, 2
        %v2904 = vmax.f32 %v2902, %v2903
        %v2905 = vrot.slane %v2904, 1
        %v2906 = vmax.f32 %v2904, %v2905
        %v2907 = vrot.slane %v2539, 4
        %v2908 = vmax.f32 %v2539, %v2907
        %v2909 = vrot.slane %v2908, 2
        %v2910 = vmax.f32 %v2908, %v2909
        %v2911 = vrot.slane %v2910, 1
        %v2912 = vmax.f32 %v2910, %v2911
        %v2913 = vrot.slane %v2540, 4
        %v2914 = vmax.f32 %v2540, %v2913
        %v2915 = vrot.slane %v2914, 2
        %v2916 = vmax.f32 %v2914, %v2915
        %v2917 = vrot.slane %v2916, 1
        %v2918 = vmax.f32 %v2916, %v2917
        %v2919 = vrot.slane %v2541, 4
        %v2920 = vmax.f32 %v2541, %v2919
        %v2921 = vrot.slane %v2920, 2
        %v2922 = vmax.f32 %v2920, %v2921
        %v2923 = vrot.slane %v2922, 1
        %v2924 = vmax.f32 %v2922, %v2923
        %v2925 = vrot.slane %v2542, 4
        %v2926 = vmax.f32 %v2542, %v2925
        %v2927 = vrot.slane %v2926, 2
        %v2928 = vmax.f32 %v2926, %v2927
        %v2929 = vrot.slane %v2928, 1
        %v2930 = vmax.f32 %v2928, %v2929
        %v2931 = vrot.slane %v2543, 4
        %v2932 = vmax.f32 %v2543, %v2931
        %v2933 = vrot.slane %v2932, 2
        %v2934 = vmax.f32 %v2932, %v2933
        %v2935 = vrot.slane %v2934, 1
        %v2936 = vmax.f32 %v2934, %v2935
        %v2937 = vrot.slane %v2544, 4
        %v2938 = vmax.f32 %v2544, %v2937
        %v2939 = vrot.slane %v2938, 2
        %v2940 = vmax.f32 %v2938, %v2939
        %v2941 = vrot.slane %v2940, 1
        %v2942 = vmax.f32 %v2940, %v2941
        %v2943 = vrot.slane %v2545, 4
        %v2944 = vmax.f32 %v2545, %v2943
        %v2945 = vrot.slane %v2944, 2
        %v2946 = vmax.f32 %v2944, %v2945
        %v2947 = vrot.slane %v2946, 1
        %v2948 = vmax.f32 %v2946, %v2947
        %v2949 = vrot.slane %v2546, 4
        %v2950 = vmax.f32 %v2546, %v2949
        %v2951 = vrot.slane %v2950, 2
        %v2952 = vmax.f32 %v2950, %v2951
        %v2953 = vrot.slane %v2952, 1
        %v2954 = vmax.f32 %v2952, %v2953
        %v2955 = vrot.slane %v2547, 4
        %v2956 = vmax.f32 %v2547, %v2955
        %v2957 = vrot.slane %v2956, 2
        %v2958 = vmax.f32 %v2956, %v2957
        %v2959 = vrot.slane %v2958, 1
        %v2960 = vmax.f32 %v2958, %v2959
        %v2961 = vrot.slane %v2548, 4
        %v2962 = vmax.f32 %v2548, %v2961
        %v2963 = vrot.slane %v2962, 2
        %v2964 = vmax.f32 %v2962, %v2963
        %v2965 = vrot.slane %v2964, 1
        %v2966 = vmax.f32 %v2964, %v2965
        %v2967 = vrot.slane %v2549, 4
        %v2968 = vmax.f32 %v2549, %v2967
        %v2969 = vrot.slane %v2968, 2
        %v2970 = vmax.f32 %v2968, %v2969
        %v2971 = vrot.slane %v2970, 1
        %v2972 = vmax.f32 %v2970, %v2971
        %v2973 = vrot.slane %v2550, 4
        %v2974 = vmax.f32 %v2550, %v2973
        %v2975 = vrot.slane %v2974, 2
        %v2976 = vmax.f32 %v2974, %v2975
        %v2977 = vrot.slane %v2976, 1
        %v2978 = vmax.f32 %v2976, %v2977
        %v2979 = vrot.slane %v2551, 4
        %v2980 = vmax.f32 %v2551, %v2979
        %v2981 = vrot.slane %v2980, 2
        %v2982 = vmax.f32 %v2980, %v2981
        %v2983 = vrot.slane %v2982, 1
        %v2984 = vmax.f32 %v2982, %v2983
        %v2985 = vrot.slane %v2552, 4
        %v2986 = vmax.f32 %v2552, %v2985
        %v2987 = vrot.slane %v2986, 2
        %v2988 = vmax.f32 %v2986, %v2987
        %v2989 = vrot.slane %v2988, 1
        %v2990 = vmax.f32 %v2988, %v2989
        %v2991 = vrot.slane %v2553, 4
        %v2992 = vmax.f32 %v2553, %v2991
        %v2993 = vrot.slane %v2992, 2
        %v2994 = vmax.f32 %v2992, %v2993
        %v2995 = vrot.slane %v2994, 1
        %v2996 = vmax.f32 %v2994, %v2995
        %v2997 = vrot.slane %v2554, 4
        %v2998 = vmax.f32 %v2554, %v2997
        %v2999 = vrot.slane %v2998, 2
        %v3000 = vmax.f32 %v2998, %v2999
        %v3001 = vrot.slane %v3000, 1
        %v3002 = vmax.f32 %v3000, %v3001
        %v3003 = vrot.slane %v2555, 4
        %v3004 = vmax.f32 %v2555, %v3003
        %v3005 = vrot.slane %v3004, 2
        %v3006 = vmax.f32 %v3004, %v3005
        %v3007 = vrot.slane %v3006, 1
        %v3008 = vmax.f32 %v3006, %v3007
        %v3009 = vrot.slane %v2556, 4
        %v3010 = vmax.f32 %v2556, %v3009
        %v3011 = vrot.slane %v3010, 2
        %v3012 = vmax.f32 %v3010, %v3011
        %v3013 = vrot.slane %v3012, 1
        %v3014 = vmax.f32 %v3012, %v3013
        %v3015 = vrot.slane %v2557, 4
        %v3016 = vmax.f32 %v2557, %v3015
        %v3017 = vrot.slane %v3016, 2
        %v3018 = vmax.f32 %v3016, %v3017
        %v3019 = vrot.slane %v3018, 1
        %v3020 = vmax.f32 %v3018, %v3019
        %v3021 = vrot.slane %v2558, 4
        %v3022 = vmax.f32 %v2558, %v3021
        %v3023 = vrot.slane %v3022, 2
        %v3024 = vmax.f32 %v3022, %v3023
        %v3025 = vrot.slane %v3024, 1
        %v3026 = vmax.f32 %v3024, %v3025
        %v3027 = vrot.slane %v2559, 4
        %v3028 = vmax.f32 %v2559, %v3027
        %v3029 = vrot.slane %v3028, 2
        %v3030 = vmax.f32 %v3028, %v3029
        %v3031 = vrot.slane %v3030, 1
        %v3032 = vmax.f32 %v3030, %v3031
        %v3033 = vrot.slane %v2560, 4
        %v3034 = vmax.f32 %v2560, %v3033
        %v3035 = vrot.slane %v3034, 2
        %v3036 = vmax.f32 %v3034, %v3035
        %v3037 = vrot.slane %v3036, 1
        %v3038 = vmax.f32 %v3036, %v3037
        %v3039 = vrot.slane %v2561, 4
        %v3040 = vmax.f32 %v2561, %v3039
        %v3041 = vrot.slane %v3040, 2
        %v3042 = vmax.f32 %v3040, %v3041
        %v3043 = vrot.slane %v3042, 1
        %v3044 = vmax.f32 %v3042, %v3043
        %v3045 = vrot.slane %v2562, 4
        %v3046 = vmax.f32 %v2562, %v3045
        %v3047 = vrot.slane %v3046, 2
        %v3048 = vmax.f32 %v3046, %v3047
        %v3049 = vrot.slane %v3048, 1
        %v3050 = vmax.f32 %v3048, %v3049
        %v3051 = vrot.slane %v2563, 4
        %v3052 = vmax.f32 %v2563, %v3051
        %v3053 = vrot.slane %v3052, 2
        %v3054 = vmax.f32 %v3052, %v3053
        %v3055 = vrot.slane %v3054, 1
        %v3056 = vmax.f32 %v3054, %v3055
        %v3057 = vrot.slane %v2564, 4
        %v3058 = vmax.f32 %v2564, %v3057
        %v3059 = vrot.slane %v3058, 2
        %v3060 = vmax.f32 %v3058, %v3059
        %v3061 = vrot.slane %v3060, 1
        %v3062 = vmax.f32 %v3060, %v3061
        %v3063 = vrot.slane %v2565, 4
        %v3064 = vmax.f32 %v2565, %v3063
        %v3065 = vrot.slane %v3064, 2
        %v3066 = vmax.f32 %v3064, %v3065
        %v3067 = vrot.slane %v3066, 1
        %v3068 = vmax.f32 %v3066, %v3067
        %v3069 = vrot.slane %v2566, 4
        %v3070 = vmax.f32 %v2566, %v3069
        %v3071 = vrot.slane %v3070, 2
        %v3072 = vmax.f32 %v3070, %v3071
        %v3073 = vrot.slane %v3072, 1
        %v3074 = vmax.f32 %v3072, %v3073
        %v3075 = vrot.slane %v2567, 4
        %v3076 = vmax.f32 %v2567, %v3075
        %v3077 = vrot.slane %v3076, 2
        %v3078 = vmax.f32 %v3076, %v3077
        %v3079 = vrot.slane %v3078, 1
        %v3080 = vmax.f32 %v3078, %v3079
        %v3081 = vrot.slane %v2568, 4
        %v3082 = vmax.f32 %v2568, %v3081
        %v3083 = vrot.slane %v3082, 2
        %v3084 = vmax.f32 %v3082, %v3083
        %v3085 = vrot.slane %v3084, 1
        %v3086 = vmax.f32 %v3084, %v3085
        %v3087 = vrot.slane %v2569, 4
        %v3088 = vmax.f32 %v2569, %v3087
        %v3089 = vrot.slane %v3088, 2
        %v3090 = vmax.f32 %v3088, %v3089
        %v3091 = vrot.slane %v3090, 1
        %v3092 = vmax.f32 %v3090, %v3091
        %v3093 = vrot.slane %v2570, 4
        %v3094 = vmax.f32 %v2570, %v3093
        %v3095 = vrot.slane %v3094, 2
        %v3096 = vmax.f32 %v3094, %v3095
        %v3097 = vrot.slane %v3096, 1
        %v3098 = vmax.f32 %v3096, %v3097
        %v3099 = vrot.slane %v2571, 4
        %v3100 = vmax.f32 %v2571, %v3099
        %v3101 = vrot.slane %v3100, 2
        %v3102 = vmax.f32 %v3100, %v3101
        %v3103 = vrot.slane %v3102, 1
        %v3104 = vmax.f32 %v3102, %v3103
        %v3105 = vrot.slane %v2572, 4
        %v3106 = vmax.f32 %v2572, %v3105
        %v3107 = vrot.slane %v3106, 2
        %v3108 = vmax.f32 %v3106, %v3107
        %v3109 = vrot.slane %v3108, 1
        %v3110 = vmax.f32 %v3108, %v3109
        %v3111 = vrot.slane %v2573, 4
        %v3112 = vmax.f32 %v2573, %v3111
        %v3113 = vrot.slane %v3112, 2
        %v3114 = vmax.f32 %v3112, %v3113
        %v3115 = vrot.slane %v3114, 1
        %v3116 = vmax.f32 %v3114, %v3115
        %v3117 = vrot.slane %v2574, 4
        %v3118 = vmax.f32 %v2574, %v3117
        %v3119 = vrot.slane %v3118, 2
        %v3120 = vmax.f32 %v3118, %v3119
        %v3121 = vrot.slane %v3120, 1
        %v3122 = vmax.f32 %v3120, %v3121
        %v3123 = vrot.slane %v2575, 4
        %v3124 = vmax.f32 %v2575, %v3123
        %v3125 = vrot.slane %v3124, 2
        %v3126 = vmax.f32 %v3124, %v3125
        %v3127 = vrot.slane %v3126, 1
        %v3128 = vmax.f32 %v3126, %v3127
        %v3129 = vrot.slane %v2576, 4
        %v3130 = vmax.f32 %v2576, %v3129
        %v3131 = vrot.slane %v3130, 2
        %v3132 = vmax.f32 %v3130, %v3131
        %v3133 = vrot.slane %v3132, 1
        %v3134 = vmax.f32 %v3132, %v3133
        %v3135 = vrot.slane %v2577, 4
        %v3136 = vmax.f32 %v2577, %v3135
        %v3137 = vrot.slane %v3136, 2
        %v3138 = vmax.f32 %v3136, %v3137
        %v3139 = vrot.slane %v3138, 1
        %v3140 = vmax.f32 %v3138, %v3139
        %v3141 = vrot.slane %v2578, 4
        %v3142 = vmax.f32 %v2578, %v3141
        %v3143 = vrot.slane %v3142, 2
        %v3144 = vmax.f32 %v3142, %v3143
        %v3145 = vrot.slane %v3144, 1
        %v3146 = vmax.f32 %v3144, %v3145
        %v3147 = vrot.slane %v2579, 4
        %v3148 = vmax.f32 %v2579, %v3147
        %v3149 = vrot.slane %v3148, 2
        %v3150 = vmax.f32 %v3148, %v3149
        %v3151 = vrot.slane %v3150, 1
        %v3152 = vmax.f32 %v3150, %v3151
        %v3153 = vrot.slane %v2580, 4
        %v3154 = vmax.f32 %v2580, %v3153
        %v3155 = vrot.slane %v3154, 2
        %v3156 = vmax.f32 %v3154, %v3155
        %v3157 = vrot.slane %v3156, 1
        %v3158 = vmax.f32 %v3156, %v3157
        %v3159 = vrot.slane %v2581, 4
        %v3160 = vmax.f32 %v2581, %v3159
        %v3161 = vrot.slane %v3160, 2
        %v3162 = vmax.f32 %v3160, %v3161
        %v3163 = vrot.slane %v3162, 1
        %v3164 = vmax.f32 %v3162, %v3163
        %v3165 = vrot.slane %v2582, 4
        %v3166 = vmax.f32 %v2582, %v3165
        %v3167 = vrot.slane %v3166, 2
        %v3168 = vmax.f32 %v3166, %v3167
        %v3169 = vrot.slane %v3168, 1
        %v3170 = vmax.f32 %v3168, %v3169
        %v3171 = vrot.slane %v2583, 4
        %v3172 = vmax.f32 %v2583, %v3171
        %v3173 = vrot.slane %v3172, 2
        %v3174 = vmax.f32 %v3172, %v3173
        %v3175 = vrot.slane %v3174, 1
        %v3176 = vmax.f32 %v3174, %v3175
        %v3177 = vrot.slane %v2584, 4
        %v3178 = vmax.f32 %v2584, %v3177
        %v3179 = vrot.slane %v3178, 2
        %v3180 = vmax.f32 %v3178, %v3179
        %v3181 = vrot.slane %v3180, 1
        %v3182 = vmax.f32 %v3180, %v3181
        %v3183 = vrot.slane %v2585, 4
        %v3184 = vmax.f32 %v2585, %v3183
        %v3185 = vrot.slane %v3184, 2
        %v3186 = vmax.f32 %v3184, %v3185
        %v3187 = vrot.slane %v3186, 1
        %v3188 = vmax.f32 %v3186, %v3187
        %v3189 = vrot.slane %v2586, 4
        %v3190 = vmax.f32 %v2586, %v3189
        %v3191 = vrot.slane %v3190, 2
        %v3192 = vmax.f32 %v3190, %v3191
        %v3193 = vrot.slane %v3192, 1
        %v3194 = vmax.f32 %v3192, %v3193
        %v3195 = vrot.slane %v2587, 4
        %v3196 = vmax.f32 %v2587, %v3195
        %v3197 = vrot.slane %v3196, 2
        %v3198 = vmax.f32 %v3196, %v3197
        %v3199 = vrot.slane %v3198, 1
        %v3200 = vmax.f32 %v3198, %v3199
        %v3201 = vrot.slane %v2588, 4
        %v3202 = vmax.f32 %v2588, %v3201
        %v3203 = vrot.slane %v3202, 2
        %v3204 = vmax.f32 %v3202, %v3203
        %v3205 = vrot.slane %v3204, 1
        %v3206 = vmax.f32 %v3204, %v3205
        %v3207 = vrot.slane %v2589, 4
        %v3208 = vmax.f32 %v2589, %v3207
        %v3209 = vrot.slane %v3208, 2
        %v3210 = vmax.f32 %v3208, %v3209
        %v3211 = vrot.slane %v3210, 1
        %v3212 = vmax.f32 %v3210, %v3211
        %v3213 = vrot.slane %v2590, 4
        %v3214 = vmax.f32 %v2590, %v3213
        %v3215 = vrot.slane %v3214, 2
        %v3216 = vmax.f32 %v3214, %v3215
        %v3217 = vrot.slane %v3216, 1
        %v3218 = vmax.f32 %v3216, %v3217
        %v3219 = vrot.slane %v2591, 4
        %v3220 = vmax.f32 %v2591, %v3219
        %v3221 = vrot.slane %v3220, 2
        %v3222 = vmax.f32 %v3220, %v3221
        %v3223 = vrot.slane %v3222, 1
        %v3224 = vmax.f32 %v3222, %v3223
        %v3225 = vrot.slane %v2592, 4
        %v3226 = vmax.f32 %v2592, %v3225
        %v3227 = vrot.slane %v3226, 2
        %v3228 = vmax.f32 %v3226, %v3227
        %v3229 = vrot.slane %v3228, 1
        %v3230 = vmax.f32 %v3228, %v3229
        %v3231 = vrot.slane %v2593, 4
        %v3232 = vmax.f32 %v2593, %v3231
        %v3233 = vrot.slane %v3232, 2
        %v3234 = vmax.f32 %v3232, %v3233
        %v3235 = vrot.slane %v3234, 1
        %v3236 = vmax.f32 %v3234, %v3235
        %v3237 = vrot.slane %v2594, 4
        %v3238 = vmax.f32 %v2594, %v3237
        %v3239 = vrot.slane %v3238, 2
        %v3240 = vmax.f32 %v3238, %v3239
        %v3241 = vrot.slane %v3240, 1
        %v3242 = vmax.f32 %v3240, %v3241
        %v3243 = vrot.slane %v2595, 4
        %v3244 = vmax.f32 %v2595, %v3243
        %v3245 = vrot.slane %v3244, 2
        %v3246 = vmax.f32 %v3244, %v3245
        %v3247 = vrot.slane %v3246, 1
        %v3248 = vmax.f32 %v3246, %v3247
        %v3249 = vrot.slane %v2596, 4
        %v3250 = vmax.f32 %v2596, %v3249
        %v3251 = vrot.slane %v3250, 2
        %v3252 = vmax.f32 %v3250, %v3251
        %v3253 = vrot.slane %v3252, 1
        %v3254 = vmax.f32 %v3252, %v3253
        %v3255 = vrot.slane %v2597, 4
        %v3256 = vmax.f32 %v2597, %v3255
        %v3257 = vrot.slane %v3256, 2
        %v3258 = vmax.f32 %v3256, %v3257
        %v3259 = vrot.slane %v3258, 1
        %v3260 = vmax.f32 %v3258, %v3259
        %v3261 = vrot.slane %v2598, 4
        %v3262 = vmax.f32 %v2598, %v3261
        %v3263 = vrot.slane %v3262, 2
        %v3264 = vmax.f32 %v3262, %v3263
        %v3265 = vrot.slane %v3264, 1
        %v3266 = vmax.f32 %v3264, %v3265
        %v3267 = vrot.slane %v2599, 4
        %v3268 = vmax.f32 %v2599, %v3267
        %v3269 = vrot.slane %v3268, 2
        %v3270 = vmax.f32 %v3268, %v3269
        %v3271 = vrot.slane %v3270, 1
        %v3272 = vmax.f32 %v3270, %v3271
        %v3273 = vrot.slane %v2600, 4
        %v3274 = vmax.f32 %v2600, %v3273
        %v3275 = vrot.slane %v3274, 2
        %v3276 = vmax.f32 %v3274, %v3275
        %v3277 = vrot.slane %v3276, 1
        %v3278 = vmax.f32 %v3276, %v3277
        %v3279 = vrot.slane %v2601, 4
        %v3280 = vmax.f32 %v2601, %v3279
        %v3281 = vrot.slane %v3280, 2
        %v3282 = vmax.f32 %v3280, %v3281
        %v3283 = vrot.slane %v3282, 1
        %v3284 = vmax.f32 %v3282, %v3283
        %v3285 = vrot.slane %v2602, 4
        %v3286 = vmax.f32 %v2602, %v3285
        %v3287 = vrot.slane %v3286, 2
        %v3288 = vmax.f32 %v3286, %v3287
        %v3289 = vrot.slane %v3288, 1
        %v3290 = vmax.f32 %v3288, %v3289
        %v3291 = vrot.slane %v2603, 4
        %v3292 = vmax.f32 %v2603, %v3291
        %v3293 = vrot.slane %v3292, 2
        %v3294 = vmax.f32 %v3292, %v3293
        %v3295 = vrot.slane %v3294, 1
        %v3296 = vmax.f32 %v3294, %v3295
        %v3297 = vrot.slane %v2604, 4
        %v3298 = vmax.f32 %v2604, %v3297
        %v3299 = vrot.slane %v3298, 2
        %v3300 = vmax.f32 %v3298, %v3299
        %v3301 = vrot.slane %v3300, 1
        %v3302 = vmax.f32 %v3300, %v3301
        %v3303 = vrot.slane %v2605, 4
        %v3304 = vmax.f32 %v2605, %v3303
        %v3305 = vrot.slane %v3304, 2
        %v3306 = vmax.f32 %v3304, %v3305
        %v3307 = vrot.slane %v3306, 1
        %v3308 = vmax.f32 %v3306, %v3307
        %v3309 = vrot.slane %v2606, 4
        %v3310 = vmax.f32 %v2606, %v3309
        %v3311 = vrot.slane %v3310, 2
        %v3312 = vmax.f32 %v3310, %v3311
        %v3313 = vrot.slane %v3312, 1
        %v3314 = vmax.f32 %v3312, %v3313
        %v3315 = vrot.slane %v2607, 4
        %v3316 = vmax.f32 %v2607, %v3315
        %v3317 = vrot.slane %v3316, 2
        %v3318 = vmax.f32 %v3316, %v3317
        %v3319 = vrot.slane %v3318, 1
        %v3320 = vmax.f32 %v3318, %v3319
        %v3321 = vrot.slane %v2608, 4
        %v3322 = vmax.f32 %v2608, %v3321
        %v3323 = vrot.slane %v3322, 2
        %v3324 = vmax.f32 %v3322, %v3323
        %v3325 = vrot.slane %v3324, 1
        %v3326 = vmax.f32 %v3324, %v3325
        %v3327 = vrot.slane %v2609, 4
        %v3328 = vmax.f32 %v2609, %v3327
        %v3329 = vrot.slane %v3328, 2
        %v3330 = vmax.f32 %v3328, %v3329
        %v3331 = vrot.slane %v3330, 1
        %v3332 = vmax.f32 %v3330, %v3331
        %v3333 = vrot.slane %v2610, 4
        %v3334 = vmax.f32 %v2610, %v3333
        %v3335 = vrot.slane %v3334, 2
        %v3336 = vmax.f32 %v3334, %v3335
        %v3337 = vrot.slane %v3336, 1
        %v3338 = vmax.f32 %v3336, %v3337
        %v3339 = vrot.slane %v2611, 4
        %v3340 = vmax.f32 %v2611, %v3339
        %v3341 = vrot.slane %v3340, 2
        %v3342 = vmax.f32 %v3340, %v3341
        %v3343 = vrot.slane %v3342, 1
        %v3344 = vmax.f32 %v3342, %v3343
        %v3345 = vrot.slane %v2612, 4
        %v3346 = vmax.f32 %v2612, %v3345
        %v3347 = vrot.slane %v3346, 2
        %v3348 = vmax.f32 %v3346, %v3347
        %v3349 = vrot.slane %v3348, 1
        %v3350 = vmax.f32 %v3348, %v3349
        %v3351 = vrot.slane %v2613, 4
        %v3352 = vmax.f32 %v2613, %v3351
        %v3353 = vrot.slane %v3352, 2
        %v3354 = vmax.f32 %v3352, %v3353
        %v3355 = vrot.slane %v3354, 1
        %v3356 = vmax.f32 %v3354, %v3355
        %v3357 = vrot.slane %v2614, 4
        %v3358 = vmax.f32 %v2614, %v3357
        %v3359 = vrot.slane %v3358, 2
        %v3360 = vmax.f32 %v3358, %v3359
        %v3361 = vrot.slane %v3360, 1
        %v3362 = vmax.f32 %v3360, %v3361
        %v3363 = vrot.slane %v2615, 4
        %v3364 = vmax.f32 %v2615, %v3363
        %v3365 = vrot.slane %v3364, 2
        %v3366 = vmax.f32 %v3364, %v3365
        %v3367 = vrot.slane %v3366, 1
        %v3368 = vmax.f32 %v3366, %v3367
        %v3369 = vrot.slane %v2616, 4
        %v3370 = vmax.f32 %v2616, %v3369
        %v3371 = vrot.slane %v3370, 2
        %v3372 = vmax.f32 %v3370, %v3371
        %v3373 = vrot.slane %v3372, 1
        %v3374 = vmax.f32 %v3372, %v3373
        %v3375 = vrot.slane %v2617, 4
        %v3376 = vmax.f32 %v2617, %v3375
        %v3377 = vrot.slane %v3376, 2
        %v3378 = vmax.f32 %v3376, %v3377
        %v3379 = vrot.slane %v3378, 1
        %v3380 = vmax.f32 %v3378, %v3379
        %v3381 = vrot.slane %v2618, 4
        %v3382 = vmax.f32 %v2618, %v3381
        %v3383 = vrot.slane %v3382, 2
        %v3384 = vmax.f32 %v3382, %v3383
        %v3385 = vrot.slane %v3384, 1
        %v3386 = vmax.f32 %v3384, %v3385
        %vm3515 = vcmask 1041409
        %v3516 = vsel %vm3515, %v2630, %v2624
        %vm3517 = vcmask 1042434
        %v3518 = vsel %vm3517, %v2636, %v3516
        %vm3519 = vcmask 1043459
        %v3520 = vsel %vm3519, %v2642, %v3518
        %vm3521 = vcmask 1044484
        %v3522 = vsel %vm3521, %v2648, %v3520
        %vm3523 = vcmask 1045509
        %v3524 = vsel %vm3523, %v2654, %v3522
        %vm3525 = vcmask 1046534
        %v3526 = vsel %vm3525, %v2660, %v3524
        %vm3527 = vcmask 1047559
        %v3528 = vsel %vm3527, %v2666, %v3526
        %v3529 = vsel %vm3515, %v2678, %v2672
        %v3530 = vsel %vm3517, %v2684, %v3529
        %v3531 = vsel %vm3519, %v2690, %v3530
        %v3532 = vsel %vm3521, %v2696, %v3531
        %v3533 = vsel %vm3523, %v2702, %v3532
        %v3534 = vsel %vm3525, %v2708, %v3533
        %v3535 = vsel %vm3527, %v2714, %v3534
        %v3536 = vsel %vm3515, %v2726, %v2720
        %v3537 = vsel %vm3517, %v2732, %v3536
        %v3538 = vsel %vm3519, %v2738, %v3537
        %v3539 = vsel %vm3521, %v2744, %v3538
        %v3540 = vsel %vm3523, %v2750, %v3539
        %v3541 = vsel %vm3525, %v2756, %v3540
        %v3542 = vsel %vm3527, %v2762, %v3541
        %v3543 = vsel %vm3515, %v2774, %v2768
        %v3544 = vsel %vm3517, %v2780, %v3543
        %v3545 = vsel %vm3519, %v2786, %v3544
        %v3546 = vsel %vm3521, %v2792, %v3545
        %v3547 = vsel %vm3523, %v2798, %v3546
        %v3548 = vsel %vm3525, %v2804, %v3547
        %v3549 = vsel %vm3527, %v2810, %v3548
        %v3550 = vsel %vm3515, %v2822, %v2816
        %v3551 = vsel %vm3517, %v2828, %v3550
        %v3552 = vsel %vm3519, %v2834, %v3551
        %v3553 = vsel %vm3521, %v2840, %v3552
        %v3554 = vsel %vm3523, %v2846, %v3553
        %v3555 = vsel %vm3525, %v2852, %v3554
        %v3556 = vsel %vm3527, %v2858, %v3555
        %v3557 = vsel %vm3515, %v2870, %v2864
        %v3558 = vsel %vm3517, %v2876, %v3557
        %v3559 = vsel %vm3519, %v2882, %v3558
        %v3560 = vsel %vm3521, %v2888, %v3559
        %v3561 = vsel %vm3523, %v2894, %v3560
        %v3562 = vsel %vm3525, %v2900, %v3561
        %v3563 = vsel %vm3527, %v2906, %v3562
        %v3564 = vsel %vm3515, %v2918, %v2912
        %v3565 = vsel %vm3517, %v2924, %v3564
        %v3566 = vsel %vm3519, %v2930, %v3565
        %v3567 = vsel %vm3521, %v2936, %v3566
        %v3568 = vsel %vm3523, %v2942, %v3567
        %v3569 = vsel %vm3525, %v2948, %v3568
        %v3570 = vsel %vm3527, %v2954, %v3569
        %v3571 = vsel %vm3515, %v2966, %v2960
        %v3572 = vsel %vm3517, %v2972, %v3571
        %v3573 = vsel %vm3519, %v2978, %v3572
        %v3574 = vsel %vm3521, %v2984, %v3573
        %v3575 = vsel %vm3523, %v2990, %v3574
        %v3576 = vsel %vm3525, %v2996, %v3575
        %v3577 = vsel %vm3527, %v3002, %v3576
        %v3578 = vsel %vm3515, %v3014, %v3008
        %v3579 = vsel %vm3517, %v3020, %v3578
        %v3580 = vsel %vm3519, %v3026, %v3579
        %v3581 = vsel %vm3521, %v3032, %v3580
        %v3582 = vsel %vm3523, %v3038, %v3581
        %v3583 = vsel %vm3525, %v3044, %v3582
        %v3584 = vsel %vm3527, %v3050, %v3583
        %v3585 = vsel %vm3515, %v3062, %v3056
        %v3586 = vsel %vm3517, %v3068, %v3585
        %v3587 = vsel %vm3519, %v3074, %v3586
        %v3588 = vsel %vm3521, %v3080, %v3587
        %v3589 = vsel %vm3523, %v3086, %v3588
        %v3590 = vsel %vm3525, %v3092, %v3589
        %v3591 = vsel %vm3527, %v3098, %v3590
        %v3592 = vsel %vm3515, %v3110, %v3104
        %v3593 = vsel %vm3517, %v3116, %v3592
        %v3594 = vsel %vm3519, %v3122, %v3593
        %v3595 = vsel %vm3521, %v3128, %v3594
        %v3596 = vsel %vm3523, %v3134, %v3595
        %v3597 = vsel %vm3525, %v3140, %v3596
        %v3598 = vsel %vm3527, %v3146, %v3597
        %v3599 = vsel %vm3515, %v3158, %v3152
        %v3600 = vsel %vm3517, %v3164, %v3599
        %v3601 = vsel %vm3519, %v3170, %v3600
        %v3602 = vsel %vm3521, %v3176, %v3601
        %v3603 = vsel %vm3523, %v3182, %v3602
        %v3604 = vsel %vm3525, %v3188, %v3603
        %v3605 = vsel %vm3527, %v3194, %v3604
        %v3606 = vsel %vm3515, %v3206, %v3200
        %v3607 = vsel %vm3517, %v3212, %v3606
        %v3608 = vsel %vm3519, %v3218, %v3607
        %v3609 = vsel %vm3521, %v3224, %v3608
        %v3610 = vsel %vm3523, %v3230, %v3609
        %v3611 = vsel %vm3525, %v3236, %v3610
        %v3612 = vsel %vm3527, %v3242, %v3611
        %v3613 = vsel %vm3515, %v3254, %v3248
        %v3614 = vsel %vm3517, %v3260, %v3613
        %v3615 = vsel %vm3519, %v3266, %v3614
        %v3616 = vsel %vm3521, %v3272, %v3615
        %v3617 = vsel %vm3523, %v3278, %v3616
        %v3618 = vsel %vm3525, %v3284, %v3617
        %v3619 = vsel %vm3527, %v3290, %v3618
        %v3620 = vsel %vm3515, %v3302, %v3296
        %v3621 = vsel %vm3517, %v3308, %v3620
        %v3622 = vsel %vm3519, %v3314, %v3621
        %v3623 = vsel %vm3521, %v3320, %v3622
        %v3624 = vsel %vm3523, %v3326, %v3623
        %v3625 = vsel %vm3525, %v3332, %v3624
        %v3626 = vsel %vm3527, %v3338, %v3625
        %v3627 = vsel %vm3515, %v3350, %v3344
        %v3628 = vsel %vm3517, %v3356, %v3627
        %v3629 = vsel %vm3519, %v3362, %v3628
        %v3630 = vsel %vm3521, %v3368, %v3629
        %v3631 = vsel %vm3523, %v3374, %v3630
        %v3632 = vsel %vm3525, %v3380, %v3631
        %v3633 = vsel %vm3527, %v3386, %v3632
        %3650 = vst [vmem:[%s207] sm:$0xff] %v3528
        %3651 = vst [vmem:[%s207 + $0x8] sm:$0xff] %v3535
        %3652 = vst [vmem:[%s207 + $0x10] sm:$0xff] %v3542
        %3653 = vst [vmem:[%s207 + $0x18] sm:$0xff] %v3549
        %3654 = vst [vmem:[%s207 + $0x20] sm:$0xff] %v3556
        %3655 = vst [vmem:[%s207 + $0x28] sm:$0xff] %v3563
        %3656 = vst [vmem:[%s207 + $0x30] sm:$0xff] %v3570
        %3657 = vst [vmem:[%s207 + $0x38] sm:$0xff] %v3577
        %3658 = vst [vmem:[%s207 + $0x40] sm:$0xff] %v3584
        %3659 = vst [vmem:[%s207 + $0x48] sm:$0xff] %v3591
        %3660 = vst [vmem:[%s207 + $0x50] sm:$0xff] %v3598
        %3661 = vst [vmem:[%s207 + $0x58] sm:$0xff] %v3605
        %3662 = vst [vmem:[%s207 + $0x60] sm:$0xff] %v3612
        %3663 = vst [vmem:[%s207 + $0x68] sm:$0xff] %v3619
        %3664 = vst [vmem:[%s207 + $0x70] sm:$0xff] %v3626
        %3665 = vst [vmem:[%s207 + $0x78] sm:$0xff] %v3633
        %s3666 = sand.u32 %s120, 1
        %s3667 = scalar_lea.sflag [#allocation3], %s3666
        %s3668 = sand.u32 %s120, 1
        %s3669 = smul.addr %s3668, 128
        %s3670 = scalar_lea.vmem [#allocation2], %s3669
        // Predicated region
        $region37: #{tpu_custom_call.1} parent=35 // pred_check
          %p3671 = pneg %p130
        $region38: #{tpu_custom_call.1} parent=35 // pred_check_branch
          %3673 = sbr.rel (%p3671) target = $region40
        $region39: #{tpu_custom_call.1} parent=35 // pred_region
          %s3674 = smul.u32 16, %s18
          %s3676 = ssub.s32 2048, 2048
          %3677 = vsyncadd %s3667, %s3676
          %s3678 = smul.addr %s3674, 128
          %s3679 = scalar_lea.hbm %s4, %s3678
          %s3680 = sshll.u32 %s3670, 4
          %s3681 = int_to_ptr.vmem [resolvable:$true] %s3680
          %3686 = dma.vmem_to_hbm [thread:$0]  %s3681, 2048, %s3679, %s3667, 128, 128, 8
        $region40: #{tpu_custom_call.1} parent=35 // pred_fallthru
          _
      $region36: #{tpu_custom_call.1} parent=5 // pred_fallthru
        _
      %p3687 = scmp.le.s32.totalorder 2, %s13
      // Predicated region
      $region41: #{tpu_custom_call.1} parent=5 // pred_check
        %p3688 = pneg %p3687
      $region42: #{tpu_custom_call.1} parent=5 // pred_check_branch
        %3690 = sbr.rel (%p3688) target = $region44
      $region43: #{tpu_custom_call.1} parent=5 // pred_region
        %s3691 = ssub.s32 %s13, 2
        // Predicated region
        $region45: #{tpu_custom_call.1} parent=43 // pred_check
          %p3692 = pneg %p136
        $region46: #{tpu_custom_call.1} parent=43 // pred_check_branch
          %3694 = sbr.rel (%p3692) target = $region48
        $region47: #{tpu_custom_call.1} parent=43 // pred_region
          %s3695 = sand.u32 %s121, 1
          %s3696 = scalar_lea.sflag [#allocation3], %s3695
          %s3697 = sand.u32 %s121, 1
          %s3698 = smul.addr %s3697, 128
          %s3699 = scalar_lea.vmem [#allocation2], %s3698
          %3700 = dma.done %s3696, 2048
        $region48: #{tpu_custom_call.1} parent=43 // pred_fallthru
          _
      $region44: #{tpu_custom_call.1} parent=5 // pred_fallthru
        _
    $region6: #{tpu_custom_call.1} parent=1 // loop_footer
      %s17 = sadd.s32 1, %s13
    $region7: #{tpu_custom_call.1} parent=1 // loop_footer_branch
      %12 = sbr.rel target = $region3
    $region8: #{tpu_custom_call.1} parent=1 // loop_exit
      _
    %3701 = vsyncpa [#allocation3], 1
    %s3702 = scalar_lea.sflag [#allocation3], 1
    %3703 = vsyncpa %s3702, 1

</llo_original>
